<compile_context>
chip_gen: v7x
topology: tpu7x:2x2x1
jax: 0.10.0
libtpu: 0.0.40
codegen_flags: <defaults>
</compile_context>

<pallas_src>
import numpy as np
import jax
import jax.numpy as jnp
from jax.experimental import pallas as pl
from jax.experimental.pallas import tpu as pltpu

# ---- static shape constants implied by the module ----
C_EEG = 63                          # EEG channels (conv2 kernel height is 63)
C_PAD = 64                          # sublane-aligned padded channel count
T_IN = 100                          # time samples (>= 75 required)
K_T = 25                            # temporal conv width
T_CONV = T_IN - K_T + 1             # 76
POOL_K, POOL_S = 51, 5
W_POOL = (T_CONV - POOL_K) // POOL_S + 1   # 6
C_F = 40                            # tsconv feature channels
EMB = 40                            # embedding size
EPS = 1e-5
N_COLS = C_F * W_POOL               # 240 : stage-1 output columns (i, j)
K2P = C_F * C_PAD                   # 2560: padded stage-2 contraction size (i, h)

# Fold conv1 + avgpool into one (100, 25, 6) indicator (compile-time constant):
#   pooled[b,i,h,j] = sum_t x[b,h,t] * sum_k w1[i,k] * mask[t,k,j]
_t = np.arange(T_IN)[:, None, None]
_k = np.arange(K_T)[None, :, None]
_j = np.arange(W_POOL)[None, None, :]
_d = _t - _k - POOL_S * _j
_POOL_MASK = ((_d >= 0) & (_d < POOL_K)).astype(np.float32) / float(POOL_K)  # (100,25,6)


def _elu(v):
    # clamp the exp argument so the discarded branch never overflows
    return jnp.where(v > 0, v, jnp.exp(jnp.minimum(v, 0.0)) - 1.0)


# ---------------- fused Pallas kernel ----------------
def _pe_kernel(x_ref, m1_ref, s1_ref, t1_ref, w2_ref, s2_ref, t2_ref,
               w3_ref, b3_ref, o_ref, x_scr, y_scr, act_scr):
    # x_ref : (BB, 63, 100) f32      m1_ref: (100, 240) bf16
    # s1/t1 : (1, 240) f32           w2_ref: (40, 2560) bf16   s2/t2: (40, 1) f32
    # w3_ref: (40, 40) f32           b3_ref: (40, 1) f32
    # o_ref : (BB*6, 40) f32
    # x_scr : (BB*64, 100) bf16      y_scr : (BB*64, 240) bf16
    # act_scr: (2560, BB*6) bf16
    BB = x_ref.shape[0]

    # ---- stage 0: stage the input into 64-row-per-element, bf16, aligned form.
    # Zero first so the pad row (h == 63) of every element is finite (it only ever
    # multiplies zero-padded w2 columns, but 0 * NaN would poison stage 2).
    x_scr[...] = jnp.zeros_like(x_scr)
    for b in range(BB):
        x_scr[b * C_PAD:b * C_PAD + C_EEG, :] = x_ref[b].astype(jnp.bfloat16)

    # ---- stage 1: conv1 + avgpool folded into ONE bf16 MXU matmul, then one
    #      fused BN1 + ELU pass over the whole (BB*64, 240) block (f32 math).
    y = jnp.dot(x_scr[...], m1_ref[...], preferred_element_type=jnp.float32)
    y_scr[...] = _elu(y * s1_ref[...] + t1_ref[...]).astype(jnp.bfloat16)

    # ---- reorg (b,h)x(i,j) -> (i,h)x(b,j).  Every copy is a (64, 6) bf16 block
    #      with 64-aligned row offsets on both sides (static offsets -> compile
    #      time rotates); the per-b source tile is loaded once and re-sliced.
    for b in range(BB):
        yb = y_scr[b * C_PAD:(b + 1) * C_PAD, :]                 # (64, 240) bf16
        for i in range(C_F):
            act_scr[i * C_PAD:(i + 1) * C_PAD,
                    b * W_POOL:(b + 1) * W_POOL] = yb[:, i * W_POOL:(i + 1) * W_POOL]

    # ---- stage 2: (63,1) conv as one lane-dense bf16 matmul over all elements,
    #      + BN2 + ELU (Dropout == identity).
    h2 = jnp.dot(w2_ref[...], act_scr[...],
                 preferred_element_type=jnp.float32)             # (40, 6*BB) f32
    h2 = _elu(h2 * s2_ref[...] + t2_ref[...])

    # ---- stage 3: 1x1 projection (tiny, kept f32), write pre-transposed.
    h3 = jnp.dot(w3_ref[...], h2, preferred_element_type=jnp.float32) + b3_ref[...]
    o_ref[...] = jnp.transpose(h3, (1, 0))                       # (6*BB, 40)


# ---------------- wrapper ----------------
def patch_embedding_forward(x, params, *, block_b=None):
    (w1, b1, g1, be1, rm1, rv1,
     w2, b2, g2, be2, rm2, rv2,
     w3, b3) = params
    B = x.shape[0]

    # Batch block: BB=16 keeps >= 2 "parallel" grid steps for B >= 32 (both v7x
    # TensorCores / megacore) and a 96-lane stage-2 RHS; per-step VMEM ~2.5 MB.
    if block_b is None:
        if B % 16 == 0 and B >= 32:
            block_b = 16
        elif B % 8 == 0:
            block_b = 8
        else:
            block_b = B
    BB = block_b
    assert B % BB == 0, (B, BB)
    assert BB == B or BB % 4 == 0, (B, BB)     # 6*BB must be a multiple of 8
    n_blocks = B // BB

    # fold conv biases + inference BatchNorm into per-channel affine
    s1 = g1 / jnp.sqrt(rv1 + EPS)
    t1 = be1 + (b1 - rm1) * s1
    s2 = g2 / jnp.sqrt(rv2 + EPS)
    t2 = be2 + (b2 - rm2) * s2

    # fused conv1 + avgpool matrix: (100, 240), cols = i*6 + j  (bf16 MXU operand)
    m1 = jnp.einsum('ck,tkj->tcj', w1, jnp.asarray(_POOL_MASK)).reshape(T_IN, N_COLS)
    m1 = m1.astype(jnp.bfloat16)
    s1row = jnp.repeat(s1, W_POOL).reshape(1, N_COLS)
    t1row = jnp.repeat(t1, W_POOL).reshape(1, N_COLS)

    # conv2 weight (o, i, h) -> (40, 2560) with cols ordered (i, h), h zero-padded
    # 63 -> 64 to match the aligned act scratch rows (bf16 MXU operand).
    w2p = jnp.pad(w2, ((0, 0), (0, 0), (0, C_PAD - C_EEG)))
    w2f = w2p.reshape(C_F, K2P).astype(jnp.bfloat16)
    s2c = s2.reshape(C_F, 1)
    t2c = t2.reshape(C_F, 1)
    w3f = w3.astype(jnp.float32)
    b3c = b3.reshape(EMB, 1)

    out = pl.pallas_call(
        _pe_kernel,
        out_shape=jax.ShapeDtypeStruct((B * W_POOL, EMB), jnp.float32),
        grid=(n_blocks,),
        in_specs=[
            pl.BlockSpec((BB, C_EEG, T_IN), lambda nb: (nb, 0, 0)),
            pl.BlockSpec((T_IN, N_COLS), lambda nb: (0, 0)),
            pl.BlockSpec((1, N_COLS), lambda nb: (0, 0)),
            pl.BlockSpec((1, N_COLS), lambda nb: (0, 0)),
            pl.BlockSpec((C_F, K2P), lambda nb: (0, 0)),
            pl.BlockSpec((C_F, 1), lambda nb: (0, 0)),
            pl.BlockSpec((C_F, 1), lambda nb: (0, 0)),
            pl.BlockSpec((EMB, C_F), lambda nb: (0, 0)),
            pl.BlockSpec((EMB, 1), lambda nb: (0, 0)),
        ],
        out_specs=pl.BlockSpec((BB * W_POOL, EMB), lambda nb: (nb, 0)),
        scratch_shapes=[
            pltpu.VMEM((BB * C_PAD, T_IN), jnp.bfloat16),     # staged input
            pltpu.VMEM((BB * C_PAD, N_COLS), jnp.bfloat16),   # stage-1 activations
            pltpu.VMEM((K2P, BB * W_POOL), jnp.bfloat16),     # reorganized stage-2 LHS
        ],
        compiler_params=pltpu.CompilerParams(
            dimension_semantics=("parallel",)),
    )(x, m1, s1row, t1row, w2f, s2c, t2c, w3f, b3c)

    # rows are already ordered (b, j): only a free reshape, no transpose
    return out.reshape(B, W_POOL, EMB)


# ---------------- pure-JAX reference for validation ----------------
def reference_forward(x, params):
    (w1, b1, g1, be1, rm1, rv1,
     w2, b2, g2, be2, rm2, rv2,
     w3, b3) = params
    hi = jax.lax.Precision.HIGHEST
    cols = jnp.stack([x[:, :, k:k + T_CONV] for k in range(K_T)], axis=-1)
    h1 = jnp.einsum('bhtk,ck->bcht', cols, w1, precision=hi) \
        + b1[None, :, None, None]
    pooled = jnp.stack(
        [h1[..., POOL_S * j: POOL_S * j + POOL_K].mean(-1) for j in range(W_POOL)],
        axis=-1)                                            # (B, 40, 63, 6)
    y = (pooled - rm1[None, :, None, None]) / jnp.sqrt(rv1 + EPS)[None, :, None, None]
    y = y * g1[None, :, None, None] + be1[None, :, None, None]
    y = jnp.where(y > 0, y, jnp.exp(y) - 1.0)
    h2 = jnp.einsum('oih,bihj->boj', w2, y, precision=hi) + b2[None, :, None]
    y2 = (h2 - rm2[None, :, None]) / jnp.sqrt(rv2 + EPS)[None, :, None]
    y2 = y2 * g2[None, :, None] + be2[None, :, None]
    y2 = jnp.where(y2 > 0, y2, jnp.exp(y2) - 1.0)
    h3 = jnp.einsum('ec,bcj->bej', w3, y2, precision=hi) + b3[None, :, None]
    return jnp.transpose(h3, (0, 2, 1))


if __name__ == "__main__":
    key = jax.random.PRNGKey(0)
    ks = jax.random.split(key, 12)

    # deterministic synthetic parameters (shapes from the module __init__)
    w1 = 0.2 * jax.random.normal(ks[0], (C_F, K_T), jnp.float32)      # Conv2d(1,40,(1,25))
    b1 = 0.1 * jax.random.normal(ks[1], (C_F,), jnp.float32)
    g1 = 1.0 + 0.1 * jax.random.normal(ks[2], (C_F,), jnp.float32)    # BatchNorm2d(40)
    be1 = 0.1 * jax.random.normal(ks[3], (C_F,), jnp.float32)
    rm1 = jnp.zeros((C_F,), jnp.float32)
    rv1 = jnp.ones((C_F,), jnp.float32)
    w2 = 0.05 * jax.random.normal(ks[4], (C_F, C_F, C_EEG), jnp.float32)  # Conv2d(40,40,(63,1))
    b2 = 0.1 * jax.random.normal(ks[5], (C_F,), jnp.float32)
    g2 = 1.0 + 0.1 * jax.random.normal(ks[6], (C_F,), jnp.float32)    # BatchNorm2d(40)
    be2 = 0.1 * jax.random.normal(ks[7], (C_F,), jnp.float32)
    rm2 = jnp.zeros((C_F,), jnp.float32)
    rv2 = jnp.ones((C_F,), jnp.float32)
    w3 = 0.2 * jax.random.normal(ks[8], (EMB, C_F), jnp.float32)      # Conv2d(40,emb,(1,1))
    b3 = 0.1 * jax.random.normal(ks[9], (EMB,), jnp.float32)
    params = (w1, b1, g1, be1, rm1, rv1, w2, b2, g2, be2, rm2, rv2, w3, b3)

    # bf16 MXU operands with f32 accumulation => validate to ~2-3% of the f32 ref
    ATOL = RTOL = 3e-2

    # small case: B=2 (single grid step, block = whole batch)
    x2 = jax.random.normal(ks[10], (2, C_EEG, T_IN), jnp.float32)
    out2 = jax.block_until_ready(jax.jit(patch_embedding_forward)(x2, params))
    assert out2.shape == (2, W_POOL, EMB), out2.shape
    ref2 = jax.block_until_ready(reference_forward(x2, params))
    assert jnp.allclose(out2, ref2, atol=ATOL, rtol=RTOL), (
        float(jnp.max(jnp.abs(out2 - ref2))))

    # multi-step case: B=32, BB=16 -> grid=(2,) parallel (exercises pipelining
    # and megacore sharding of the batch axis)
    x32 = jax.random.normal(ks[11], (32, C_EEG, T_IN), jnp.float32)
    out32 = jax.block_until_ready(jax.jit(patch_embedding_forward)(x32, params))
    assert out32.shape == (32, W_POOL, EMB), out32.shape
    ref32 = jax.block_until_ready(reference_forward(x32, params))
    assert jnp.allclose(out32, ref32, atol=ATOL, rtol=RTOL), (
        float(jnp.max(jnp.abs(out32 - ref32))))

    print("KERNEL_OK")
</pallas_src>

<mosaic_0001>
module attributes {stable_mosaic.version = 11 : i64} {
  func.func @_pe_kernel(%arg0: i32, %arg1: memref<2x63x100xf32, #tpu.memory_space<vmem>>, %arg2: memref<100x240xbf16, #tpu.memory_space<vmem>>, %arg3: memref<1x240xf32, #tpu.memory_space<vmem>>, %arg4: memref<1x240xf32, #tpu.memory_space<vmem>>, %arg5: memref<40x2560xbf16, #tpu.memory_space<vmem>>, %arg6: memref<40x1xf32, #tpu.memory_space<vmem>>, %arg7: memref<40x1xf32, #tpu.memory_space<vmem>>, %arg8: memref<40x40xf32, #tpu.memory_space<vmem>>, %arg9: memref<40x1xf32, #tpu.memory_space<vmem>>, %arg10: memref<12x40xf32, #tpu.memory_space<vmem>>, %arg11: memref<128x100xbf16, #tpu.memory_space<vmem>>, %arg12: memref<128x240xbf16, #tpu.memory_space<vmem>>, %arg13: memref<2560x12xbf16, #tpu.memory_space<vmem>>) attributes {dimension_semantics = [#tpu.dimension_semantics<parallel>], iteration_bounds = array<i64: 1>, scalar_prefetch = 0 : i64, scratch_operands = 3 : i64, tpu.core_type = #tpu.core_type<tc>, window_params = [{transform_indices = @transform_0, window_bounds = array<i64: 2, 63, 100>}, {pipeline_mode = #tpu.pipeline_mode<synchronous>, transform_indices = @transform_1, window_bounds = array<i64: 100, 240>}, {pipeline_mode = #tpu.pipeline_mode<synchronous>, transform_indices = @transform_2, window_bounds = array<i64: 1, 240>}, {pipeline_mode = #tpu.pipeline_mode<synchronous>, transform_indices = @transform_3, window_bounds = array<i64: 1, 240>}, {pipeline_mode = #tpu.pipeline_mode<synchronous>, transform_indices = @transform_4, window_bounds = array<i64: 40, 2560>}, {pipeline_mode = #tpu.pipeline_mode<synchronous>, transform_indices = @transform_5, window_bounds = array<i64: 40, 1>}, {pipeline_mode = #tpu.pipeline_mode<synchronous>, transform_indices = @transform_6, window_bounds = array<i64: 40, 1>}, {pipeline_mode = #tpu.pipeline_mode<synchronous>, transform_indices = @transform_7, window_bounds = array<i64: 40, 40>}, {pipeline_mode = #tpu.pipeline_mode<synchronous>, transform_indices = @transform_8, window_bounds = array<i64: 40, 1>}, {transform_indices = @transform_9, window_bounds = array<i64: 12, 40>}]} {
    %cst = arith.constant 0.000000e+00 : bf16
    %0 = vector.broadcast %cst : bf16 to vector<128x100xbf16>
    %c0 = arith.constant 0 : index
    %c0_0 = arith.constant 0 : index
    %1 = vector.load %arg11[%c0, %c0_0] : memref<128x100xbf16, #tpu.memory_space<vmem>>, vector<128x100xbf16>
    tpu.vector_store %arg11[%c0, %c0_0], %0 {strides = array<i32>} : memref<128x100xbf16, #tpu.memory_space<vmem>>, vector<128x100xbf16>,
    %c0_1 = arith.constant 0 : index
    %c0_2 = arith.constant 0 : index
    %c0_3 = arith.constant 0 : index
    %2 = vector.load %arg1[%c0_1, %c0_2, %c0_3] : memref<2x63x100xf32, #tpu.memory_space<vmem>>, vector<1x63x100xf32>
    %3 = vector.shape_cast %2 : vector<1x63x100xf32> to vector<63x100xf32>
    %4 = arith.truncf %3 : vector<63x100xf32> to vector<63x100xbf16>
    %c0_4 = arith.constant 0 : index
    %c0_5 = arith.constant 0 : index
    %5 = vector.load %arg11[%c0_4, %c0_5] : memref<128x100xbf16, #tpu.memory_space<vmem>>, vector<63x100xbf16>
    tpu.vector_store %arg11[%c0_4, %c0_5], %4 {strides = array<i32>} : memref<128x100xbf16, #tpu.memory_space<vmem>>, vector<63x100xbf16>,
    %c1 = arith.constant 1 : index
    %c0_6 = arith.constant 0 : index
    %c0_7 = arith.constant 0 : index
    %6 = vector.load %arg1[%c1, %c0_6, %c0_7] : memref<2x63x100xf32, #tpu.memory_space<vmem>>, vector<1x63x100xf32>
    %7 = vector.shape_cast %6 : vector<1x63x100xf32> to vector<63x100xf32>
    %8 = arith.truncf %7 : vector<63x100xf32> to vector<63x100xbf16>
    %c64 = arith.constant 64 : index
    %c0_8 = arith.constant 0 : index
    %9 = vector.load %arg11[%c64, %c0_8] : memref<128x100xbf16, #tpu.memory_space<vmem>>, vector<63x100xbf16>
    tpu.vector_store %arg11[%c64, %c0_8], %8 {strides = array<i32>} : memref<128x100xbf16, #tpu.memory_space<vmem>>, vector<63x100xbf16>,
    %c0_9 = arith.constant 0 : index
    %c0_10 = arith.constant 0 : index
    %10 = vector.load %arg11[%c0_9, %c0_10] : memref<128x100xbf16, #tpu.memory_space<vmem>>, vector<128x100xbf16>
    %c0_11 = arith.constant 0 : index
    %c0_12 = arith.constant 0 : index
    %11 = vector.load %arg2[%c0_11, %c0_12] : memref<100x240xbf16, #tpu.memory_space<vmem>>, vector<100x240xbf16>
    %cst_13 = arith.constant dense<0.000000e+00> : vector<128x240xf32>
    %12 = tpu.matmul %10, %11, %cst_13 {dimension_numbers = #tpu.dot_dimension_numbers<[1], [0], [0], [1], [0, 0, 1, 1], [], []>} : vector<128x100xbf16>, vector<100x240xbf16>, vector<128x240xf32> -> vector<128x240xf32>
    %c0_14 = arith.constant 0 : index
    %c0_15 = arith.constant 0 : index
    %13 = vector.load %arg3[%c0_14, %c0_15] : memref<1x240xf32, #tpu.memory_space<vmem>>, vector<1x240xf32>
    %14 = vector.broadcast %13 : vector<1x240xf32> to vector<128x240xf32>
    %15 = arith.mulf %12, %14 : vector<128x240xf32>
    %c0_16 = arith.constant 0 : index
    %c0_17 = arith.constant 0 : index
    %16 = vector.load %arg4[%c0_16, %c0_17] : memref<1x240xf32, #tpu.memory_space<vmem>>, vector<1x240xf32>
    %17 = vector.broadcast %16 : vector<1x240xf32> to vector<128x240xf32>
    %18 = arith.addf %15, %17 : vector<128x240xf32>
    %cst_18 = arith.constant 0.000000e+00 : f32
    %19 = vector.broadcast %cst_18 : f32 to vector<128x240xf32>
    %20 = arith.cmpf ogt, %18, %19 : vector<128x240xf32>
    %cst_19 = arith.constant 0.000000e+00 : f32
    %21 = vector.broadcast %cst_19 : f32 to vector<128x240xf32>
    %22 = arith.minimumf %18, %21 : vector<128x240xf32>
    %23 = math.exp %22 : vector<128x240xf32>
    %cst_20 = arith.constant 1.000000e+00 : f32
    %24 = vector.broadcast %cst_20 : f32 to vector<128x240xf32>
    %25 = arith.subf %23, %24 : vector<128x240xf32>
    %26 = arith.select %20, %18, %25 : vector<128x240xi1>, vector<128x240xf32>
    %27 = arith.truncf %26 : vector<128x240xf32> to vector<128x240xbf16>
    %c0_21 = arith.constant 0 : index
    %c0_22 = arith.constant 0 : index
    %28 = vector.load %arg12[%c0_21, %c0_22] : memref<128x240xbf16, #tpu.memory_space<vmem>>, vector<128x240xbf16>
    tpu.vector_store %arg12[%c0_21, %c0_22], %27 {strides = array<i32>} : memref<128x240xbf16, #tpu.memory_space<vmem>>, vector<128x240xbf16>,
    %c0_23 = arith.constant 0 : index
    %c0_24 = arith.constant 0 : index
    %29 = vector.load %arg12[%c0_23, %c0_24] : memref<128x240xbf16, #tpu.memory_space<vmem>>, vector<64x240xbf16>
    %30 = vector.extract_strided_slice %29 {offsets = [0, 0], sizes = [64, 6], strides = [1, 1]} : vector<64x240xbf16> to vector<64x6xbf16>
    %c0_25 = arith.constant 0 : index
    %c0_26 = arith.constant 0 : index
    %31 = vector.load %arg13[%c0_25, %c0_26] : memref<2560x12xbf16, #tpu.memory_space<vmem>>, vector<64x6xbf16>
    tpu.vector_store %arg13[%c0_25, %c0_26], %30 {strides = array<i32>} : memref<2560x12xbf16, #tpu.memory_space<vmem>>, vector<64x6xbf16>,
    %32 = vector.extract_strided_slice %29 {offsets = [0, 6], sizes = [64, 6], strides = [1, 1]} : vector<64x240xbf16> to vector<64x6xbf16>
    %c64_27 = arith.constant 64 : index
    %c0_28 = arith.constant 0 : index
    %33 = vector.load %arg13[%c64_27, %c0_28] : memref<2560x12xbf16, #tpu.memory_space<vmem>>, vector<64x6xbf16>
    tpu.vector_store %arg13[%c64_27, %c0_28], %32 {strides = array<i32>} : memref<2560x12xbf16, #tpu.memory_space<vmem>>, vector<64x6xbf16>,
    %34 = vector.extract_strided_slice %29 {offsets = [0, 12], sizes = [64, 6], strides = [1, 1]} : vector<64x240xbf16> to vector<64x6xbf16>
    %c128 = arith.constant 128 : index
    %c0_29 = arith.constant 0 : index
    %35 = vector.load %arg13[%c128, %c0_29] : memref<2560x12xbf16, #tpu.memory_space<vmem>>, vector<64x6xbf16>
    tpu.vector_store %arg13[%c128, %c0_29], %34 {strides = array<i32>} : memref<2560x12xbf16, #tpu.memory_space<vmem>>, vector<64x6xbf16>,
    %36 = vector.extract_strided_slice %29 {offsets = [0, 18], sizes = [64, 6], strides = [1, 1]} : vector<64x240xbf16> to vector<64x6xbf16>
    %c192 = arith.constant 192 : index
    %c0_30 = arith.constant 0 : index
    %37 = vector.load %arg13[%c192, %c0_30] : memref<2560x12xbf16, #tpu.memory_space<vmem>>, vector<64x6xbf16>
    tpu.vector_store %arg13[%c192, %c0_30], %36 {strides = array<i32>} : memref<2560x12xbf16, #tpu.memory_space<vmem>>, vector<64x6xbf16>,
    %38 = vector.extract_strided_slice %29 {offsets = [0, 24], sizes = [64, 6], strides = [1, 1]} : vector<64x240xbf16> to vector<64x6xbf16>
    %c256 = arith.constant 256 : index
    %c0_31 = arith.constant 0 : index
    %39 = vector.load %arg13[%c256, %c0_31] : memref<2560x12xbf16, #tpu.memory_space<vmem>>, vector<64x6xbf16>
    tpu.vector_store %arg13[%c256, %c0_31], %38 {strides = array<i32>} : memref<2560x12xbf16, #tpu.memory_space<vmem>>, vector<64x6xbf16>,
    %40 = vector.extract_strided_slice %29 {offsets = [0, 30], sizes = [64, 6], strides = [1, 1]} : vector<64x240xbf16> to vector<64x6xbf16>
    %c320 = arith.constant 320 : index
    %c0_32 = arith.constant 0 : index
    %41 = vector.load %arg13[%c320, %c0_32] : memref<2560x12xbf16, #tpu.memory_space<vmem>>, vector<64x6xbf16>
    tpu.vector_store %arg13[%c320, %c0_32], %40 {strides = array<i32>} : memref<2560x12xbf16, #tpu.memory_space<vmem>>, vector<64x6xbf16>,
    %42 = vector.extract_strided_slice %29 {offsets = [0, 36], sizes = [64, 6], strides = [1, 1]} : vector<64x240xbf16> to vector<64x6xbf16>
    %c384 = arith.constant 384 : index
    %c0_33 = arith.constant 0 : index
    %43 = vector.load %arg13[%c384, %c0_33] : memref<2560x12xbf16, #tpu.memory_space<vmem>>, vector<64x6xbf16>
    tpu.vector_store %arg13[%c384, %c0_33], %42 {strides = array<i32>} : memref<2560x12xbf16, #tpu.memory_space<vmem>>, vector<64x6xbf16>,
    %44 = vector.extract_strided_slice %29 {offsets = [0, 42], sizes = [64, 6], strides = [1, 1]} : vector<64x240xbf16> to vector<64x6xbf16>
    %c448 = arith.constant 448 : index
    %c0_34 = arith.constant 0 : index
    %45 = vector.load %arg13[%c448, %c0_34] : memref<2560x12xbf16, #tpu.memory_space<vmem>>, vector<64x6xbf16>
    tpu.vector_store %arg13[%c448, %c0_34], %44 {strides = array<i32>} : memref<2560x12xbf16, #tpu.memory_space<vmem>>, vector<64x6xbf16>,
    %46 = vector.extract_strided_slice %29 {offsets = [0, 48], sizes = [64, 6], strides = [1, 1]} : vector<64x240xbf16> to vector<64x6xbf16>
    %c512 = arith.constant 512 : index
    %c0_35 = arith.constant 0 : index
    %47 = vector.load %arg13[%c512, %c0_35] : memref<2560x12xbf16, #tpu.memory_space<vmem>>, vector<64x6xbf16>
    tpu.vector_store %arg13[%c512, %c0_35], %46 {strides = array<i32>} : memref<2560x12xbf16, #tpu.memory_space<vmem>>, vector<64x6xbf16>,
    %48 = vector.extract_strided_slice %29 {offsets = [0, 54], sizes = [64, 6], strides = [1, 1]} : vector<64x240xbf16> to vector<64x6xbf16>
    %c576 = arith.constant 576 : index
    %c0_36 = arith.constant 0 : index
    %49 = vector.load %arg13[%c576, %c0_36] : memref<2560x12xbf16, #tpu.memory_space<vmem>>, vector<64x6xbf16>
    tpu.vector_store %arg13[%c576, %c0_36], %48 {strides = array<i32>} : memref<2560x12xbf16, #tpu.memory_space<vmem>>, vector<64x6xbf16>,
    %50 = vector.extract_strided_slice %29 {offsets = [0, 60], sizes = [64, 6], strides = [1, 1]} : vector<64x240xbf16> to vector<64x6xbf16>
    %c640 = arith.constant 640 : index
    %c0_37 = arith.constant 0 : index
    %51 = vector.load %arg13[%c640, %c0_37] : memref<2560x12xbf16, #tpu.memory_space<vmem>>, vector<64x6xbf16>
    tpu.vector_store %arg13[%c640, %c0_37], %50 {strides = array<i32>} : memref<2560x12xbf16, #tpu.memory_space<vmem>>, vector<64x6xbf16>,
    %52 = vector.extract_strided_slice %29 {offsets = [0, 66], sizes = [64, 6], strides = [1, 1]} : vector<64x240xbf16> to vector<64x6xbf16>
    %c704 = arith.constant 704 : index
    %c0_38 = arith.constant 0 : index
    %53 = vector.load %arg13[%c704, %c0_38] : memref<2560x12xbf16, #tpu.memory_space<vmem>>, vector<64x6xbf16>
    tpu.vector_store %arg13[%c704, %c0_38], %52 {strides = array<i32>} : memref<2560x12xbf16, #tpu.memory_space<vmem>>, vector<64x6xbf16>,
    %54 = vector.extract_strided_slice %29 {offsets = [0, 72], sizes = [64, 6], strides = [1, 1]} : vector<64x240xbf16> to vector<64x6xbf16>
    %c768 = arith.constant 768 : index
    %c0_39 = arith.constant 0 : index
    %55 = vector.load %arg13[%c768, %c0_39] : memref<2560x12xbf16, #tpu.memory_space<vmem>>, vector<64x6xbf16>
    tpu.vector_store %arg13[%c768, %c0_39], %54 {strides = array<i32>} : memref<2560x12xbf16, #tpu.memory_space<vmem>>, vector<64x6xbf16>,
    %56 = vector.extract_strided_slice %29 {offsets = [0, 78], sizes = [64, 6], strides = [1, 1]} : vector<64x240xbf16> to vector<64x6xbf16>
    %c832 = arith.constant 832 : index
    %c0_40 = arith.constant 0 : index
    %57 = vector.load %arg13[%c832, %c0_40] : memref<2560x12xbf16, #tpu.memory_space<vmem>>, vector<64x6xbf16>
    tpu.vector_store %arg13[%c832, %c0_40], %56 {strides = array<i32>} : memref<2560x12xbf16, #tpu.memory_space<vmem>>, vector<64x6xbf16>,
    %58 = vector.extract_strided_slice %29 {offsets = [0, 84], sizes = [64, 6], strides = [1, 1]} : vector<64x240xbf16> to vector<64x6xbf16>
    %c896 = arith.constant 896 : index
    %c0_41 = arith.constant 0 : index
    %59 = vector.load %arg13[%c896, %c0_41] : memref<2560x12xbf16, #tpu.memory_space<vmem>>, vector<64x6xbf16>
    tpu.vector_store %arg13[%c896, %c0_41], %58 {strides = array<i32>} : memref<2560x12xbf16, #tpu.memory_space<vmem>>, vector<64x6xbf16>,
    %60 = vector.extract_strided_slice %29 {offsets = [0, 90], sizes = [64, 6], strides = [1, 1]} : vector<64x240xbf16> to vector<64x6xbf16>
    %c960 = arith.constant 960 : index
    %c0_42 = arith.constant 0 : index
    %61 = vector.load %arg13[%c960, %c0_42] : memref<2560x12xbf16, #tpu.memory_space<vmem>>, vector<64x6xbf16>
    tpu.vector_store %arg13[%c960, %c0_42], %60 {strides = array<i32>} : memref<2560x12xbf16, #tpu.memory_space<vmem>>, vector<64x6xbf16>,
    %62 = vector.extract_strided_slice %29 {offsets = [0, 96], sizes = [64, 6], strides = [1, 1]} : vector<64x240xbf16> to vector<64x6xbf16>
    %c1024 = arith.constant 1024 : index
    %c0_43 = arith.constant 0 : index
    %63 = vector.load %arg13[%c1024, %c0_43] : memref<2560x12xbf16, #tpu.memory_space<vmem>>, vector<64x6xbf16>
    tpu.vector_store %arg13[%c1024, %c0_43], %62 {strides = array<i32>} : memref<2560x12xbf16, #tpu.memory_space<vmem>>, vector<64x6xbf16>,
    %64 = vector.extract_strided_slice %29 {offsets = [0, 102], sizes = [64, 6], strides = [1, 1]} : vector<64x240xbf16> to vector<64x6xbf16>
    %c1088 = arith.constant 1088 : index
    %c0_44 = arith.constant 0 : index
    %65 = vector.load %arg13[%c1088, %c0_44] : memref<2560x12xbf16, #tpu.memory_space<vmem>>, vector<64x6xbf16>
    tpu.vector_store %arg13[%c1088, %c0_44], %64 {strides = array<i32>} : memref<2560x12xbf16, #tpu.memory_space<vmem>>, vector<64x6xbf16>,
    %66 = vector.extract_strided_slice %29 {offsets = [0, 108], sizes = [64, 6], strides = [1, 1]} : vector<64x240xbf16> to vector<64x6xbf16>
    %c1152 = arith.constant 1152 : index
    %c0_45 = arith.constant 0 : index
    %67 = vector.load %arg13[%c1152, %c0_45] : memref<2560x12xbf16, #tpu.memory_space<vmem>>, vector<64x6xbf16>
    tpu.vector_store %arg13[%c1152, %c0_45], %66 {strides = array<i32>} : memref<2560x12xbf16, #tpu.memory_space<vmem>>, vector<64x6xbf16>,
    %68 = vector.extract_strided_slice %29 {offsets = [0, 114], sizes = [64, 6], strides = [1, 1]} : vector<64x240xbf16> to vector<64x6xbf16>
    %c1216 = arith.constant 1216 : index
    %c0_46 = arith.constant 0 : index
    %69 = vector.load %arg13[%c1216, %c0_46] : memref<2560x12xbf16, #tpu.memory_space<vmem>>, vector<64x6xbf16>
    tpu.vector_store %arg13[%c1216, %c0_46], %68 {strides = array<i32>} : memref<2560x12xbf16, #tpu.memory_space<vmem>>, vector<64x6xbf16>,
    %70 = vector.extract_strided_slice %29 {offsets = [0, 120], sizes = [64, 6], strides = [1, 1]} : vector<64x240xbf16> to vector<64x6xbf16>
    %c1280 = arith.constant 1280 : index
    %c0_47 = arith.constant 0 : index
    %71 = vector.load %arg13[%c1280, %c0_47] : memref<2560x12xbf16, #tpu.memory_space<vmem>>, vector<64x6xbf16>
    tpu.vector_store %arg13[%c1280, %c0_47], %70 {strides = array<i32>} : memref<2560x12xbf16, #tpu.memory_space<vmem>>, vector<64x6xbf16>,
    %72 = vector.extract_strided_slice %29 {offsets = [0, 126], sizes = [64, 6], strides = [1, 1]} : vector<64x240xbf16> to vector<64x6xbf16>
    %c1344 = arith.constant 1344 : index
    %c0_48 = arith.constant 0 : index
    %73 = vector.load %arg13[%c1344, %c0_48] : memref<2560x12xbf16, #tpu.memory_space<vmem>>, vector<64x6xbf16>
    tpu.vector_store %arg13[%c1344, %c0_48], %72 {strides = array<i32>} : memref<2560x12xbf16, #tpu.memory_space<vmem>>, vector<64x6xbf16>,
    %74 = vector.extract_strided_slice %29 {offsets = [0, 132], sizes = [64, 6], strides = [1, 1]} : vector<64x240xbf16> to vector<64x6xbf16>
    %c1408 = arith.constant 1408 : index
    %c0_49 = arith.constant 0 : index
    %75 = vector.load %arg13[%c1408, %c0_49] : memref<2560x12xbf16, #tpu.memory_space<vmem>>, vector<64x6xbf16>
    tpu.vector_store %arg13[%c1408, %c0_49], %74 {strides = array<i32>} : memref<2560x12xbf16, #tpu.memory_space<vmem>>, vector<64x6xbf16>,
    %76 = vector.extract_strided_slice %29 {offsets = [0, 138], sizes = [64, 6], strides = [1, 1]} : vector<64x240xbf16> to vector<64x6xbf16>
    %c1472 = arith.constant 1472 : index
    %c0_50 = arith.constant 0 : index
    %77 = vector.load %arg13[%c1472, %c0_50] : memref<2560x12xbf16, #tpu.memory_space<vmem>>, vector<64x6xbf16>
    tpu.vector_store %arg13[%c1472, %c0_50], %76 {strides = array<i32>} : memref<2560x12xbf16, #tpu.memory_space<vmem>>, vector<64x6xbf16>,
    %78 = vector.extract_strided_slice %29 {offsets = [0, 144], sizes = [64, 6], strides = [1, 1]} : vector<64x240xbf16> to vector<64x6xbf16>
    %c1536 = arith.constant 1536 : index
    %c0_51 = arith.constant 0 : index
    %79 = vector.load %arg13[%c1536, %c0_51] : memref<2560x12xbf16, #tpu.memory_space<vmem>>, vector<64x6xbf16>
    tpu.vector_store %arg13[%c1536, %c0_51], %78 {strides = array<i32>} : memref<2560x12xbf16, #tpu.memory_space<vmem>>, vector<64x6xbf16>,
    %80 = vector.extract_strided_slice %29 {offsets = [0, 150], sizes = [64, 6], strides = [1, 1]} : vector<64x240xbf16> to vector<64x6xbf16>
    %c1600 = arith.constant 1600 : index
    %c0_52 = arith.constant 0 : index
    %81 = vector.load %arg13[%c1600, %c0_52] : memref<2560x12xbf16, #tpu.memory_space<vmem>>, vector<64x6xbf16>
    tpu.vector_store %arg13[%c1600, %c0_52], %80 {strides = array<i32>} : memref<2560x12xbf16, #tpu.memory_space<vmem>>, vector<64x6xbf16>,
    %82 = vector.extract_strided_slice %29 {offsets = [0, 156], sizes = [64, 6], strides = [1, 1]} : vector<64x240xbf16> to vector<64x6xbf16>
    %c1664 = arith.constant 1664 : index
    %c0_53 = arith.constant 0 : index
    %83 = vector.load %arg13[%c1664, %c0_53] : memref<2560x12xbf16, #tpu.memory_space<vmem>>, vector<64x6xbf16>
    tpu.vector_store %arg13[%c1664, %c0_53], %82 {strides = array<i32>} : memref<2560x12xbf16, #tpu.memory_space<vmem>>, vector<64x6xbf16>,
    %84 = vector.extract_strided_slice %29 {offsets = [0, 162], sizes = [64, 6], strides = [1, 1]} : vector<64x240xbf16> to vector<64x6xbf16>
    %c1728 = arith.constant 1728 : index
    %c0_54 = arith.constant 0 : index
    %85 = vector.load %arg13[%c1728, %c0_54] : memref<2560x12xbf16, #tpu.memory_space<vmem>>, vector<64x6xbf16>
    tpu.vector_store %arg13[%c1728, %c0_54], %84 {strides = array<i32>} : memref<2560x12xbf16, #tpu.memory_space<vmem>>, vector<64x6xbf16>,
    %86 = vector.extract_strided_slice %29 {offsets = [0, 168], sizes = [64, 6], strides = [1, 1]} : vector<64x240xbf16> to vector<64x6xbf16>
    %c1792 = arith.constant 1792 : index
    %c0_55 = arith.constant 0 : index
    %87 = vector.load %arg13[%c1792, %c0_55] : memref<2560x12xbf16, #tpu.memory_space<vmem>>, vector<64x6xbf16>
    tpu.vector_store %arg13[%c1792, %c0_55], %86 {strides = array<i32>} : memref<2560x12xbf16, #tpu.memory_space<vmem>>, vector<64x6xbf16>,
    %88 = vector.extract_strided_slice %29 {offsets = [0, 174], sizes = [64, 6], strides = [1, 1]} : vector<64x240xbf16> to vector<64x6xbf16>
    %c1856 = arith.constant 1856 : index
    %c0_56 = arith.constant 0 : index
    %89 = vector.load %arg13[%c1856, %c0_56] : memref<2560x12xbf16, #tpu.memory_space<vmem>>, vector<64x6xbf16>
    tpu.vector_store %arg13[%c1856, %c0_56], %88 {strides = array<i32>} : memref<2560x12xbf16, #tpu.memory_space<vmem>>, vector<64x6xbf16>,
    %90 = vector.extract_strided_slice %29 {offsets = [0, 180], sizes = [64, 6], strides = [1, 1]} : vector<64x240xbf16> to vector<64x6xbf16>
    %c1920 = arith.constant 1920 : index
    %c0_57 = arith.constant 0 : index
    %91 = vector.load %arg13[%c1920, %c0_57] : memref<2560x12xbf16, #tpu.memory_space<vmem>>, vector<64x6xbf16>
    tpu.vector_store %arg13[%c1920, %c0_57], %90 {strides = array<i32>} : memref<2560x12xbf16, #tpu.memory_space<vmem>>, vector<64x6xbf16>,
    %92 = vector.extract_strided_slice %29 {offsets = [0, 186], sizes = [64, 6], strides = [1, 1]} : vector<64x240xbf16> to vector<64x6xbf16>
    %c1984 = arith.constant 1984 : index
    %c0_58 = arith.constant 0 : index
    %93 = vector.load %arg13[%c1984, %c0_58] : memref<2560x12xbf16, #tpu.memory_space<vmem>>, vector<64x6xbf16>
    tpu.vector_store %arg13[%c1984, %c0_58], %92 {strides = array<i32>} : memref<2560x12xbf16, #tpu.memory_space<vmem>>, vector<64x6xbf16>,
    %94 = vector.extract_strided_slice %29 {offsets = [0, 192], sizes = [64, 6], strides = [1, 1]} : vector<64x240xbf16> to vector<64x6xbf16>
    %c2048 = arith.constant 2048 : index
    %c0_59 = arith.constant 0 : index
    %95 = vector.load %arg13[%c2048, %c0_59] : memref<2560x12xbf16, #tpu.memory_space<vmem>>, vector<64x6xbf16>
    tpu.vector_store %arg13[%c2048, %c0_59], %94 {strides = array<i32>} : memref<2560x12xbf16, #tpu.memory_space<vmem>>, vector<64x6xbf16>,
    %96 = vector.extract_strided_slice %29 {offsets = [0, 198], sizes = [64, 6], strides = [1, 1]} : vector<64x240xbf16> to vector<64x6xbf16>
    %c2112 = arith.constant 2112 : index
    %c0_60 = arith.constant 0 : index
    %97 = vector.load %arg13[%c2112, %c0_60] : memref<2560x12xbf16, #tpu.memory_space<vmem>>, vector<64x6xbf16>
    tpu.vector_store %arg13[%c2112, %c0_60], %96 {strides = array<i32>} : memref<2560x12xbf16, #tpu.memory_space<vmem>>, vector<64x6xbf16>,
    %98 = vector.extract_strided_slice %29 {offsets = [0, 204], sizes = [64, 6], strides = [1, 1]} : vector<64x240xbf16> to vector<64x6xbf16>
    %c2176 = arith.constant 2176 : index
    %c0_61 = arith.constant 0 : index
    %99 = vector.load %arg13[%c2176, %c0_61] : memref<2560x12xbf16, #tpu.memory_space<vmem>>, vector<64x6xbf16>
    tpu.vector_store %arg13[%c2176, %c0_61], %98 {strides = array<i32>} : memref<2560x12xbf16, #tpu.memory_space<vmem>>, vector<64x6xbf16>,
    %100 = vector.extract_strided_slice %29 {offsets = [0, 210], sizes = [64, 6], strides = [1, 1]} : vector<64x240xbf16> to vector<64x6xbf16>
    %c2240 = arith.constant 2240 : index
    %c0_62 = arith.constant 0 : index
    %101 = vector.load %arg13[%c2240, %c0_62] : memref<2560x12xbf16, #tpu.memory_space<vmem>>, vector<64x6xbf16>
    tpu.vector_store %arg13[%c2240, %c0_62], %100 {strides = array<i32>} : memref<2560x12xbf16, #tpu.memory_space<vmem>>, vector<64x6xbf16>,
    %102 = vector.extract_strided_slice %29 {offsets = [0, 216], sizes = [64, 6], strides = [1, 1]} : vector<64x240xbf16> to vector<64x6xbf16>
    %c2304 = arith.constant 2304 : index
    %c0_63 = arith.constant 0 : index
    %103 = vector.load %arg13[%c2304, %c0_63] : memref<2560x12xbf16, #tpu.memory_space<vmem>>, vector<64x6xbf16>
    tpu.vector_store %arg13[%c2304, %c0_63], %102 {strides = array<i32>} : memref<2560x12xbf16, #tpu.memory_space<vmem>>, vector<64x6xbf16>,
    %104 = vector.extract_strided_slice %29 {offsets = [0, 222], sizes = [64, 6], strides = [1, 1]} : vector<64x240xbf16> to vector<64x6xbf16>
    %c2368 = arith.constant 2368 : index
    %c0_64 = arith.constant 0 : index
    %105 = vector.load %arg13[%c2368, %c0_64] : memref<2560x12xbf16, #tpu.memory_space<vmem>>, vector<64x6xbf16>
    tpu.vector_store %arg13[%c2368, %c0_64], %104 {strides = array<i32>} : memref<2560x12xbf16, #tpu.memory_space<vmem>>, vector<64x6xbf16>,
    %106 = vector.extract_strided_slice %29 {offsets = [0, 228], sizes = [64, 6], strides = [1, 1]} : vector<64x240xbf16> to vector<64x6xbf16>
    %c2432 = arith.constant 2432 : index
    %c0_65 = arith.constant 0 : index
    %107 = vector.load %arg13[%c2432, %c0_65] : memref<2560x12xbf16, #tpu.memory_space<vmem>>, vector<64x6xbf16>
    tpu.vector_store %arg13[%c2432, %c0_65], %106 {strides = array<i32>} : memref<2560x12xbf16, #tpu.memory_space<vmem>>, vector<64x6xbf16>,
    %108 = vector.extract_strided_slice %29 {offsets = [0, 234], sizes = [64, 6], strides = [1, 1]} : vector<64x240xbf16> to vector<64x6xbf16>
    %c2496 = arith.constant 2496 : index
    %c0_66 = arith.constant 0 : index
    %109 = vector.load %arg13[%c2496, %c0_66] : memref<2560x12xbf16, #tpu.memory_space<vmem>>, vector<64x6xbf16>
    tpu.vector_store %arg13[%c2496, %c0_66], %108 {strides = array<i32>} : memref<2560x12xbf16, #tpu.memory_space<vmem>>, vector<64x6xbf16>,
    %c64_67 = arith.constant 64 : index
    %c0_68 = arith.constant 0 : index
    %110 = vector.load %arg12[%c64_67, %c0_68] : memref<128x240xbf16, #tpu.memory_space<vmem>>, vector<64x240xbf16>
    %111 = vector.extract_strided_slice %110 {offsets = [0, 0], sizes = [64, 6], strides = [1, 1]} : vector<64x240xbf16> to vector<64x6xbf16>
    %c0_69 = arith.constant 0 : index
    %c6 = arith.constant 6 : index
    %112 = vector.load %arg13[%c0_69, %c6] : memref<2560x12xbf16, #tpu.memory_space<vmem>>, vector<64x6xbf16>
    tpu.vector_store %arg13[%c0_69, %c6], %111 {strides = array<i32>} : memref<2560x12xbf16, #tpu.memory_space<vmem>>, vector<64x6xbf16>,
    %113 = vector.extract_strided_slice %110 {offsets = [0, 6], sizes = [64, 6], strides = [1, 1]} : vector<64x240xbf16> to vector<64x6xbf16>
    %c64_70 = arith.constant 64 : index
    %c6_71 = arith.constant 6 : index
    %114 = vector.load %arg13[%c64_70, %c6_71] : memref<2560x12xbf16, #tpu.memory_space<vmem>>, vector<64x6xbf16>
    tpu.vector_store %arg13[%c64_70, %c6_71], %113 {strides = array<i32>} : memref<2560x12xbf16, #tpu.memory_space<vmem>>, vector<64x6xbf16>,
    %115 = vector.extract_strided_slice %110 {offsets = [0, 12], sizes = [64, 6], strides = [1, 1]} : vector<64x240xbf16> to vector<64x6xbf16>
    %c128_72 = arith.constant 128 : index
    %c6_73 = arith.constant 6 : index
    %116 = vector.load %arg13[%c128_72, %c6_73] : memref<2560x12xbf16, #tpu.memory_space<vmem>>, vector<64x6xbf16>
    tpu.vector_store %arg13[%c128_72, %c6_73], %115 {strides = array<i32>} : memref<2560x12xbf16, #tpu.memory_space<vmem>>, vector<64x6xbf16>,
    %117 = vector.extract_strided_slice %110 {offsets = [0, 18], sizes = [64, 6], strides = [1, 1]} : vector<64x240xbf16> to vector<64x6xbf16>
    %c192_74 = arith.constant 192 : index
    %c6_75 = arith.constant 6 : index
    %118 = vector.load %arg13[%c192_74, %c6_75] : memref<2560x12xbf16, #tpu.memory_space<vmem>>, vector<64x6xbf16>
    tpu.vector_store %arg13[%c192_74, %c6_75], %117 {strides = array<i32>} : memref<2560x12xbf16, #tpu.memory_space<vmem>>, vector<64x6xbf16>,
    %119 = vector.extract_strided_slice %110 {offsets = [0, 24], sizes = [64, 6], strides = [1, 1]} : vector<64x240xbf16> to vector<64x6xbf16>
    %c256_76 = arith.constant 256 : index
    %c6_77 = arith.constant 6 : index
    %120 = vector.load %arg13[%c256_76, %c6_77] : memref<2560x12xbf16, #tpu.memory_space<vmem>>, vector<64x6xbf16>
    tpu.vector_store %arg13[%c256_76, %c6_77], %119 {strides = array<i32>} : memref<2560x12xbf16, #tpu.memory_space<vmem>>, vector<64x6xbf16>,
    %121 = vector.extract_strided_slice %110 {offsets = [0, 30], sizes = [64, 6], strides = [1, 1]} : vector<64x240xbf16> to vector<64x6xbf16>
    %c320_78 = arith.constant 320 : index
    %c6_79 = arith.constant 6 : index
    %122 = vector.load %arg13[%c320_78, %c6_79] : memref<2560x12xbf16, #tpu.memory_space<vmem>>, vector<64x6xbf16>
    tpu.vector_store %arg13[%c320_78, %c6_79], %121 {strides = array<i32>} : memref<2560x12xbf16, #tpu.memory_space<vmem>>, vector<64x6xbf16>,
    %123 = vector.extract_strided_slice %110 {offsets = [0, 36], sizes = [64, 6], strides = [1, 1]} : vector<64x240xbf16> to vector<64x6xbf16>
    %c384_80 = arith.constant 384 : index
    %c6_81 = arith.constant 6 : index
    %124 = vector.load %arg13[%c384_80, %c6_81] : memref<2560x12xbf16, #tpu.memory_space<vmem>>, vector<64x6xbf16>
    tpu.vector_store %arg13[%c384_80, %c6_81], %123 {strides = array<i32>} : memref<2560x12xbf16, #tpu.memory_space<vmem>>, vector<64x6xbf16>,
    %125 = vector.extract_strided_slice %110 {offsets = [0, 42], sizes = [64, 6], strides = [1, 1]} : vector<64x240xbf16> to vector<64x6xbf16>
    %c448_82 = arith.constant 448 : index
    %c6_83 = arith.constant 6 : index
    %126 = vector.load %arg13[%c448_82, %c6_83] : memref<2560x12xbf16, #tpu.memory_space<vmem>>, vector<64x6xbf16>
    tpu.vector_store %arg13[%c448_82, %c6_83], %125 {strides = array<i32>} : memref<2560x12xbf16, #tpu.memory_space<vmem>>, vector<64x6xbf16>,
    %127 = vector.extract_strided_slice %110 {offsets = [0, 48], sizes = [64, 6], strides = [1, 1]} : vector<64x240xbf16> to vector<64x6xbf16>
    %c512_84 = arith.constant 512 : index
    %c6_85 = arith.constant 6 : index
    %128 = vector.load %arg13[%c512_84, %c6_85] : memref<2560x12xbf16, #tpu.memory_space<vmem>>, vector<64x6xbf16>
    tpu.vector_store %arg13[%c512_84, %c6_85], %127 {strides = array<i32>} : memref<2560x12xbf16, #tpu.memory_space<vmem>>, vector<64x6xbf16>,
    %129 = vector.extract_strided_slice %110 {offsets = [0, 54], sizes = [64, 6], strides = [1, 1]} : vector<64x240xbf16> to vector<64x6xbf16>
    %c576_86 = arith.constant 576 : index
    %c6_87 = arith.constant 6 : index
    %130 = vector.load %arg13[%c576_86, %c6_87] : memref<2560x12xbf16, #tpu.memory_space<vmem>>, vector<64x6xbf16>
    tpu.vector_store %arg13[%c576_86, %c6_87], %129 {strides = array<i32>} : memref<2560x12xbf16, #tpu.memory_space<vmem>>, vector<64x6xbf16>,
    %131 = vector.extract_strided_slice %110 {offsets = [0, 60], sizes = [64, 6], strides = [1, 1]} : vector<64x240xbf16> to vector<64x6xbf16>
    %c640_88 = arith.constant 640 : index
    %c6_89 = arith.constant 6 : index
    %132 = vector.load %arg13[%c640_88, %c6_89] : memref<2560x12xbf16, #tpu.memory_space<vmem>>, vector<64x6xbf16>
    tpu.vector_store %arg13[%c640_88, %c6_89], %131 {strides = array<i32>} : memref<2560x12xbf16, #tpu.memory_space<vmem>>, vector<64x6xbf16>,
    %133 = vector.extract_strided_slice %110 {offsets = [0, 66], sizes = [64, 6], strides = [1, 1]} : vector<64x240xbf16> to vector<64x6xbf16>
    %c704_90 = arith.constant 704 : index
    %c6_91 = arith.constant 6 : index
    %134 = vector.load %arg13[%c704_90, %c6_91] : memref<2560x12xbf16, #tpu.memory_space<vmem>>, vector<64x6xbf16>
    tpu.vector_store %arg13[%c704_90, %c6_91], %133 {strides = array<i32>} : memref<2560x12xbf16, #tpu.memory_space<vmem>>, vector<64x6xbf16>,
    %135 = vector.extract_strided_slice %110 {offsets = [0, 72], sizes = [64, 6], strides = [1, 1]} : vector<64x240xbf16> to vector<64x6xbf16>
    %c768_92 = arith.constant 768 : index
    %c6_93 = arith.constant 6 : index
    %136 = vector.load %arg13[%c768_92, %c6_93] : memref<2560x12xbf16, #tpu.memory_space<vmem>>, vector<64x6xbf16>
    tpu.vector_store %arg13[%c768_92, %c6_93], %135 {strides = array<i32>} : memref<2560x12xbf16, #tpu.memory_space<vmem>>, vector<64x6xbf16>,
    %137 = vector.extract_strided_slice %110 {offsets = [0, 78], sizes = [64, 6], strides = [1, 1]} : vector<64x240xbf16> to vector<64x6xbf16>
    %c832_94 = arith.constant 832 : index
    %c6_95 = arith.constant 6 : index
    %138 = vector.load %arg13[%c832_94, %c6_95] : memref<2560x12xbf16, #tpu.memory_space<vmem>>, vector<64x6xbf16>
    tpu.vector_store %arg13[%c832_94, %c6_95], %137 {strides = array<i32>} : memref<2560x12xbf16, #tpu.memory_space<vmem>>, vector<64x6xbf16>,
    %139 = vector.extract_strided_slice %110 {offsets = [0, 84], sizes = [64, 6], strides = [1, 1]} : vector<64x240xbf16> to vector<64x6xbf16>
    %c896_96 = arith.constant 896 : index
    %c6_97 = arith.constant 6 : index
    %140 = vector.load %arg13[%c896_96, %c6_97] : memref<2560x12xbf16, #tpu.memory_space<vmem>>, vector<64x6xbf16>
    tpu.vector_store %arg13[%c896_96, %c6_97], %139 {strides = array<i32>} : memref<2560x12xbf16, #tpu.memory_space<vmem>>, vector<64x6xbf16>,
    %141 = vector.extract_strided_slice %110 {offsets = [0, 90], sizes = [64, 6], strides = [1, 1]} : vector<64x240xbf16> to vector<64x6xbf16>
    %c960_98 = arith.constant 960 : index
    %c6_99 = arith.constant 6 : index
    %142 = vector.load %arg13[%c960_98, %c6_99] : memref<2560x12xbf16, #tpu.memory_space<vmem>>, vector<64x6xbf16>
    tpu.vector_store %arg13[%c960_98, %c6_99], %141 {strides = array<i32>} : memref<2560x12xbf16, #tpu.memory_space<vmem>>, vector<64x6xbf16>,
    %143 = vector.extract_strided_slice %110 {offsets = [0, 96], sizes = [64, 6], strides = [1, 1]} : vector<64x240xbf16> to vector<64x6xbf16>
    %c1024_100 = arith.constant 1024 : index
    %c6_101 = arith.constant 6 : index
    %144 = vector.load %arg13[%c1024_100, %c6_101] : memref<2560x12xbf16, #tpu.memory_space<vmem>>, vector<64x6xbf16>
    tpu.vector_store %arg13[%c1024_100, %c6_101], %143 {strides = array<i32>} : memref<2560x12xbf16, #tpu.memory_space<vmem>>, vector<64x6xbf16>,
    %145 = vector.extract_strided_slice %110 {offsets = [0, 102], sizes = [64, 6], strides = [1, 1]} : vector<64x240xbf16> to vector<64x6xbf16>
    %c1088_102 = arith.constant 1088 : index
    %c6_103 = arith.constant 6 : index
    %146 = vector.load %arg13[%c1088_102, %c6_103] : memref<2560x12xbf16, #tpu.memory_space<vmem>>, vector<64x6xbf16>
    tpu.vector_store %arg13[%c1088_102, %c6_103], %145 {strides = array<i32>} : memref<2560x12xbf16, #tpu.memory_space<vmem>>, vector<64x6xbf16>,
    %147 = vector.extract_strided_slice %110 {offsets = [0, 108], sizes = [64, 6], strides = [1, 1]} : vector<64x240xbf16> to vector<64x6xbf16>
    %c1152_104 = arith.constant 1152 : index
    %c6_105 = arith.constant 6 : index
    %148 = vector.load %arg13[%c1152_104, %c6_105] : memref<2560x12xbf16, #tpu.memory_space<vmem>>, vector<64x6xbf16>
    tpu.vector_store %arg13[%c1152_104, %c6_105], %147 {strides = array<i32>} : memref<2560x12xbf16, #tpu.memory_space<vmem>>, vector<64x6xbf16>,
    %149 = vector.extract_strided_slice %110 {offsets = [0, 114], sizes = [64, 6], strides = [1, 1]} : vector<64x240xbf16> to vector<64x6xbf16>
    %c1216_106 = arith.constant 1216 : index
    %c6_107 = arith.constant 6 : index
    %150 = vector.load %arg13[%c1216_106, %c6_107] : memref<2560x12xbf16, #tpu.memory_space<vmem>>, vector<64x6xbf16>
    tpu.vector_store %arg13[%c1216_106, %c6_107], %149 {strides = array<i32>} : memref<2560x12xbf16, #tpu.memory_space<vmem>>, vector<64x6xbf16>,
    %151 = vector.extract_strided_slice %110 {offsets = [0, 120], sizes = [64, 6], strides = [1, 1]} : vector<64x240xbf16> to vector<64x6xbf16>
    %c1280_108 = arith.constant 1280 : index
    %c6_109 = arith.constant 6 : index
    %152 = vector.load %arg13[%c1280_108, %c6_109] : memref<2560x12xbf16, #tpu.memory_space<vmem>>, vector<64x6xbf16>
    tpu.vector_store %arg13[%c1280_108, %c6_109], %151 {strides = array<i32>} : memref<2560x12xbf16, #tpu.memory_space<vmem>>, vector<64x6xbf16>,
    %153 = vector.extract_strided_slice %110 {offsets = [0, 126], sizes = [64, 6], strides = [1, 1]} : vector<64x240xbf16> to vector<64x6xbf16>
    %c1344_110 = arith.constant 1344 : index
    %c6_111 = arith.constant 6 : index
    %154 = vector.load %arg13[%c1344_110, %c6_111] : memref<2560x12xbf16, #tpu.memory_space<vmem>>, vector<64x6xbf16>
    tpu.vector_store %arg13[%c1344_110, %c6_111], %153 {strides = array<i32>} : memref<2560x12xbf16, #tpu.memory_space<vmem>>, vector<64x6xbf16>,
    %155 = vector.extract_strided_slice %110 {offsets = [0, 132], sizes = [64, 6], strides = [1, 1]} : vector<64x240xbf16> to vector<64x6xbf16>
    %c1408_112 = arith.constant 1408 : index
    %c6_113 = arith.constant 6 : index
    %156 = vector.load %arg13[%c1408_112, %c6_113] : memref<2560x12xbf16, #tpu.memory_space<vmem>>, vector<64x6xbf16>
    tpu.vector_store %arg13[%c1408_112, %c6_113], %155 {strides = array<i32>} : memref<2560x12xbf16, #tpu.memory_space<vmem>>, vector<64x6xbf16>,
    %157 = vector.extract_strided_slice %110 {offsets = [0, 138], sizes = [64, 6], strides = [1, 1]} : vector<64x240xbf16> to vector<64x6xbf16>
    %c1472_114 = arith.constant 1472 : index
    %c6_115 = arith.constant 6 : index
    %158 = vector.load %arg13[%c1472_114, %c6_115] : memref<2560x12xbf16, #tpu.memory_space<vmem>>, vector<64x6xbf16>
    tpu.vector_store %arg13[%c1472_114, %c6_115], %157 {strides = array<i32>} : memref<2560x12xbf16, #tpu.memory_space<vmem>>, vector<64x6xbf16>,
    %159 = vector.extract_strided_slice %110 {offsets = [0, 144], sizes = [64, 6], strides = [1, 1]} : vector<64x240xbf16> to vector<64x6xbf16>
    %c1536_116 = arith.constant 1536 : index
    %c6_117 = arith.constant 6 : index
    %160 = vector.load %arg13[%c1536_116, %c6_117] : memref<2560x12xbf16, #tpu.memory_space<vmem>>, vector<64x6xbf16>
    tpu.vector_store %arg13[%c1536_116, %c6_117], %159 {strides = array<i32>} : memref<2560x12xbf16, #tpu.memory_space<vmem>>, vector<64x6xbf16>,
    %161 = vector.extract_strided_slice %110 {offsets = [0, 150], sizes = [64, 6], strides = [1, 1]} : vector<64x240xbf16> to vector<64x6xbf16>
    %c1600_118 = arith.constant 1600 : index
    %c6_119 = arith.constant 6 : index
    %162 = vector.load %arg13[%c1600_118, %c6_119] : memref<2560x12xbf16, #tpu.memory_space<vmem>>, vector<64x6xbf16>
    tpu.vector_store %arg13[%c1600_118, %c6_119], %161 {strides = array<i32>} : memref<2560x12xbf16, #tpu.memory_space<vmem>>, vector<64x6xbf16>,
    %163 = vector.extract_strided_slice %110 {offsets = [0, 156], sizes = [64, 6], strides = [1, 1]} : vector<64x240xbf16> to vector<64x6xbf16>
    %c1664_120 = arith.constant 1664 : index
    %c6_121 = arith.constant 6 : index
    %164 = vector.load %arg13[%c1664_120, %c6_121] : memref<2560x12xbf16, #tpu.memory_space<vmem>>, vector<64x6xbf16>
    tpu.vector_store %arg13[%c1664_120, %c6_121], %163 {strides = array<i32>} : memref<2560x12xbf16, #tpu.memory_space<vmem>>, vector<64x6xbf16>,
    %165 = vector.extract_strided_slice %110 {offsets = [0, 162], sizes = [64, 6], strides = [1, 1]} : vector<64x240xbf16> to vector<64x6xbf16>
    %c1728_122 = arith.constant 1728 : index
    %c6_123 = arith.constant 6 : index
    %166 = vector.load %arg13[%c1728_122, %c6_123] : memref<2560x12xbf16, #tpu.memory_space<vmem>>, vector<64x6xbf16>
    tpu.vector_store %arg13[%c1728_122, %c6_123], %165 {strides = array<i32>} : memref<2560x12xbf16, #tpu.memory_space<vmem>>, vector<64x6xbf16>,
    %167 = vector.extract_strided_slice %110 {offsets = [0, 168], sizes = [64, 6], strides = [1, 1]} : vector<64x240xbf16> to vector<64x6xbf16>
    %c1792_124 = arith.constant 1792 : index
    %c6_125 = arith.constant 6 : index
    %168 = vector.load %arg13[%c1792_124, %c6_125] : memref<2560x12xbf16, #tpu.memory_space<vmem>>, vector<64x6xbf16>
    tpu.vector_store %arg13[%c1792_124, %c6_125], %167 {strides = array<i32>} : memref<2560x12xbf16, #tpu.memory_space<vmem>>, vector<64x6xbf16>,
    %169 = vector.extract_strided_slice %110 {offsets = [0, 174], sizes = [64, 6], strides = [1, 1]} : vector<64x240xbf16> to vector<64x6xbf16>
    %c1856_126 = arith.constant 1856 : index
    %c6_127 = arith.constant 6 : index
    %170 = vector.load %arg13[%c1856_126, %c6_127] : memref<2560x12xbf16, #tpu.memory_space<vmem>>, vector<64x6xbf16>
    tpu.vector_store %arg13[%c1856_126, %c6_127], %169 {strides = array<i32>} : memref<2560x12xbf16, #tpu.memory_space<vmem>>, vector<64x6xbf16>,
    %171 = vector.extract_strided_slice %110 {offsets = [0, 180], sizes = [64, 6], strides = [1, 1]} : vector<64x240xbf16> to vector<64x6xbf16>
    %c1920_128 = arith.constant 1920 : index
    %c6_129 = arith.constant 6 : index
    %172 = vector.load %arg13[%c1920_128, %c6_129] : memref<2560x12xbf16, #tpu.memory_space<vmem>>, vector<64x6xbf16>
    tpu.vector_store %arg13[%c1920_128, %c6_129], %171 {strides = array<i32>} : memref<2560x12xbf16, #tpu.memory_space<vmem>>, vector<64x6xbf16>,
    %173 = vector.extract_strided_slice %110 {offsets = [0, 186], sizes = [64, 6], strides = [1, 1]} : vector<64x240xbf16> to vector<64x6xbf16>
    %c1984_130 = arith.constant 1984 : index
    %c6_131 = arith.constant 6 : index
    %174 = vector.load %arg13[%c1984_130, %c6_131] : memref<2560x12xbf16, #tpu.memory_space<vmem>>, vector<64x6xbf16>
    tpu.vector_store %arg13[%c1984_130, %c6_131], %173 {strides = array<i32>} : memref<2560x12xbf16, #tpu.memory_space<vmem>>, vector<64x6xbf16>,
    %175 = vector.extract_strided_slice %110 {offsets = [0, 192], sizes = [64, 6], strides = [1, 1]} : vector<64x240xbf16> to vector<64x6xbf16>
    %c2048_132 = arith.constant 2048 : index
    %c6_133 = arith.constant 6 : index
    %176 = vector.load %arg13[%c2048_132, %c6_133] : memref<2560x12xbf16, #tpu.memory_space<vmem>>, vector<64x6xbf16>
    tpu.vector_store %arg13[%c2048_132, %c6_133], %175 {strides = array<i32>} : memref<2560x12xbf16, #tpu.memory_space<vmem>>, vector<64x6xbf16>,
    %177 = vector.extract_strided_slice %110 {offsets = [0, 198], sizes = [64, 6], strides = [1, 1]} : vector<64x240xbf16> to vector<64x6xbf16>
    %c2112_134 = arith.constant 2112 : index
    %c6_135 = arith.constant 6 : index
    %178 = vector.load %arg13[%c2112_134, %c6_135] : memref<2560x12xbf16, #tpu.memory_space<vmem>>, vector<64x6xbf16>
    tpu.vector_store %arg13[%c2112_134, %c6_135], %177 {strides = array<i32>} : memref<2560x12xbf16, #tpu.memory_space<vmem>>, vector<64x6xbf16>,
    %179 = vector.extract_strided_slice %110 {offsets = [0, 204], sizes = [64, 6], strides = [1, 1]} : vector<64x240xbf16> to vector<64x6xbf16>
    %c2176_136 = arith.constant 2176 : index
    %c6_137 = arith.constant 6 : index
    %180 = vector.load %arg13[%c2176_136, %c6_137] : memref<2560x12xbf16, #tpu.memory_space<vmem>>, vector<64x6xbf16>
    tpu.vector_store %arg13[%c2176_136, %c6_137], %179 {strides = array<i32>} : memref<2560x12xbf16, #tpu.memory_space<vmem>>, vector<64x6xbf16>,
    %181 = vector.extract_strided_slice %110 {offsets = [0, 210], sizes = [64, 6], strides = [1, 1]} : vector<64x240xbf16> to vector<64x6xbf16>
    %c2240_138 = arith.constant 2240 : index
    %c6_139 = arith.constant 6 : index
    %182 = vector.load %arg13[%c2240_138, %c6_139] : memref<2560x12xbf16, #tpu.memory_space<vmem>>, vector<64x6xbf16>
    tpu.vector_store %arg13[%c2240_138, %c6_139], %181 {strides = array<i32>} : memref<2560x12xbf16, #tpu.memory_space<vmem>>, vector<64x6xbf16>,
    %183 = vector.extract_strided_slice %110 {offsets = [0, 216], sizes = [64, 6], strides = [1, 1]} : vector<64x240xbf16> to vector<64x6xbf16>
    %c2304_140 = arith.constant 2304 : index
    %c6_141 = arith.constant 6 : index
    %184 = vector.load %arg13[%c2304_140, %c6_141] : memref<2560x12xbf16, #tpu.memory_space<vmem>>, vector<64x6xbf16>
    tpu.vector_store %arg13[%c2304_140, %c6_141], %183 {strides = array<i32>} : memref<2560x12xbf16, #tpu.memory_space<vmem>>, vector<64x6xbf16>,
    %185 = vector.extract_strided_slice %110 {offsets = [0, 222], sizes = [64, 6], strides = [1, 1]} : vector<64x240xbf16> to vector<64x6xbf16>
    %c2368_142 = arith.constant 2368 : index
    %c6_143 = arith.constant 6 : index
    %186 = vector.load %arg13[%c2368_142, %c6_143] : memref<2560x12xbf16, #tpu.memory_space<vmem>>, vector<64x6xbf16>
    tpu.vector_store %arg13[%c2368_142, %c6_143], %185 {strides = array<i32>} : memref<2560x12xbf16, #tpu.memory_space<vmem>>, vector<64x6xbf16>,
    %187 = vector.extract_strided_slice %110 {offsets = [0, 228], sizes = [64, 6], strides = [1, 1]} : vector<64x240xbf16> to vector<64x6xbf16>
    %c2432_144 = arith.constant 2432 : index
    %c6_145 = arith.constant 6 : index
    %188 = vector.load %arg13[%c2432_144, %c6_145] : memref<2560x12xbf16, #tpu.memory_space<vmem>>, vector<64x6xbf16>
    tpu.vector_store %arg13[%c2432_144, %c6_145], %187 {strides = array<i32>} : memref<2560x12xbf16, #tpu.memory_space<vmem>>, vector<64x6xbf16>,
    %189 = vector.extract_strided_slice %110 {offsets = [0, 234], sizes = [64, 6], strides = [1, 1]} : vector<64x240xbf16> to vector<64x6xbf16>
    %c2496_146 = arith.constant 2496 : index
    %c6_147 = arith.constant 6 : index
    %190 = vector.load %arg13[%c2496_146, %c6_147] : memref<2560x12xbf16, #tpu.memory_space<vmem>>, vector<64x6xbf16>
    tpu.vector_store %arg13[%c2496_146, %c6_147], %189 {strides = array<i32>} : memref<2560x12xbf16, #tpu.memory_space<vmem>>, vector<64x6xbf16>,
    %c0_148 = arith.constant 0 : index
    %c0_149 = arith.constant 0 : index
    %191 = vector.load %arg5[%c0_148, %c0_149] : memref<40x2560xbf16, #tpu.memory_space<vmem>>, vector<40x2560xbf16>
    %c0_150 = arith.constant 0 : index
    %c0_151 = arith.constant 0 : index
    %192 = vector.load %arg13[%c0_150, %c0_151] : memref<2560x12xbf16, #tpu.memory_space<vmem>>, vector<2560x12xbf16>
    %cst_152 = arith.constant dense<0.000000e+00> : vector<40x12xf32>
    %193 = tpu.matmul %191, %192, %cst_152 {dimension_numbers = #tpu.dot_dimension_numbers<[1], [0], [0], [1], [0, 0, 1, 1], [], []>} : vector<40x2560xbf16>, vector<2560x12xbf16>, vector<40x12xf32> -> vector<40x12xf32>
    %c0_153 = arith.constant 0 : index
    %c0_154 = arith.constant 0 : index
    %194 = vector.load %arg6[%c0_153, %c0_154] : memref<40x1xf32, #tpu.memory_space<vmem>>, vector<40x1xf32>
    %195 = vector.broadcast %194 : vector<40x1xf32> to vector<40x12xf32>
    %196 = arith.mulf %193, %195 : vector<40x12xf32>
    %c0_155 = arith.constant 0 : index
    %c0_156 = arith.constant 0 : index
    %197 = vector.load %arg7[%c0_155, %c0_156] : memref<40x1xf32, #tpu.memory_space<vmem>>, vector<40x1xf32>
    %198 = vector.broadcast %197 : vector<40x1xf32> to vector<40x12xf32>
    %199 = arith.addf %196, %198 : vector<40x12xf32>
    %cst_157 = arith.constant 0.000000e+00 : f32
    %200 = vector.broadcast %cst_157 : f32 to vector<40x12xf32>
    %201 = arith.cmpf ogt, %199, %200 : vector<40x12xf32>
    %cst_158 = arith.constant 0.000000e+00 : f32
    %202 = vector.broadcast %cst_158 : f32 to vector<40x12xf32>
    %203 = arith.minimumf %199, %202 : vector<40x12xf32>
    %204 = math.exp %203 : vector<40x12xf32>
    %cst_159 = arith.constant 1.000000e+00 : f32
    %205 = vector.broadcast %cst_159 : f32 to vector<40x12xf32>
    %206 = arith.subf %204, %205 : vector<40x12xf32>
    %207 = arith.select %201, %199, %206 : vector<40x12xi1>, vector<40x12xf32>
    %c0_160 = arith.constant 0 : index
    %c0_161 = arith.constant 0 : index
    %208 = vector.load %arg8[%c0_160, %c0_161] : memref<40x40xf32, #tpu.memory_space<vmem>>, vector<40x40xf32>
    %cst_162 = arith.constant dense<0.000000e+00> : vector<40x12xf32>
    %209 = tpu.matmul %208, %207, %cst_162 {dimension_numbers = #tpu.dot_dimension_numbers<[1], [0], [0], [1], [0, 0, 1, 1], [], []>} : vector<40x40xf32>, vector<40x12xf32>, vector<40x12xf32> -> vector<40x12xf32>
    %c0_163 = arith.constant 0 : index
    %c0_164 = arith.constant 0 : index
    %210 = vector.load %arg9[%c0_163, %c0_164] : memref<40x1xf32, #tpu.memory_space<vmem>>, vector<40x1xf32>
    %211 = vector.broadcast %210 : vector<40x1xf32> to vector<40x12xf32>
    %212 = arith.addf %209, %211 : vector<40x12xf32>
    %213 = tpu.transpose %212, [1, 0] : vector<40x12xf32> -> vector<12x40xf32>
    %c0_165 = arith.constant 0 : index
    %c0_166 = arith.constant 0 : index
    %214 = vector.load %arg10[%c0_165, %c0_166] : memref<12x40xf32, #tpu.memory_space<vmem>>, vector<12x40xf32>
    tpu.vector_store %arg10[%c0_165, %c0_166], %213 {strides = array<i32>} : memref<12x40xf32, #tpu.memory_space<vmem>>, vector<12x40xf32>,
    return
  }
  func.func @transform_0(%arg0: i32) -> (i32, i32, i32) {
    %c0_i32 = arith.constant 0 : i32
    %c0_i32_0 = arith.constant 0 : i32
    %c0_i32_1 = arith.constant 0 : i32
    return %arg0, %c0_i32, %c0_i32_0 : i32, i32, i32
  }
  func.func @transform_1(%arg0: i32) -> (i32, i32) {
    %c0_i32 = arith.constant 0 : i32
    %c0_i32_0 = arith.constant 0 : i32
    %c0_i32_1 = arith.constant 0 : i32
    return %c0_i32, %c0_i32_0 : i32, i32
  }
  func.func @transform_2(%arg0: i32) -> (i32, i32) {
    %c0_i32 = arith.constant 0 : i32
    %c0_i32_0 = arith.constant 0 : i32
    %c0_i32_1 = arith.constant 0 : i32
    return %c0_i32, %c0_i32_0 : i32, i32
  }
  func.func @transform_3(%arg0: i32) -> (i32, i32) {
    %c0_i32 = arith.constant 0 : i32
    %c0_i32_0 = arith.constant 0 : i32
    %c0_i32_1 = arith.constant 0 : i32
    return %c0_i32, %c0_i32_0 : i32, i32
  }
  func.func @transform_4(%arg0: i32) -> (i32, i32) {
    %c0_i32 = arith.constant 0 : i32
    %c0_i32_0 = arith.constant 0 : i32
    %c0_i32_1 = arith.constant 0 : i32
    return %c0_i32, %c0_i32_0 : i32, i32
  }
  func.func @transform_5(%arg0: i32) -> (i32, i32) {
    %c0_i32 = arith.constant 0 : i32
    %c0_i32_0 = arith.constant 0 : i32
    %c0_i32_1 = arith.constant 0 : i32
    return %c0_i32, %c0_i32_0 : i32, i32
  }
  func.func @transform_6(%arg0: i32) -> (i32, i32) {
    %c0_i32 = arith.constant 0 : i32
    %c0_i32_0 = arith.constant 0 : i32
    %c0_i32_1 = arith.constant 0 : i32
    return %c0_i32, %c0_i32_0 : i32, i32
  }
  func.func @transform_7(%arg0: i32) -> (i32, i32) {
    %c0_i32 = arith.constant 0 : i32
    %c0_i32_0 = arith.constant 0 : i32
    %c0_i32_1 = arith.constant 0 : i32
    return %c0_i32, %c0_i32_0 : i32, i32
  }
  func.func @transform_8(%arg0: i32) -> (i32, i32) {
    %c0_i32 = arith.constant 0 : i32
    %c0_i32_0 = arith.constant 0 : i32
    %c0_i32_1 = arith.constant 0 : i32
    return %c0_i32, %c0_i32_0 : i32, i32
  }
  func.func @transform_9(%arg0: i32) -> (i32, i32) {
    %c0_i32 = arith.constant 0 : i32
    %c0_i32_0 = arith.constant 0 : i32
    return %arg0, %c0_i32 : i32, i32
  }
}

</mosaic_0001>

<llo_original>
// kernel: patch_embedding_forward.1
$region0: #{patch_embedding_forward.1}
  #allocation0 [shape = 'u32[]', space=smem, size = 0x4, offset = 0x4, fixed_abs, tag = 'smem constant byte address 0x4 - core index']
  #allocation1 [shape = 'u32[144,128]{1,0:T(1,128)}', space=vmem, size = 0x12000, scoped, tag = 'internal scratch']
  #allocation2 [shape = 'bf16[128,100]{1,0:T(16,128)(2,1)}', space=vmem, size = 0x8000, scoped, tag = 'scratch operand']
  #allocation3 [shape = 'bf16[128,240]{1,0:T(16,128)(2,1)}', space=vmem, size = 0x10000, scoped, tag = 'scratch operand']
  #allocation4 [shape = 'bf16[2560,12]{1,0:T(16,128)(2,1)}', space=vmem, size = 0xa0000, scoped, tag = 'scratch operand']
  %s0 = inlined_call_operand.vmem [shape: f32[2,63,100], index: 0, kind: input, shape index: {}]
  %s1 = inlined_call_operand.vmem [shape: bf16[100,240], index: 1, kind: input, shape index: {}]
  %s2 = inlined_call_operand.vmem [shape: f32[1,240], index: 2, kind: input, shape index: {}]
  %s3 = inlined_call_operand.vmem [shape: f32[1,240], index: 3, kind: input, shape index: {}]
  %s4 = inlined_call_operand.vmem [shape: bf16[40,2560], index: 4, kind: input, shape index: {}]
  %s5 = inlined_call_operand.vmem [shape: f32[40,1], index: 5, kind: input, shape index: {}]
  %s6 = inlined_call_operand.vmem [shape: f32[40,1], index: 6, kind: input, shape index: {}]
  %s7 = inlined_call_operand.vmem [shape: f32[40,40], index: 7, kind: input, shape index: {}]
  %s8 = inlined_call_operand.vmem [shape: f32[40,1], index: 8, kind: input, shape index: {}]
  %s9 = inlined_call_operand.vmem [shape: f32[12,40], index: 9, kind: output, shape index: {}]
  %s10 = sld [smem:[#allocation0]]
  $region46: #{patch_embedding_forward.1} parent=0
    _
  %s12 = ssub.s32 1, %s10
  %s13 = scalar_select 0, %s12, %s10
  // Predicated region
  $region2: #{patch_embedding_forward.1} parent=0 // pred_check
    _
  $region3: #{patch_embedding_forward.1} parent=0 // pred_check_branch
    %15 = sbr.rel (0) target = $region5
  $region4: #{patch_embedding_forward.1} parent=0 // pred_region
    _
  $region5: #{patch_embedding_forward.1} parent=0 // pred_fallthru
    _
  // Predicated region
  $region6: #{patch_embedding_forward.1} parent=0 // pred_check
    _
  $region7: #{patch_embedding_forward.1} parent=0 // pred_check_branch
    %17 = sbr.rel (0) target = $region9
  $region8: #{patch_embedding_forward.1} parent=0 // pred_region
    _
  $region9: #{patch_embedding_forward.1} parent=0 // pred_fallthru
    _
  // Predicated region
  $region10: #{patch_embedding_forward.1} parent=0 // pred_check
    _
  $region11: #{patch_embedding_forward.1} parent=0 // pred_check_branch
    %19 = sbr.rel (0) target = $region13
  $region12: #{patch_embedding_forward.1} parent=0 // pred_region
    _
  $region13: #{patch_embedding_forward.1} parent=0 // pred_fallthru
    _
  // Predicated region
  $region14: #{patch_embedding_forward.1} parent=0 // pred_check
    _
  $region15: #{patch_embedding_forward.1} parent=0 // pred_check_branch
    %21 = sbr.rel (0) target = $region17
  $region16: #{patch_embedding_forward.1} parent=0 // pred_region
    _
  $region17: #{patch_embedding_forward.1} parent=0 // pred_fallthru
    _
  // Predicated region
  $region18: #{patch_embedding_forward.1} parent=0 // pred_check
    _
  $region19: #{patch_embedding_forward.1} parent=0 // pred_check_branch
    %23 = sbr.rel (0) target = $region21
  $region20: #{patch_embedding_forward.1} parent=0 // pred_region
    _
  $region21: #{patch_embedding_forward.1} parent=0 // pred_fallthru
    _
  // Predicated region
  $region22: #{patch_embedding_forward.1} parent=0 // pred_check
    _
  $region23: #{patch_embedding_forward.1} parent=0 // pred_check_branch
    %25 = sbr.rel (0) target = $region25
  $region24: #{patch_embedding_forward.1} parent=0 // pred_region
    _
  $region25: #{patch_embedding_forward.1} parent=0 // pred_fallthru
    _
  // Predicated region
  $region26: #{patch_embedding_forward.1} parent=0 // pred_check
    _
  $region27: #{patch_embedding_forward.1} parent=0 // pred_check_branch
    %27 = sbr.rel (0) target = $region29
  $region28: #{patch_embedding_forward.1} parent=0 // pred_region
    _
  $region29: #{patch_embedding_forward.1} parent=0 // pred_fallthru
    _
  // Predicated region
  $region30: #{patch_embedding_forward.1} parent=0 // pred_check
    _
  $region31: #{patch_embedding_forward.1} parent=0 // pred_check_branch
    %29 = sbr.rel (0) target = $region33
  $region32: #{patch_embedding_forward.1} parent=0 // pred_region
    _
  $region33: #{patch_embedding_forward.1} parent=0 // pred_fallthru
    _
  // Predicated region
  $region34: #{patch_embedding_forward.1} parent=0 // pred_check
    _
  $region35: #{patch_embedding_forward.1} parent=0 // pred_check_branch
    %31 = sbr.rel (0) target = $region37
  $region36: #{patch_embedding_forward.1} parent=0 // pred_region
    _
  $region37: #{patch_embedding_forward.1} parent=0 // pred_fallthru
    _
  %vm33 = vcmask 818176
  %34 = vst.msk [vmem:[#allocation2] sm:$0xff] %vm33, 0
  %35 = vst.msk [vmem:[#allocation2 + $0x8] sm:$0xff] %vm33, 0
  %36 = vst.msk [vmem:[#allocation2 + $0x10] sm:$0xff] %vm33, 0
  %37 = vst.msk [vmem:[#allocation2 + $0x18] sm:$0xff] %vm33, 0
  %38 = vst.msk [vmem:[#allocation2 + $0x20] sm:$0xff] %vm33, 0
  %39 = vst.msk [vmem:[#allocation2 + $0x28] sm:$0xff] %vm33, 0
  %40 = vst.msk [vmem:[#allocation2 + $0x30] sm:$0xff] %vm33, 0
  %41 = vst.msk [vmem:[#allocation2 + $0x38] sm:$0xff] %vm33, 0
  %v42 = vld [vmem:[%s0] sm:$0xff]
  %v43 = vld [vmem:[%s0 + $0x8] sm:$0xff]
  %v44 = vld [vmem:[%s0 + $0x10] sm:$0xff]
  %v45 = vld [vmem:[%s0 + $0x18] sm:$0xff]
  %v46 = vld [vmem:[%s0 + $0x20] sm:$0xff]
  %v47 = vld [vmem:[%s0 + $0x28] sm:$0xff]
  %v48 = vld [vmem:[%s0 + $0x30] sm:$0xff]
  %v49 = vld [vmem:[%s0 + $0x38] sm:$0x7f]
  %v50 = vpack.c.bf16 %v43, %v42
  %v51 = vpack.c.bf16 %v45, %v44
  %v52 = vpack.c.bf16 %v47, %v46
  %v53 = vpack.c.bf16 %v49, %v48
  %54 = vst.msk [vmem:[#allocation2] sm:$0xff] %vm33, %v50
  %55 = vst.msk [vmem:[#allocation2 + $0x8] sm:$0xff] %vm33, %v51
  %56 = vst.msk [vmem:[#allocation2 + $0x10] sm:$0xff] %vm33, %v52
  %vm57 = vcmask 818176
  %vm58 = vsmask.f32 7424
  %vm59 = vmand %vm57, %vm58
  %v60 = vld [vmem:[#allocation2 + $0x18] sm:$0xff]
  %v61 = vsel %vm59, %v53, %v60
  %62 = vst [vmem:[#allocation2 + $0x18] sm:$0xff] %v61
  %s63 = scalar_lea.vmem %s0, 64
  %v64 = vld [vmem:[%s63] sm:$0xff]
  %v65 = vld [vmem:[%s63 + $0x8] sm:$0xff]
  %v66 = vld [vmem:[%s63 + $0x10] sm:$0xff]
  %v67 = vld [vmem:[%s63 + $0x18] sm:$0xff]
  %v68 = vld [vmem:[%s63 + $0x20] sm:$0xff]
  %v69 = vld [vmem:[%s63 + $0x28] sm:$0xff]
  %v70 = vld [vmem:[%s63 + $0x30] sm:$0xff]
  %v71 = vld [vmem:[%s63 + $0x38] sm:$0x7f]
  %v72 = vpack.c.bf16 %v65, %v64
  %v73 = vpack.c.bf16 %v67, %v66
  %v74 = vpack.c.bf16 %v69, %v68
  %v75 = vpack.c.bf16 %v71, %v70
  %76 = vst.msk [vmem:[#allocation2 + $0x20] sm:$0xff] %vm33, %v72
  %77 = vst.msk [vmem:[#allocation2 + $0x28] sm:$0xff] %vm33, %v73
  %78 = vst.msk [vmem:[#allocation2 + $0x30] sm:$0xff] %vm33, %v74
  %v79 = vld [vmem:[#allocation2 + $0x38] sm:$0xff]
  %v80 = vsel %vm59, %v75, %v79
  %81 = vst [vmem:[#allocation2 + $0x38] sm:$0xff] %v80
  %v82 = vld [vmem:[#allocation2] sm:$0xff]
  %v83 = vld [vmem:[#allocation2 + $0x8] sm:$0xff]
  %v84 = vld [vmem:[#allocation2 + $0x10] sm:$0xff]
  %v85 = vld [vmem:[#allocation2 + $0x18] sm:$0xff]
  %v86 = vld [vmem:[#allocation2 + $0x20] sm:$0xff]
  %v87 = vld [vmem:[#allocation2 + $0x28] sm:$0xff]
  %v88 = vld [vmem:[#allocation2 + $0x30] sm:$0xff]
  %v89 = vld [vmem:[#allocation2 + $0x38] sm:$0xff]
  %v90 = vld [vmem:[%s1] sm:$0xff]
  %v91 = vld [vmem:[%s1 + $0x8] sm:$0xff]
  %v92 = vld [vmem:[%s1 + $0x10] sm:$0xff]
  %v93 = vld [vmem:[%s1 + $0x18] sm:$0xff]
  %v94 = vld [vmem:[%s1 + $0x20] sm:$0xff]
  %v95 = vld [vmem:[%s1 + $0x28] sm:$0xff]
  %v96 = vld [vmem:[%s1 + $0x30] sm:$0xff]
  %v97 = vld [vmem:[%s1 + $0x38] sm:$0xff]
  %v98 = vld [vmem:[%s1 + $0x40] sm:$0xff]
  %v99 = vld [vmem:[%s1 + $0x48] sm:$0xff]
  %v100 = vld [vmem:[%s1 + $0x50] sm:$0xff]
  %v101 = vld [vmem:[%s1 + $0x58] sm:$0xff]
  %v102 = vld [vmem:[%s1 + $0x60] sm:$0x33]
  %v116 = vunpack.c.l.b16 %v90
  %v117 = vunpack.c.h.b16 %v90
  %v118 = vunpack.c.l.b16 %v91
  %v119 = vunpack.c.h.b16 %v91
  %v120 = vunpack.c.l.b16 %v92
  %v121 = vunpack.c.h.b16 %v92
  %v122 = vunpack.c.l.b16 %v93
  %v123 = vunpack.c.h.b16 %v93
  %v124 = vunpack.c.l.b16 %v94
  %v125 = vunpack.c.h.b16 %v94
  %v126 = vunpack.c.l.b16 %v95
  %v127 = vunpack.c.h.b16 %v95
  %v128 = vunpack.c.l.b16 %v96
  %v129 = vunpack.c.h.b16 %v96
  %v130 = vunpack.c.l.b16 %v97
  %v131 = vunpack.c.h.b16 %v97
  %v132 = vunpack.c.l.b16 %v98
  %v133 = vunpack.c.h.b16 %v98
  %v134 = vunpack.c.l.b16 %v99
  %v135 = vunpack.c.h.b16 %v99
  %v136 = vunpack.c.l.b16 %v100
  %v137 = vunpack.c.h.b16 %v100
  %v138 = vunpack.c.l.b16 %v101
  %v139 = vunpack.c.h.b16 %v101
  %v140 = vunpack.c.l.b16 %v102
  %v141 = vunpack.c.h.b16 %v102
  %v142 = vpack.c.b16 %v118, %v116
  %v143 = vpack.c.b16 %v119, %v117
  %v144 = vpack.c.b16 %v122, %v120
  %v145 = vpack.c.b16 %v123, %v121
  %v146 = vpack.c.b16 %v126, %v124
  %v147 = vpack.c.b16 %v127, %v125
  %v148 = vpack.c.b16 %v130, %v128
  %v149 = vpack.c.b16 %v131, %v129
  %v150 = vpack.c.b16 %v134, %v132
  %v151 = vpack.c.b16 %v135, %v133
  %v152 = vpack.c.b16 %v138, %v136
  %v153 = vpack.c.b16 %v139, %v137
  %v154 = vpack.c.b16 %v140, %v140
  %v155 = vpack.c.b16 %v141, %v141
  %v169 = vsel %vm33, %v82, 0
  %v172 = vsel %vm33, %v83, 0
  %v175 = vsel %vm33, %v84, 0
  %v178 = vsel %vm33, %v85, 0
  %v181 = vsel %vm33, %v86, 0
  %v184 = vsel %vm33, %v87, 0
  %v187 = vsel %vm33, %v88, 0
  %v190 = vsel %vm33, %v89, 0
  %vm192 = vcmask 1041408
  %v194 = vsel %vm192, %v154, 0
  %v197 = vsel %vm192, %v155, 0
  %199 = vmatprep.subr.bf16.mxu0 %v143
  %200 = vmatpush1.bf16.msra.mxu0 %v142
  %201 = vmatprep.subr.bf16.mxu0 %v145
  %202 = vmatpush1.bf16.msra.mxu0 %v144
  %203 = vmatprep.subr.bf16.mxu0 %v147
  %204 = vmatpush1.bf16.msra.mxu0 %v146
  %205 = vmatprep.subr.bf16.mxu0 %v149
  %206 = vmatpush1.bf16.msra.mxu0 %v148
  %207 = vmatprep.subr.bf16.mxu0 %v151
  %208 = vmatpush1.bf16.msra.mxu0 %v150
  %209 = vmatprep.subr.bf16.mxu0 %v153
  %210 = vmatpush1.bf16.msra.mxu0 %v152
  %211 = vmatprep.subr.bf16.mxu0 %v197
  %212 = vmatpush1.bf16.msra.mxu0 %v194
  %213 = vmatprep.subr.bf16.mxu0 0
  %214 = vmatpush1.bf16.msra.mxu0 0
  %215 = vmatprep.subr.bf16.mxu0 0
  %216 = vmatpush1.bf16.msra.mxu0 0
  %217 = vmatprep.subr.bf16.mxu0 0
  %218 = vmatpush1.bf16.msra.mxu0 0
  %219 = vmatprep.subr.bf16.mxu0 0
  %220 = vmatpush1.bf16.msra.mxu0 0
  %221 = vmatprep.subr.bf16.mxu0 0
  %222 = vmatpush1.bf16.msra.mxu0 0
  %223 = vmatprep.subr.bf16.mxu0 0
  %224 = vmatpush1.bf16.msra.mxu0 0
  %225 = vmatprep.subr.bf16.mxu0 0
  %226 = vmatpush1.bf16.msra.mxu0 0
  %227 = vmatprep.subr.bf16.mxu0 0
  %228 = vmatpush1.bf16.msra.mxu0 0
  %229 = vmatprep.subr.bf16.mxu0 0
  %230 = vmatpush1.bf16.msra.mxu0 0
  %231 = vmatprep.mubr.bf16.mxu0 0
  %232 = vmatmul.mubr.bf16.gmra.mrb[0].mxu0 %v169
  %v233 = vpop.f32.mrb[0].mxu0
  %v234 = vadd.f32 0.0, %v233
  %v235 = vpop.f32.mrb[0].mxu0
  %v236 = vadd.f32 0.0, %v235
  %v237 = vpop.f32.mrb[0].mxu0
  %v238 = vadd.f32 0.0, %v237
  %v239 = vpop.f32.mrb[0].mxu0
  %v240 = vadd.f32 0.0, %v239
  %241 = vmatprep.mubr.bf16.mxu0 0
  %242 = vmatmul.mubr.bf16.gmra.mrb[0].mxu0 %v172
  %v243 = vpop.f32.mrb[0].mxu0
  %v244 = vadd.f32 0.0, %v243
  %v245 = vpop.f32.mrb[0].mxu0
  %v246 = vadd.f32 0.0, %v245
  %v247 = vpop.f32.mrb[0].mxu0
  %v248 = vadd.f32 0.0, %v247
  %v249 = vpop.f32.mrb[0].mxu0
  %v250 = vadd.f32 0.0, %v249
  %251 = vmatprep.mubr.bf16.mxu0 0
  %252 = vmatmul.mubr.bf16.gmra.mrb[0].mxu0 %v175
  %v253 = vpop.f32.mrb[0].mxu0
  %v254 = vadd.f32 0.0, %v253
  %v255 = vpop.f32.mrb[0].mxu0
  %v256 = vadd.f32 0.0, %v255
  %v257 = vpop.f32.mrb[0].mxu0
  %v258 = vadd.f32 0.0, %v257
  %v259 = vpop.f32.mrb[0].mxu0
  %v260 = vadd.f32 0.0, %v259
  %261 = vmatprep.mubr.bf16.mxu0 0
  %262 = vmatmul.mubr.bf16.gmra.mrb[0].mxu0 %v178
  %v263 = vpop.f32.mrb[0].mxu0
  %v264 = vadd.f32 0.0, %v263
  %v265 = vpop.f32.mrb[0].mxu0
  %v266 = vadd.f32 0.0, %v265
  %v267 = vpop.f32.mrb[0].mxu0
  %v268 = vadd.f32 0.0, %v267
  %v269 = vpop.f32.mrb[0].mxu0
  %v270 = vadd.f32 0.0, %v269
  %271 = vmatprep.mubr.bf16.mxu0 0
  %272 = vmatmul.mubr.bf16.gmra.mrb[0].mxu0 %v181
  %v273 = vpop.f32.mrb[0].mxu0
  %v274 = vadd.f32 0.0, %v273
  %v275 = vpop.f32.mrb[0].mxu0
  %v276 = vadd.f32 0.0, %v275
  %v277 = vpop.f32.mrb[0].mxu0
  %v278 = vadd.f32 0.0, %v277
  %v279 = vpop.f32.mrb[0].mxu0
  %v280 = vadd.f32 0.0, %v279
  %281 = vmatprep.mubr.bf16.mxu0 0
  %282 = vmatmul.mubr.bf16.gmra.mrb[0].mxu0 %v184
  %v283 = vpop.f32.mrb[0].mxu0
  %v284 = vadd.f32 0.0, %v283
  %v285 = vpop.f32.mrb[0].mxu0
  %v286 = vadd.f32 0.0, %v285
  %v287 = vpop.f32.mrb[0].mxu0
  %v288 = vadd.f32 0.0, %v287
  %v289 = vpop.f32.mrb[0].mxu0
  %v290 = vadd.f32 0.0, %v289
  %291 = vmatprep.mubr.bf16.mxu0 0
  %292 = vmatmul.mubr.bf16.gmra.mrb[0].mxu0 %v187
  %v293 = vpop.f32.mrb[0].mxu0
  %v294 = vadd.f32 0.0, %v293
  %v295 = vpop.f32.mrb[0].mxu0
  %v296 = vadd.f32 0.0, %v295
  %v297 = vpop.f32.mrb[0].mxu0
  %v298 = vadd.f32 0.0, %v297
  %v299 = vpop.f32.mrb[0].mxu0
  %v300 = vadd.f32 0.0, %v299
  %301 = vmatprep.mubr.bf16.mxu0 0
  %302 = vmatmul.mubr.bf16.gmra.mrb[0].mxu0 %v190
  %v303 = vpop.f32.mrb[0].mxu0
  %v304 = vadd.f32 0.0, %v303
  %v305 = vpop.f32.mrb[0].mxu0
  %v306 = vadd.f32 0.0, %v305
  %v307 = vpop.f32.mrb[0].mxu0
  %v308 = vadd.f32 0.0, %v307
  %v309 = vpop.f32.mrb[0].mxu0
  %v310 = vadd.f32 0.0, %v309
  %311 = vdwg.mxu0
  %v312 = vld [vmem:[%s2] sm:$0x3]
  %v314 = vlaneseq
  %v315 = vshrl.u32 %v314, 7
  %v316 = vsub.s32 0, %v315
  %v317 = vrot.slane %v312, %v316
  %v318 = vlaneseq
  %v319 = vshrl.u32 %v318, 7
  %v320 = vsub.s32 1, %v319
  %v321 = vrot.slane %v312, %v320
  %v324 = vmul.f32 %v234, %v317
  %v325 = vmul.f32 %v236, %v321
  %v326 = vmul.f32 %v238, %v317
  %v327 = vmul.f32 %v240, %v321
  %v328 = vmul.f32 %v244, %v317
  %v329 = vmul.f32 %v246, %v321
  %v330 = vmul.f32 %v248, %v317
  %v331 = vmul.f32 %v250, %v321
  %v332 = vmul.f32 %v254, %v317
  %v333 = vmul.f32 %v256, %v321
  %v334 = vmul.f32 %v258, %v317
  %v335 = vmul.f32 %v260, %v321
  %v336 = vmul.f32 %v264, %v317
  %v337 = vmul.f32 %v266, %v321
  %v338 = vmul.f32 %v268, %v317
  %v339 = vmul.f32 %v270, %v321
  %v340 = vmul.f32 %v274, %v317
  %v341 = vmul.f32 %v276, %v321
  %v342 = vmul.f32 %v278, %v317
  %v343 = vmul.f32 %v280, %v321
  %v344 = vmul.f32 %v284, %v317
  %v345 = vmul.f32 %v286, %v321
  %v346 = vmul.f32 %v288, %v317
  %v347 = vmul.f32 %v290, %v321
  %v348 = vmul.f32 %v294, %v317
  %v349 = vmul.f32 %v296, %v321
  %v350 = vmul.f32 %v298, %v317
  %v351 = vmul.f32 %v300, %v321
  %v352 = vmul.f32 %v304, %v317
  %v353 = vmul.f32 %v306, %v321
  %v354 = vmul.f32 %v308, %v317
  %v355 = vmul.f32 %v310, %v321
  %v356 = vld [vmem:[%s3] sm:$0x3]
  %v358 = vlaneseq
  %v359 = vshrl.u32 %v358, 7
  %v360 = vsub.s32 0, %v359
  %v361 = vrot.slane %v356, %v360
  %v362 = vlaneseq
  %v363 = vshrl.u32 %v362, 7
  %v364 = vsub.s32 1, %v363
  %v365 = vrot.slane %v356, %v364
  %v368 = vadd.f32 %v324, %v361
  %v369 = vadd.f32 %v325, %v365
  %v370 = vadd.f32 %v326, %v361
  %v371 = vadd.f32 %v327, %v365
  %v372 = vadd.f32 %v328, %v361
  %v373 = vadd.f32 %v329, %v365
  %v374 = vadd.f32 %v330, %v361
  %v375 = vadd.f32 %v331, %v365
  %v376 = vadd.f32 %v332, %v361
  %v377 = vadd.f32 %v333, %v365
  %v378 = vadd.f32 %v334, %v361
  %v379 = vadd.f32 %v335, %v365
  %v380 = vadd.f32 %v336, %v361
  %v381 = vadd.f32 %v337, %v365
  %v382 = vadd.f32 %v338, %v361
  %v383 = vadd.f32 %v339, %v365
  %v384 = vadd.f32 %v340, %v361
  %v385 = vadd.f32 %v341, %v365
  %v386 = vadd.f32 %v342, %v361
  %v387 = vadd.f32 %v343, %v365
  %v388 = vadd.f32 %v344, %v361
  %v389 = vadd.f32 %v345, %v365
  %v390 = vadd.f32 %v346, %v361
  %v391 = vadd.f32 %v347, %v365
  %v392 = vadd.f32 %v348, %v361
  %v393 = vadd.f32 %v349, %v365
  %v394 = vadd.f32 %v350, %v361
  %v395 = vadd.f32 %v351, %v365
  %v396 = vadd.f32 %v352, %v361
  %v397 = vadd.f32 %v353, %v365
  %v398 = vadd.f32 %v354, %v361
  %v399 = vadd.f32 %v355, %v365
  %vm400 = vcmp.gt.f32.partialorder %v368, 0.0
  %vm401 = vcmp.gt.f32.partialorder %v369, 0.0
  %vm402 = vcmp.gt.f32.partialorder %v370, 0.0
  %vm403 = vcmp.gt.f32.partialorder %v371, 0.0
  %vm404 = vcmp.gt.f32.partialorder %v372, 0.0
  %vm405 = vcmp.gt.f32.partialorder %v373, 0.0
  %vm406 = vcmp.gt.f32.partialorder %v374, 0.0
  %vm407 = vcmp.gt.f32.partialorder %v375, 0.0
  %vm408 = vcmp.gt.f32.partialorder %v376, 0.0
  %vm409 = vcmp.gt.f32.partialorder %v377, 0.0
  %vm410 = vcmp.gt.f32.partialorder %v378, 0.0
  %vm411 = vcmp.gt.f32.partialorder %v379, 0.0
  %vm412 = vcmp.gt.f32.partialorder %v380, 0.0
  %vm413 = vcmp.gt.f32.partialorder %v381, 0.0
  %vm414 = vcmp.gt.f32.partialorder %v382, 0.0
  %vm415 = vcmp.gt.f32.partialorder %v383, 0.0
  %vm416 = vcmp.gt.f32.partialorder %v384, 0.0
  %vm417 = vcmp.gt.f32.partialorder %v385, 0.0
  %vm418 = vcmp.gt.f32.partialorder %v386, 0.0
  %vm419 = vcmp.gt.f32.partialorder %v387, 0.0
  %vm420 = vcmp.gt.f32.partialorder %v388, 0.0
  %vm421 = vcmp.gt.f32.partialorder %v389, 0.0
  %vm422 = vcmp.gt.f32.partialorder %v390, 0.0
  %vm423 = vcmp.gt.f32.partialorder %v391, 0.0
  %vm424 = vcmp.gt.f32.partialorder %v392, 0.0
  %vm425 = vcmp.gt.f32.partialorder %v393, 0.0
  %vm426 = vcmp.gt.f32.partialorder %v394, 0.0
  %vm427 = vcmp.gt.f32.partialorder %v395, 0.0
  %vm428 = vcmp.gt.f32.partialorder %v396, 0.0
  %vm429 = vcmp.gt.f32.partialorder %v397, 0.0
  %vm430 = vcmp.gt.f32.partialorder %v398, 0.0
  %vm431 = vcmp.gt.f32.partialorder %v399, 0.0
  %v432 = vmin.f32 %v368, 0.0
  %v433 = vmin.f32 %v369, 0.0
  %v434 = vmin.f32 %v370, 0.0
  %v435 = vmin.f32 %v371, 0.0
  %v436 = vmin.f32 %v372, 0.0
  %v437 = vmin.f32 %v373, 0.0
  %v438 = vmin.f32 %v374, 0.0
  %v439 = vmin.f32 %v375, 0.0
  %v440 = vmin.f32 %v376, 0.0
  %v441 = vmin.f32 %v377, 0.0
  %v442 = vmin.f32 %v378, 0.0
  %v443 = vmin.f32 %v379, 0.0
  %v444 = vmin.f32 %v380, 0.0
  %v445 = vmin.f32 %v381, 0.0
  %v446 = vmin.f32 %v382, 0.0
  %v447 = vmin.f32 %v383, 0.0
  %v448 = vmin.f32 %v384, 0.0
  %v449 = vmin.f32 %v385, 0.0
  %v450 = vmin.f32 %v386, 0.0
  %v451 = vmin.f32 %v387, 0.0
  %v452 = vmin.f32 %v388, 0.0
  %v453 = vmin.f32 %v389, 0.0
  %v454 = vmin.f32 %v390, 0.0
  %v455 = vmin.f32 %v391, 0.0
  %v456 = vmin.f32 %v392, 0.0
  %v457 = vmin.f32 %v393, 0.0
  %v458 = vmin.f32 %v394, 0.0
  %v459 = vmin.f32 %v395, 0.0
  %v460 = vmin.f32 %v396, 0.0
  %v461 = vmin.f32 %v397, 0.0
  %v462 = vmin.f32 %v398, 0.0
  %v463 = vmin.f32 %v399, 0.0
  %v464 = vmul.f32 %v432, 1.442695
  %v465 = vpow.pop %v464
  %v466 = vmul.f32 %v433, 1.442695
  %v467 = vpow.pop %v466
  %v468 = vmul.f32 %v434, 1.442695
  %v469 = vpow.pop %v468
  %v470 = vmul.f32 %v435, 1.442695
  %v471 = vpow.pop %v470
  %v472 = vmul.f32 %v436, 1.442695
  %v473 = vpow.pop %v472
  %v474 = vmul.f32 %v437, 1.442695
  %v475 = vpow.pop %v474
  %v476 = vmul.f32 %v438, 1.442695
  %v477 = vpow.pop %v476
  %v478 = vmul.f32 %v439, 1.442695
  %v479 = vpow.pop %v478
  %v480 = vmul.f32 %v440, 1.442695
  %v481 = vpow.pop %v480
  %v482 = vmul.f32 %v441, 1.442695
  %v483 = vpow.pop %v482
  %v484 = vmul.f32 %v442, 1.442695
  %v485 = vpow.pop %v484
  %v486 = vmul.f32 %v443, 1.442695
  %v487 = vpow.pop %v486
  %v488 = vmul.f32 %v444, 1.442695
  %v489 = vpow.pop %v488
  %v490 = vmul.f32 %v445, 1.442695
  %v491 = vpow.pop %v490
  %v492 = vmul.f32 %v446, 1.442695
  %v493 = vpow.pop %v492
  %v494 = vmul.f32 %v447, 1.442695
  %v495 = vpow.pop %v494
  %v496 = vmul.f32 %v448, 1.442695
  %v497 = vpow.pop %v496
  %v498 = vmul.f32 %v449, 1.442695
  %v499 = vpow.pop %v498
  %v500 = vmul.f32 %v450, 1.442695
  %v501 = vpow.pop %v500
  %v502 = vmul.f32 %v451, 1.442695
  %v503 = vpow.pop %v502
  %v504 = vmul.f32 %v452, 1.442695
  %v505 = vpow.pop %v504
  %v506 = vmul.f32 %v453, 1.442695
  %v507 = vpow.pop %v506
  %v508 = vmul.f32 %v454, 1.442695
  %v509 = vpow.pop %v508
  %v510 = vmul.f32 %v455, 1.442695
  %v511 = vpow.pop %v510
  %v512 = vmul.f32 %v456, 1.442695
  %v513 = vpow.pop %v512
  %v514 = vmul.f32 %v457, 1.442695
  %v515 = vpow.pop %v514
  %v516 = vmul.f32 %v458, 1.442695
  %v517 = vpow.pop %v516
  %v518 = vmul.f32 %v459, 1.442695
  %v519 = vpow.pop %v518
  %v520 = vmul.f32 %v460, 1.442695
  %v521 = vpow.pop %v520
  %v522 = vmul.f32 %v461, 1.442695
  %v523 = vpow.pop %v522
  %v524 = vmul.f32 %v462, 1.442695
  %v525 = vpow.pop %v524
  %v526 = vmul.f32 %v463, 1.442695
  %v527 = vpow.pop %v526
  %v528 = vsub.f32 %v465, 1.0
  %v529 = vsub.f32 %v467, 1.0
  %v530 = vsub.f32 %v469, 1.0
  %v531 = vsub.f32 %v471, 1.0
  %v532 = vsub.f32 %v473, 1.0
  %v533 = vsub.f32 %v475, 1.0
  %v534 = vsub.f32 %v477, 1.0
  %v535 = vsub.f32 %v479, 1.0
  %v536 = vsub.f32 %v481, 1.0
  %v537 = vsub.f32 %v483, 1.0
  %v538 = vsub.f32 %v485, 1.0
  %v539 = vsub.f32 %v487, 1.0
  %v540 = vsub.f32 %v489, 1.0
  %v541 = vsub.f32 %v491, 1.0
  %v542 = vsub.f32 %v493, 1.0
  %v543 = vsub.f32 %v495, 1.0
  %v544 = vsub.f32 %v497, 1.0
  %v545 = vsub.f32 %v499, 1.0
  %v546 = vsub.f32 %v501, 1.0
  %v547 = vsub.f32 %v503, 1.0
  %v548 = vsub.f32 %v505, 1.0
  %v549 = vsub.f32 %v507, 1.0
  %v550 = vsub.f32 %v509, 1.0
  %v551 = vsub.f32 %v511, 1.0
  %v552 = vsub.f32 %v513, 1.0
  %v553 = vsub.f32 %v515, 1.0
  %v554 = vsub.f32 %v517, 1.0
  %v555 = vsub.f32 %v519, 1.0
  %v556 = vsub.f32 %v521, 1.0
  %v557 = vsub.f32 %v523, 1.0
  %v558 = vsub.f32 %v525, 1.0
  %v559 = vsub.f32 %v527, 1.0
  %v560 = vsel %vm400, %v368, %v528
  %v561 = vsel %vm401, %v369, %v529
  %v562 = vsel %vm402, %v370, %v530
  %v563 = vsel %vm403, %v371, %v531
  %v564 = vsel %vm404, %v372, %v532
  %v565 = vsel %vm405, %v373, %v533
  %v566 = vsel %vm406, %v374, %v534
  %v567 = vsel %vm407, %v375, %v535
  %v568 = vsel %vm408, %v376, %v536
  %v569 = vsel %vm409, %v377, %v537
  %v570 = vsel %vm410, %v378, %v538
  %v571 = vsel %vm411, %v379, %v539
  %v572 = vsel %vm412, %v380, %v540
  %v573 = vsel %vm413, %v381, %v541
  %v574 = vsel %vm414, %v382, %v542
  %v575 = vsel %vm415, %v383, %v543
  %v576 = vsel %vm416, %v384, %v544
  %v577 = vsel %vm417, %v385, %v545
  %v578 = vsel %vm418, %v386, %v546
  %v579 = vsel %vm419, %v387, %v547
  %v580 = vsel %vm420, %v388, %v548
  %v581 = vsel %vm421, %v389, %v549
  %v582 = vsel %vm422, %v390, %v550
  %v583 = vsel %vm423, %v391, %v551
  %v584 = vsel %vm424, %v392, %v552
  %v585 = vsel %vm425, %v393, %v553
  %v586 = vsel %vm426, %v394, %v554
  %v587 = vsel %vm427, %v395, %v555
  %v588 = vsel %vm428, %v396, %v556
  %v589 = vsel %vm429, %v397, %v557
  %v590 = vsel %vm430, %v398, %v558
  %v591 = vsel %vm431, %v399, %v559
  %v592 = vpack.c.bf16 %v562, %v560
  %v593 = vpack.c.bf16 %v563, %v561
  %v594 = vpack.c.bf16 %v566, %v564
  %v595 = vpack.c.bf16 %v567, %v565
  %v596 = vpack.c.bf16 %v570, %v568
  %v597 = vpack.c.bf16 %v571, %v569
  %v598 = vpack.c.bf16 %v574, %v572
  %v599 = vpack.c.bf16 %v575, %v573
  %v600 = vpack.c.bf16 %v578, %v576
  %v601 = vpack.c.bf16 %v579, %v577
  %v602 = vpack.c.bf16 %v582, %v580
  %v603 = vpack.c.bf16 %v583, %v581
  %v604 = vpack.c.bf16 %v586, %v584
  %v605 = vpack.c.bf16 %v587, %v585
  %v606 = vpack.c.bf16 %v590, %v588
  %v607 = vpack.c.bf16 %v591, %v589
  %608 = vst [vmem:[#allocation3] sm:$0xff] %v592
  %vm609 = vcmask 916480
  %610 = vst.msk [vmem:[#allocation3 + $0x8] sm:$0xff] %vm609, %v593
  %611 = vst [vmem:[#allocation3 + $0x10] sm:$0xff] %v594
  %612 = vst.msk [vmem:[#allocation3 + $0x18] sm:$0xff] %vm609, %v595
  %613 = vst [vmem:[#allocation3 + $0x20] sm:$0xff] %v596
  %614 = vst.msk [vmem:[#allocation3 + $0x28] sm:$0xff] %vm609, %v597
  %615 = vst [vmem:[#allocation3 + $0x30] sm:$0xff] %v598
  %616 = vst.msk [vmem:[#allocation3 + $0x38] sm:$0xff] %vm609, %v599
  %617 = vst [vmem:[#allocation3 + $0x40] sm:$0xff] %v600
  %618 = vst.msk [vmem:[#allocation3 + $0x48] sm:$0xff] %vm609, %v601
  %619 = vst [vmem:[#allocation3 + $0x50] sm:$0xff] %v602
  %620 = vst.msk [vmem:[#allocation3 + $0x58] sm:$0xff] %vm609, %v603
  %621 = vst [vmem:[#allocation3 + $0x60] sm:$0xff] %v604
  %622 = vst.msk [vmem:[#allocation3 + $0x68] sm:$0xff] %vm609, %v605
  %623 = vst [vmem:[#allocation3 + $0x70] sm:$0xff] %v606
  %624 = vst.msk [vmem:[#allocation3 + $0x78] sm:$0xff] %vm609, %v607
  %v625 = vld [vmem:[#allocation3] sm:$0xff]
  %v626 = vld [vmem:[#allocation3 + $0x8] sm:$0xff]
  %v627 = vld [vmem:[#allocation3 + $0x10] sm:$0xff]
  %v628 = vld [vmem:[#allocation3 + $0x18] sm:$0xff]
  %v629 = vld [vmem:[#allocation3 + $0x20] sm:$0xff]
  %v630 = vld [vmem:[#allocation3 + $0x28] sm:$0xff]
  %v631 = vld [vmem:[#allocation3 + $0x30] sm:$0xff]
  %v632 = vld [vmem:[#allocation3 + $0x38] sm:$0xff]
  %vm633 = vcmask 48128
  %634 = vst.msk [vmem:[#allocation4] sm:$0xff] %vm633, %v625
  %635 = vst.msk [vmem:[#allocation4 + $0x8] sm:$0xff] %vm633, %v627
  %636 = vst.msk [vmem:[#allocation4 + $0x10] sm:$0xff] %vm633, %v629
  %637 = vst.msk [vmem:[#allocation4 + $0x18] sm:$0xff] %vm633, %v631
  %642 = vrot.lane.b32.xlu0 %v625, 122
  %v643 = vpop.permute.xlu0 %642
  %644 = vrot.lane.b32.xlu0 %v627, 122
  %v645 = vpop.permute.xlu0 %644
  %646 = vrot.lane.b32.xlu0 %v629, 122
  %v647 = vpop.permute.xlu0 %646
  %648 = vrot.lane.b32.xlu0 %v631, 122
  %v649 = vpop.permute.xlu0 %648
  %654 = vst.msk [vmem:[#allocation4 + $0x20] sm:$0xff] %vm633, %v643
  %655 = vst.msk [vmem:[#allocation4 + $0x28] sm:$0xff] %vm633, %v645
  %656 = vst.msk [vmem:[#allocation4 + $0x30] sm:$0xff] %vm633, %v647
  %657 = vst.msk [vmem:[#allocation4 + $0x38] sm:$0xff] %vm633, %v649
  %658 = vrot.lane.b32.xlu0 %v625, 116
  %v659 = vpop.permute.xlu0 %658
  %660 = vrot.lane.b32.xlu0 %v627, 116
  %v661 = vpop.permute.xlu0 %660
  %662 = vrot.lane.b32.xlu0 %v629, 116
  %v663 = vpop.permute.xlu0 %662
  %664 = vrot.lane.b32.xlu0 %v631, 116
  %v665 = vpop.permute.xlu0 %664
  %670 = vst.msk [vmem:[#allocation4 + $0x40] sm:$0xff] %vm633, %v659
  %671 = vst.msk [vmem:[#allocation4 + $0x48] sm:$0xff] %vm633, %v661
  %672 = vst.msk [vmem:[#allocation4 + $0x50] sm:$0xff] %vm633, %v663
  %673 = vst.msk [vmem:[#allocation4 + $0x58] sm:$0xff] %vm633, %v665
  %674 = vrot.lane.b32.xlu0 %v625, 110
  %v675 = vpop.permute.xlu0 %674
  %676 = vrot.lane.b32.xlu0 %v627, 110
  %v677 = vpop.permute.xlu0 %676
  %678 = vrot.lane.b32.xlu0 %v629, 110
  %v679 = vpop.permute.xlu0 %678
  %680 = vrot.lane.b32.xlu0 %v631, 110
  %v681 = vpop.permute.xlu0 %680
  %686 = vst.msk [vmem:[#allocation4 + $0x60] sm:$0xff] %vm633, %v675
  %687 = vst.msk [vmem:[#allocation4 + $0x68] sm:$0xff] %vm633, %v677
  %688 = vst.msk [vmem:[#allocation4 + $0x70] sm:$0xff] %vm633, %v679
  %689 = vst.msk [vmem:[#allocation4 + $0x78] sm:$0xff] %vm633, %v681
  %690 = vrot.lane.b32.xlu0 %v625, 104
  %v691 = vpop.permute.xlu0 %690
  %692 = vrot.lane.b32.xlu0 %v627, 104
  %v693 = vpop.permute.xlu0 %692
  %694 = vrot.lane.b32.xlu0 %v629, 104
  %v695 = vpop.permute.xlu0 %694
  %696 = vrot.lane.b32.xlu0 %v631, 104
  %v697 = vpop.permute.xlu0 %696
  %702 = vst.msk [vmem:[#allocation4 + $0x80] sm:$0xff] %vm633, %v691
  %703 = vst.msk [vmem:[#allocation4 + $0x88] sm:$0xff] %vm633, %v693
  %704 = vst.msk [vmem:[#allocation4 + $0x90] sm:$0xff] %vm633, %v695
  %705 = vst.msk [vmem:[#allocation4 + $0x98] sm:$0xff] %vm633, %v697
  %706 = vrot.lane.b32.xlu0 %v625, 98
  %v707 = vpop.permute.xlu0 %706
  %708 = vrot.lane.b32.xlu0 %v627, 98
  %v709 = vpop.permute.xlu0 %708
  %710 = vrot.lane.b32.xlu0 %v629, 98
  %v711 = vpop.permute.xlu0 %710
  %712 = vrot.lane.b32.xlu0 %v631, 98
  %v713 = vpop.permute.xlu0 %712
  %718 = vst.msk [vmem:[#allocation4 + $0xa0] sm:$0xff] %vm633, %v707
  %719 = vst.msk [vmem:[#allocation4 + $0xa8] sm:$0xff] %vm633, %v709
  %720 = vst.msk [vmem:[#allocation4 + $0xb0] sm:$0xff] %vm633, %v711
  %721 = vst.msk [vmem:[#allocation4 + $0xb8] sm:$0xff] %vm633, %v713
  %722 = vrot.lane.b32.xlu0 %v625, 92
  %v723 = vpop.permute.xlu0 %722
  %724 = vrot.lane.b32.xlu0 %v627, 92
  %v725 = vpop.permute.xlu0 %724
  %726 = vrot.lane.b32.xlu0 %v629, 92
  %v727 = vpop.permute.xlu0 %726
  %728 = vrot.lane.b32.xlu0 %v631, 92
  %v729 = vpop.permute.xlu0 %728
  %734 = vst.msk [vmem:[#allocation4 + $0xc0] sm:$0xff] %vm633, %v723
  %735 = vst.msk [vmem:[#allocation4 + $0xc8] sm:$0xff] %vm633, %v725
  %736 = vst.msk [vmem:[#allocation4 + $0xd0] sm:$0xff] %vm633, %v727
  %737 = vst.msk [vmem:[#allocation4 + $0xd8] sm:$0xff] %vm633, %v729
  %738 = vrot.lane.b32.xlu0 %v625, 86
  %v739 = vpop.permute.xlu0 %738
  %740 = vrot.lane.b32.xlu0 %v627, 86
  %v741 = vpop.permute.xlu0 %740
  %742 = vrot.lane.b32.xlu0 %v629, 86
  %v743 = vpop.permute.xlu0 %742
  %744 = vrot.lane.b32.xlu0 %v631, 86
  %v745 = vpop.permute.xlu0 %744
  %750 = vst.msk [vmem:[#allocation4 + $0xe0] sm:$0xff] %vm633, %v739
  %751 = vst.msk [vmem:[#allocation4 + $0xe8] sm:$0xff] %vm633, %v741
  %752 = vst.msk [vmem:[#allocation4 + $0xf0] sm:$0xff] %vm633, %v743
  %753 = vst.msk [vmem:[#allocation4 + $0xf8] sm:$0xff] %vm633, %v745
  %754 = vrot.lane.b32.xlu0 %v625, 80
  %v755 = vpop.permute.xlu0 %754
  %756 = vrot.lane.b32.xlu0 %v627, 80
  %v757 = vpop.permute.xlu0 %756
  %758 = vrot.lane.b32.xlu0 %v629, 80
  %v759 = vpop.permute.xlu0 %758
  %760 = vrot.lane.b32.xlu0 %v631, 80
  %v761 = vpop.permute.xlu0 %760
  %766 = vst.msk [vmem:[#allocation4 + $0x100] sm:$0xff] %vm633, %v755
  %767 = vst.msk [vmem:[#allocation4 + $0x108] sm:$0xff] %vm633, %v757
  %768 = vst.msk [vmem:[#allocation4 + $0x110] sm:$0xff] %vm633, %v759
  %769 = vst.msk [vmem:[#allocation4 + $0x118] sm:$0xff] %vm633, %v761
  %770 = vrot.lane.b32.xlu0 %v625, 74
  %v771 = vpop.permute.xlu0 %770
  %772 = vrot.lane.b32.xlu0 %v627, 74
  %v773 = vpop.permute.xlu0 %772
  %774 = vrot.lane.b32.xlu0 %v629, 74
  %v775 = vpop.permute.xlu0 %774
  %776 = vrot.lane.b32.xlu0 %v631, 74
  %v777 = vpop.permute.xlu0 %776
  %782 = vst.msk [vmem:[#allocation4 + $0x120] sm:$0xff] %vm633, %v771
  %783 = vst.msk [vmem:[#allocation4 + $0x128] sm:$0xff] %vm633, %v773
  %784 = vst.msk [vmem:[#allocation4 + $0x130] sm:$0xff] %vm633, %v775
  %785 = vst.msk [vmem:[#allocation4 + $0x138] sm:$0xff] %vm633, %v777
  %786 = vrot.lane.b32.xlu0 %v625, 68
  %v787 = vpop.permute.xlu0 %786
  %788 = vrot.lane.b32.xlu0 %v627, 68
  %v789 = vpop.permute.xlu0 %788
  %790 = vrot.lane.b32.xlu0 %v629, 68
  %v791 = vpop.permute.xlu0 %790
  %792 = vrot.lane.b32.xlu0 %v631, 68
  %v793 = vpop.permute.xlu0 %792
  %798 = vst.msk [vmem:[#allocation4 + $0x140] sm:$0xff] %vm633, %v787
  %799 = vst.msk [vmem:[#allocation4 + $0x148] sm:$0xff] %vm633, %v789
  %800 = vst.msk [vmem:[#allocation4 + $0x150] sm:$0xff] %vm633, %v791
  %801 = vst.msk [vmem:[#allocation4 + $0x158] sm:$0xff] %vm633, %v793
  %802 = vrot.lane.b32.xlu0 %v625, 62
  %v803 = vpop.permute.xlu0 %802
  %804 = vrot.lane.b32.xlu0 %v627, 62
  %v805 = vpop.permute.xlu0 %804
  %806 = vrot.lane.b32.xlu0 %v629, 62
  %v807 = vpop.permute.xlu0 %806
  %808 = vrot.lane.b32.xlu0 %v631, 62
  %v809 = vpop.permute.xlu0 %808
  %814 = vst.msk [vmem:[#allocation4 + $0x160] sm:$0xff] %vm633, %v803
  %815 = vst.msk [vmem:[#allocation4 + $0x168] sm:$0xff] %vm633, %v805
  %816 = vst.msk [vmem:[#allocation4 + $0x170] sm:$0xff] %vm633, %v807
  %817 = vst.msk [vmem:[#allocation4 + $0x178] sm:$0xff] %vm633, %v809
  %818 = vrot.lane.b32.xlu0 %v625, 56
  %v819 = vpop.permute.xlu0 %818
  %820 = vrot.lane.b32.xlu0 %v627, 56
  %v821 = vpop.permute.xlu0 %820
  %822 = vrot.lane.b32.xlu0 %v629, 56
  %v823 = vpop.permute.xlu0 %822
  %824 = vrot.lane.b32.xlu0 %v631, 56
  %v825 = vpop.permute.xlu0 %824
  %830 = vst.msk [vmem:[#allocation4 + $0x180] sm:$0xff] %vm633, %v819
  %831 = vst.msk [vmem:[#allocation4 + $0x188] sm:$0xff] %vm633, %v821
  %832 = vst.msk [vmem:[#allocation4 + $0x190] sm:$0xff] %vm633, %v823
  %833 = vst.msk [vmem:[#allocation4 + $0x198] sm:$0xff] %vm633, %v825
  %834 = vrot.lane.b32.xlu0 %v625, 50
  %v835 = vpop.permute.xlu0 %834
  %836 = vrot.lane.b32.xlu0 %v627, 50
  %v837 = vpop.permute.xlu0 %836
  %838 = vrot.lane.b32.xlu0 %v629, 50
  %v839 = vpop.permute.xlu0 %838
  %840 = vrot.lane.b32.xlu0 %v631, 50
  %v841 = vpop.permute.xlu0 %840
  %846 = vst.msk [vmem:[#allocation4 + $0x1a0] sm:$0xff] %vm633, %v835
  %847 = vst.msk [vmem:[#allocation4 + $0x1a8] sm:$0xff] %vm633, %v837
  %848 = vst.msk [vmem:[#allocation4 + $0x1b0] sm:$0xff] %vm633, %v839
  %849 = vst.msk [vmem:[#allocation4 + $0x1b8] sm:$0xff] %vm633, %v841
  %850 = vrot.lane.b32.xlu0 %v625, 44
  %v851 = vpop.permute.xlu0 %850
  %852 = vrot.lane.b32.xlu0 %v627, 44
  %v853 = vpop.permute.xlu0 %852
  %854 = vrot.lane.b32.xlu0 %v629, 44
  %v855 = vpop.permute.xlu0 %854
  %856 = vrot.lane.b32.xlu0 %v631, 44
  %v857 = vpop.permute.xlu0 %856
  %862 = vst.msk [vmem:[#allocation4 + $0x1c0] sm:$0xff] %vm633, %v851
  %863 = vst.msk [vmem:[#allocation4 + $0x1c8] sm:$0xff] %vm633, %v853
  %864 = vst.msk [vmem:[#allocation4 + $0x1d0] sm:$0xff] %vm633, %v855
  %865 = vst.msk [vmem:[#allocation4 + $0x1d8] sm:$0xff] %vm633, %v857
  %866 = vrot.lane.b32.xlu0 %v625, 38
  %v867 = vpop.permute.xlu0 %866
  %868 = vrot.lane.b32.xlu0 %v627, 38
  %v869 = vpop.permute.xlu0 %868
  %870 = vrot.lane.b32.xlu0 %v629, 38
  %v871 = vpop.permute.xlu0 %870
  %872 = vrot.lane.b32.xlu0 %v631, 38
  %v873 = vpop.permute.xlu0 %872
  %878 = vst.msk [vmem:[#allocation4 + $0x1e0] sm:$0xff] %vm633, %v867
  %879 = vst.msk [vmem:[#allocation4 + $0x1e8] sm:$0xff] %vm633, %v869
  %880 = vst.msk [vmem:[#allocation4 + $0x1f0] sm:$0xff] %vm633, %v871
  %881 = vst.msk [vmem:[#allocation4 + $0x1f8] sm:$0xff] %vm633, %v873
  %882 = vrot.lane.b32.xlu0 %v625, 32
  %v883 = vpop.permute.xlu0 %882
  %884 = vrot.lane.b32.xlu0 %v627, 32
  %v885 = vpop.permute.xlu0 %884
  %886 = vrot.lane.b32.xlu0 %v629, 32
  %v887 = vpop.permute.xlu0 %886
  %888 = vrot.lane.b32.xlu0 %v631, 32
  %v889 = vpop.permute.xlu0 %888
  %894 = vst.msk [vmem:[#allocation4 + $0x200] sm:$0xff] %vm633, %v883
  %895 = vst.msk [vmem:[#allocation4 + $0x208] sm:$0xff] %vm633, %v885
  %896 = vst.msk [vmem:[#allocation4 + $0x210] sm:$0xff] %vm633, %v887
  %897 = vst.msk [vmem:[#allocation4 + $0x218] sm:$0xff] %vm633, %v889
  %898 = vrot.lane.b32.xlu0 %v625, 26
  %v899 = vpop.permute.xlu0 %898
  %900 = vrot.lane.b32.xlu0 %v627, 26
  %v901 = vpop.permute.xlu0 %900
  %902 = vrot.lane.b32.xlu0 %v629, 26
  %v903 = vpop.permute.xlu0 %902
  %904 = vrot.lane.b32.xlu0 %v631, 26
  %v905 = vpop.permute.xlu0 %904
  %910 = vst.msk [vmem:[#allocation4 + $0x220] sm:$0xff] %vm633, %v899
  %911 = vst.msk [vmem:[#allocation4 + $0x228] sm:$0xff] %vm633, %v901
  %912 = vst.msk [vmem:[#allocation4 + $0x230] sm:$0xff] %vm633, %v903
  %913 = vst.msk [vmem:[#allocation4 + $0x238] sm:$0xff] %vm633, %v905
  %914 = vrot.lane.b32.xlu0 %v625, 20
  %v915 = vpop.permute.xlu0 %914
  %916 = vrot.lane.b32.xlu0 %v627, 20
  %v917 = vpop.permute.xlu0 %916
  %918 = vrot.lane.b32.xlu0 %v629, 20
  %v919 = vpop.permute.xlu0 %918
  %920 = vrot.lane.b32.xlu0 %v631, 20
  %v921 = vpop.permute.xlu0 %920
  %926 = vst.msk [vmem:[#allocation4 + $0x240] sm:$0xff] %vm633, %v915
  %927 = vst.msk [vmem:[#allocation4 + $0x248] sm:$0xff] %vm633, %v917
  %928 = vst.msk [vmem:[#allocation4 + $0x250] sm:$0xff] %vm633, %v919
  %929 = vst.msk [vmem:[#allocation4 + $0x258] sm:$0xff] %vm633, %v921
  %930 = vrot.lane.b32.xlu0 %v625, 14
  %v931 = vpop.permute.xlu0 %930
  %932 = vrot.lane.b32.xlu0 %v627, 14
  %v933 = vpop.permute.xlu0 %932
  %934 = vrot.lane.b32.xlu0 %v629, 14
  %v935 = vpop.permute.xlu0 %934
  %936 = vrot.lane.b32.xlu0 %v631, 14
  %v937 = vpop.permute.xlu0 %936
  %942 = vst.msk [vmem:[#allocation4 + $0x260] sm:$0xff] %vm633, %v931
  %943 = vst.msk [vmem:[#allocation4 + $0x268] sm:$0xff] %vm633, %v933
  %944 = vst.msk [vmem:[#allocation4 + $0x270] sm:$0xff] %vm633, %v935
  %945 = vst.msk [vmem:[#allocation4 + $0x278] sm:$0xff] %vm633, %v937
  %946 = vrot.lane.b32.xlu0 %v625, 8
  %v947 = vpop.permute.xlu0 %946
  %948 = vrot.lane.b32.xlu0 %v627, 8
  %v949 = vpop.permute.xlu0 %948
  %950 = vrot.lane.b32.xlu0 %v629, 8
  %v951 = vpop.permute.xlu0 %950
  %952 = vrot.lane.b32.xlu0 %v631, 8
  %v953 = vpop.permute.xlu0 %952
  %958 = vst.msk [vmem:[#allocation4 + $0x280] sm:$0xff] %vm633, %v947
  %959 = vst.msk [vmem:[#allocation4 + $0x288] sm:$0xff] %vm633, %v949
  %960 = vst.msk [vmem:[#allocation4 + $0x290] sm:$0xff] %vm633, %v951
  %961 = vst.msk [vmem:[#allocation4 + $0x298] sm:$0xff] %vm633, %v953
  %966 = vrot.lane.b32.xlu0 %v625, 2
  %v967 = vpop.permute.xlu0 %966
  %968 = vrot.lane.b32.xlu0 %v626, 2
  %v969 = vpop.permute.xlu0 %968
  %970 = vrot.lane.b32.xlu0 %v627, 2
  %v971 = vpop.permute.xlu0 %970
  %972 = vrot.lane.b32.xlu0 %v628, 2
  %v973 = vpop.permute.xlu0 %972
  %974 = vrot.lane.b32.xlu0 %v629, 2
  %v975 = vpop.permute.xlu0 %974
  %976 = vrot.lane.b32.xlu0 %v630, 2
  %v977 = vpop.permute.xlu0 %976
  %978 = vrot.lane.b32.xlu0 %v631, 2
  %v979 = vpop.permute.xlu0 %978
  %980 = vrot.lane.b32.xlu0 %v632, 2
  %v981 = vpop.permute.xlu0 %980
  %vm982 = vcmask 15360
  %v983 = vsel %vm982, %v967, %v969
  %v984 = vsel %vm982, %v971, %v973
  %v985 = vsel %vm982, %v975, %v977
  %v986 = vsel %vm982, %v979, %v981
  %991 = vst.msk [vmem:[#allocation4 + $0x2a0] sm:$0xff] %vm633, %v983
  %992 = vst.msk [vmem:[#allocation4 + $0x2a8] sm:$0xff] %vm633, %v984
  %993 = vst.msk [vmem:[#allocation4 + $0x2b0] sm:$0xff] %vm633, %v985
  %994 = vst.msk [vmem:[#allocation4 + $0x2b8] sm:$0xff] %vm633, %v986
  %995 = vrot.lane.b32.xlu0 %v626, 124
  %v996 = vpop.permute.xlu0 %995
  %997 = vrot.lane.b32.xlu0 %v628, 124
  %v998 = vpop.permute.xlu0 %997
  %999 = vrot.lane.b32.xlu0 %v630, 124
  %v1000 = vpop.permute.xlu0 %999
  %1001 = vrot.lane.b32.xlu0 %v632, 124
  %v1002 = vpop.permute.xlu0 %1001
  %1007 = vst.msk [vmem:[#allocation4 + $0x2c0] sm:$0xff] %vm633, %v996
  %1008 = vst.msk [vmem:[#allocation4 + $0x2c8] sm:$0xff] %vm633, %v998
  %1009 = vst.msk [vmem:[#allocation4 + $0x2d0] sm:$0xff] %vm633, %v1000
  %1010 = vst.msk [vmem:[#allocation4 + $0x2d8] sm:$0xff] %vm633, %v1002
  %1011 = vrot.lane.b32.xlu0 %v626, 118
  %v1012 = vpop.permute.xlu0 %1011
  %1013 = vrot.lane.b32.xlu0 %v628, 118
  %v1014 = vpop.permute.xlu0 %1013
  %1015 = vrot.lane.b32.xlu0 %v630, 118
  %v1016 = vpop.permute.xlu0 %1015
  %1017 = vrot.lane.b32.xlu0 %v632, 118
  %v1018 = vpop.permute.xlu0 %1017
  %1023 = vst.msk [vmem:[#allocation4 + $0x2e0] sm:$0xff] %vm633, %v1012
  %1024 = vst.msk [vmem:[#allocation4 + $0x2e8] sm:$0xff] %vm633, %v1014
  %1025 = vst.msk [vmem:[#allocation4 + $0x2f0] sm:$0xff] %vm633, %v1016
  %1026 = vst.msk [vmem:[#allocation4 + $0x2f8] sm:$0xff] %vm633, %v1018
  %1027 = vrot.lane.b32.xlu0 %v626, 112
  %v1028 = vpop.permute.xlu0 %1027
  %1029 = vrot.lane.b32.xlu0 %v628, 112
  %v1030 = vpop.permute.xlu0 %1029
  %1031 = vrot.lane.b32.xlu0 %v630, 112
  %v1032 = vpop.permute.xlu0 %1031
  %1033 = vrot.lane.b32.xlu0 %v632, 112
  %v1034 = vpop.permute.xlu0 %1033
  %1039 = vst.msk [vmem:[#allocation4 + $0x300] sm:$0xff] %vm633, %v1028
  %1040 = vst.msk [vmem:[#allocation4 + $0x308] sm:$0xff] %vm633, %v1030
  %1041 = vst.msk [vmem:[#allocation4 + $0x310] sm:$0xff] %vm633, %v1032
  %1042 = vst.msk [vmem:[#allocation4 + $0x318] sm:$0xff] %vm633, %v1034
  %1043 = vrot.lane.b32.xlu0 %v626, 106
  %v1044 = vpop.permute.xlu0 %1043
  %1045 = vrot.lane.b32.xlu0 %v628, 106
  %v1046 = vpop.permute.xlu0 %1045
  %1047 = vrot.lane.b32.xlu0 %v630, 106
  %v1048 = vpop.permute.xlu0 %1047
  %1049 = vrot.lane.b32.xlu0 %v632, 106
  %v1050 = vpop.permute.xlu0 %1049
  %1055 = vst.msk [vmem:[#allocation4 + $0x320] sm:$0xff] %vm633, %v1044
  %1056 = vst.msk [vmem:[#allocation4 + $0x328] sm:$0xff] %vm633, %v1046
  %1057 = vst.msk [vmem:[#allocation4 + $0x330] sm:$0xff] %vm633, %v1048
  %1058 = vst.msk [vmem:[#allocation4 + $0x338] sm:$0xff] %vm633, %v1050
  %1059 = vrot.lane.b32.xlu0 %v626, 100
  %v1060 = vpop.permute.xlu0 %1059
  %1061 = vrot.lane.b32.xlu0 %v628, 100
  %v1062 = vpop.permute.xlu0 %1061
  %1063 = vrot.lane.b32.xlu0 %v630, 100
  %v1064 = vpop.permute.xlu0 %1063
  %1065 = vrot.lane.b32.xlu0 %v632, 100
  %v1066 = vpop.permute.xlu0 %1065
  %1071 = vst.msk [vmem:[#allocation4 + $0x340] sm:$0xff] %vm633, %v1060
  %1072 = vst.msk [vmem:[#allocation4 + $0x348] sm:$0xff] %vm633, %v1062
  %1073 = vst.msk [vmem:[#allocation4 + $0x350] sm:$0xff] %vm633, %v1064
  %1074 = vst.msk [vmem:[#allocation4 + $0x358] sm:$0xff] %vm633, %v1066
  %1075 = vrot.lane.b32.xlu0 %v626, 94
  %v1076 = vpop.permute.xlu0 %1075
  %1077 = vrot.lane.b32.xlu0 %v628, 94
  %v1078 = vpop.permute.xlu0 %1077
  %1079 = vrot.lane.b32.xlu0 %v630, 94
  %v1080 = vpop.permute.xlu0 %1079
  %1081 = vrot.lane.b32.xlu0 %v632, 94
  %v1082 = vpop.permute.xlu0 %1081
  %1087 = vst.msk [vmem:[#allocation4 + $0x360] sm:$0xff] %vm633, %v1076
  %1088 = vst.msk [vmem:[#allocation4 + $0x368] sm:$0xff] %vm633, %v1078
  %1089 = vst.msk [vmem:[#allocation4 + $0x370] sm:$0xff] %vm633, %v1080
  %1090 = vst.msk [vmem:[#allocation4 + $0x378] sm:$0xff] %vm633, %v1082
  %1091 = vrot.lane.b32.xlu0 %v626, 88
  %v1092 = vpop.permute.xlu0 %1091
  %1093 = vrot.lane.b32.xlu0 %v628, 88
  %v1094 = vpop.permute.xlu0 %1093
  %1095 = vrot.lane.b32.xlu0 %v630, 88
  %v1096 = vpop.permute.xlu0 %1095
  %1097 = vrot.lane.b32.xlu0 %v632, 88
  %v1098 = vpop.permute.xlu0 %1097
  %1103 = vst.msk [vmem:[#allocation4 + $0x380] sm:$0xff] %vm633, %v1092
  %1104 = vst.msk [vmem:[#allocation4 + $0x388] sm:$0xff] %vm633, %v1094
  %1105 = vst.msk [vmem:[#allocation4 + $0x390] sm:$0xff] %vm633, %v1096
  %1106 = vst.msk [vmem:[#allocation4 + $0x398] sm:$0xff] %vm633, %v1098
  %1107 = vrot.lane.b32.xlu0 %v626, 82
  %v1108 = vpop.permute.xlu0 %1107
  %1109 = vrot.lane.b32.xlu0 %v628, 82
  %v1110 = vpop.permute.xlu0 %1109
  %1111 = vrot.lane.b32.xlu0 %v630, 82
  %v1112 = vpop.permute.xlu0 %1111
  %1113 = vrot.lane.b32.xlu0 %v632, 82
  %v1114 = vpop.permute.xlu0 %1113
  %1119 = vst.msk [vmem:[#allocation4 + $0x3a0] sm:$0xff] %vm633, %v1108
  %1120 = vst.msk [vmem:[#allocation4 + $0x3a8] sm:$0xff] %vm633, %v1110
  %1121 = vst.msk [vmem:[#allocation4 + $0x3b0] sm:$0xff] %vm633, %v1112
  %1122 = vst.msk [vmem:[#allocation4 + $0x3b8] sm:$0xff] %vm633, %v1114
  %1123 = vrot.lane.b32.xlu0 %v626, 76
  %v1124 = vpop.permute.xlu0 %1123
  %1125 = vrot.lane.b32.xlu0 %v628, 76
  %v1126 = vpop.permute.xlu0 %1125
  %1127 = vrot.lane.b32.xlu0 %v630, 76
  %v1128 = vpop.permute.xlu0 %1127
  %1129 = vrot.lane.b32.xlu0 %v632, 76
  %v1130 = vpop.permute.xlu0 %1129
  %1135 = vst.msk [vmem:[#allocation4 + $0x3c0] sm:$0xff] %vm633, %v1124
  %1136 = vst.msk [vmem:[#allocation4 + $0x3c8] sm:$0xff] %vm633, %v1126
  %1137 = vst.msk [vmem:[#allocation4 + $0x3d0] sm:$0xff] %vm633, %v1128
  %1138 = vst.msk [vmem:[#allocation4 + $0x3d8] sm:$0xff] %vm633, %v1130
  %1139 = vrot.lane.b32.xlu0 %v626, 70
  %v1140 = vpop.permute.xlu0 %1139
  %1141 = vrot.lane.b32.xlu0 %v628, 70
  %v1142 = vpop.permute.xlu0 %1141
  %1143 = vrot.lane.b32.xlu0 %v630, 70
  %v1144 = vpop.permute.xlu0 %1143
  %1145 = vrot.lane.b32.xlu0 %v632, 70
  %v1146 = vpop.permute.xlu0 %1145
  %1151 = vst.msk [vmem:[#allocation4 + $0x3e0] sm:$0xff] %vm633, %v1140
  %1152 = vst.msk [vmem:[#allocation4 + $0x3e8] sm:$0xff] %vm633, %v1142
  %1153 = vst.msk [vmem:[#allocation4 + $0x3f0] sm:$0xff] %vm633, %v1144
  %1154 = vst.msk [vmem:[#allocation4 + $0x3f8] sm:$0xff] %vm633, %v1146
  %1155 = vrot.lane.b32.xlu0 %v626, 64
  %v1156 = vpop.permute.xlu0 %1155
  %1157 = vrot.lane.b32.xlu0 %v628, 64
  %v1158 = vpop.permute.xlu0 %1157
  %1159 = vrot.lane.b32.xlu0 %v630, 64
  %v1160 = vpop.permute.xlu0 %1159
  %1161 = vrot.lane.b32.xlu0 %v632, 64
  %v1162 = vpop.permute.xlu0 %1161
  %1167 = vst.msk [vmem:[#allocation4 + $0x400] sm:$0xff] %vm633, %v1156
  %1168 = vst.msk [vmem:[#allocation4 + $0x408] sm:$0xff] %vm633, %v1158
  %1169 = vst.msk [vmem:[#allocation4 + $0x410] sm:$0xff] %vm633, %v1160
  %1170 = vst.msk [vmem:[#allocation4 + $0x418] sm:$0xff] %vm633, %v1162
  %1171 = vrot.lane.b32.xlu0 %v626, 58
  %v1172 = vpop.permute.xlu0 %1171
  %1173 = vrot.lane.b32.xlu0 %v628, 58
  %v1174 = vpop.permute.xlu0 %1173
  %1175 = vrot.lane.b32.xlu0 %v630, 58
  %v1176 = vpop.permute.xlu0 %1175
  %1177 = vrot.lane.b32.xlu0 %v632, 58
  %v1178 = vpop.permute.xlu0 %1177
  %1183 = vst.msk [vmem:[#allocation4 + $0x420] sm:$0xff] %vm633, %v1172
  %1184 = vst.msk [vmem:[#allocation4 + $0x428] sm:$0xff] %vm633, %v1174
  %1185 = vst.msk [vmem:[#allocation4 + $0x430] sm:$0xff] %vm633, %v1176
  %1186 = vst.msk [vmem:[#allocation4 + $0x438] sm:$0xff] %vm633, %v1178
  %1187 = vrot.lane.b32.xlu0 %v626, 52
  %v1188 = vpop.permute.xlu0 %1187
  %1189 = vrot.lane.b32.xlu0 %v628, 52
  %v1190 = vpop.permute.xlu0 %1189
  %1191 = vrot.lane.b32.xlu0 %v630, 52
  %v1192 = vpop.permute.xlu0 %1191
  %1193 = vrot.lane.b32.xlu0 %v632, 52
  %v1194 = vpop.permute.xlu0 %1193
  %1199 = vst.msk [vmem:[#allocation4 + $0x440] sm:$0xff] %vm633, %v1188
  %1200 = vst.msk [vmem:[#allocation4 + $0x448] sm:$0xff] %vm633, %v1190
  %1201 = vst.msk [vmem:[#allocation4 + $0x450] sm:$0xff] %vm633, %v1192
  %1202 = vst.msk [vmem:[#allocation4 + $0x458] sm:$0xff] %vm633, %v1194
  %1203 = vrot.lane.b32.xlu0 %v626, 46
  %v1204 = vpop.permute.xlu0 %1203
  %1205 = vrot.lane.b32.xlu0 %v628, 46
  %v1206 = vpop.permute.xlu0 %1205
  %1207 = vrot.lane.b32.xlu0 %v630, 46
  %v1208 = vpop.permute.xlu0 %1207
  %1209 = vrot.lane.b32.xlu0 %v632, 46
  %v1210 = vpop.permute.xlu0 %1209
  %1215 = vst.msk [vmem:[#allocation4 + $0x460] sm:$0xff] %vm633, %v1204
  %1216 = vst.msk [vmem:[#allocation4 + $0x468] sm:$0xff] %vm633, %v1206
  %1217 = vst.msk [vmem:[#allocation4 + $0x470] sm:$0xff] %vm633, %v1208
  %1218 = vst.msk [vmem:[#allocation4 + $0x478] sm:$0xff] %vm633, %v1210
  %1219 = vrot.lane.b32.xlu0 %v626, 40
  %v1220 = vpop.permute.xlu0 %1219
  %1221 = vrot.lane.b32.xlu0 %v628, 40
  %v1222 = vpop.permute.xlu0 %1221
  %1223 = vrot.lane.b32.xlu0 %v630, 40
  %v1224 = vpop.permute.xlu0 %1223
  %1225 = vrot.lane.b32.xlu0 %v632, 40
  %v1226 = vpop.permute.xlu0 %1225
  %1231 = vst.msk [vmem:[#allocation4 + $0x480] sm:$0xff] %vm633, %v1220
  %1232 = vst.msk [vmem:[#allocation4 + $0x488] sm:$0xff] %vm633, %v1222
  %1233 = vst.msk [vmem:[#allocation4 + $0x490] sm:$0xff] %vm633, %v1224
  %1234 = vst.msk [vmem:[#allocation4 + $0x498] sm:$0xff] %vm633, %v1226
  %1235 = vrot.lane.b32.xlu0 %v626, 34
  %v1236 = vpop.permute.xlu0 %1235
  %1237 = vrot.lane.b32.xlu0 %v628, 34
  %v1238 = vpop.permute.xlu0 %1237
  %1239 = vrot.lane.b32.xlu0 %v630, 34
  %v1240 = vpop.permute.xlu0 %1239
  %1241 = vrot.lane.b32.xlu0 %v632, 34
  %v1242 = vpop.permute.xlu0 %1241
  %1247 = vst.msk [vmem:[#allocation4 + $0x4a0] sm:$0xff] %vm633, %v1236
  %1248 = vst.msk [vmem:[#allocation4 + $0x4a8] sm:$0xff] %vm633, %v1238
  %1249 = vst.msk [vmem:[#allocation4 + $0x4b0] sm:$0xff] %vm633, %v1240
  %1250 = vst.msk [vmem:[#allocation4 + $0x4b8] sm:$0xff] %vm633, %v1242
  %1251 = vrot.lane.b32.xlu0 %v626, 28
  %v1252 = vpop.permute.xlu0 %1251
  %1253 = vrot.lane.b32.xlu0 %v628, 28
  %v1254 = vpop.permute.xlu0 %1253
  %1255 = vrot.lane.b32.xlu0 %v630, 28
  %v1256 = vpop.permute.xlu0 %1255
  %1257 = vrot.lane.b32.xlu0 %v632, 28
  %v1258 = vpop.permute.xlu0 %1257
  %1263 = vst.msk [vmem:[#allocation4 + $0x4c0] sm:$0xff] %vm633, %v1252
  %1264 = vst.msk [vmem:[#allocation4 + $0x4c8] sm:$0xff] %vm633, %v1254
  %1265 = vst.msk [vmem:[#allocation4 + $0x4d0] sm:$0xff] %vm633, %v1256
  %1266 = vst.msk [vmem:[#allocation4 + $0x4d8] sm:$0xff] %vm633, %v1258
  %1267 = vrot.lane.b32.xlu0 %v626, 22
  %v1268 = vpop.permute.xlu0 %1267
  %1269 = vrot.lane.b32.xlu0 %v628, 22
  %v1270 = vpop.permute.xlu0 %1269
  %1271 = vrot.lane.b32.xlu0 %v630, 22
  %v1272 = vpop.permute.xlu0 %1271
  %1273 = vrot.lane.b32.xlu0 %v632, 22
  %v1274 = vpop.permute.xlu0 %1273
  %1279 = vst.msk [vmem:[#allocation4 + $0x4e0] sm:$0xff] %vm633, %v1268
  %1280 = vst.msk [vmem:[#allocation4 + $0x4e8] sm:$0xff] %vm633, %v1270
  %1281 = vst.msk [vmem:[#allocation4 + $0x4f0] sm:$0xff] %vm633, %v1272
  %1282 = vst.msk [vmem:[#allocation4 + $0x4f8] sm:$0xff] %vm633, %v1274
  %v1283 = vld [vmem:[#allocation3 + $0x40] sm:$0xff]
  %v1284 = vld [vmem:[#allocation3 + $0x48] sm:$0xff]
  %v1285 = vld [vmem:[#allocation3 + $0x50] sm:$0xff]
  %v1286 = vld [vmem:[#allocation3 + $0x58] sm:$0xff]
  %v1287 = vld [vmem:[#allocation3 + $0x60] sm:$0xff]
  %v1288 = vld [vmem:[#allocation3 + $0x68] sm:$0xff]
  %v1289 = vld [vmem:[#allocation3 + $0x70] sm:$0xff]
  %v1290 = vld [vmem:[#allocation3 + $0x78] sm:$0xff]
  %1295 = vrot.lane.b32.xlu0 %v1283, 6
  %v1296 = vpop.permute.xlu0 %1295
  %1297 = vrot.lane.b32.xlu0 %v1285, 6
  %v1298 = vpop.permute.xlu0 %1297
  %1299 = vrot.lane.b32.xlu0 %v1287, 6
  %v1300 = vpop.permute.xlu0 %1299
  %1301 = vrot.lane.b32.xlu0 %v1289, 6
  %v1302 = vpop.permute.xlu0 %1301
  %vm1307 = vcmask 97328
  %1308 = vst.msk [vmem:[#allocation4] sm:$0xff] %vm1307, %v1296
  %1309 = vst.msk [vmem:[#allocation4 + $0x8] sm:$0xff] %vm1307, %v1298
  %1310 = vst.msk [vmem:[#allocation4 + $0x10] sm:$0xff] %vm1307, %v1300
  %1311 = vst.msk [vmem:[#allocation4 + $0x18] sm:$0xff] %vm1307, %v1302
  %1312 = vst.msk [vmem:[#allocation4 + $0x20] sm:$0xff] %vm1307, %v1283
  %1313 = vst.msk [vmem:[#allocation4 + $0x28] sm:$0xff] %vm1307, %v1285
  %1314 = vst.msk [vmem:[#allocation4 + $0x30] sm:$0xff] %vm1307, %v1287
  %1315 = vst.msk [vmem:[#allocation4 + $0x38] sm:$0xff] %vm1307, %v1289
  %1316 = vrot.lane.b32.xlu0 %v1283, 122
  %v1317 = vpop.permute.xlu0 %1316
  %1318 = vrot.lane.b32.xlu0 %v1285, 122
  %v1319 = vpop.permute.xlu0 %1318
  %1320 = vrot.lane.b32.xlu0 %v1287, 122
  %v1321 = vpop.permute.xlu0 %1320
  %1322 = vrot.lane.b32.xlu0 %v1289, 122
  %v1323 = vpop.permute.xlu0 %1322
  %1328 = vst.msk [vmem:[#allocation4 + $0x40] sm:$0xff] %vm1307, %v1317
  %1329 = vst.msk [vmem:[#allocation4 + $0x48] sm:$0xff] %vm1307, %v1319
  %1330 = vst.msk [vmem:[#allocation4 + $0x50] sm:$0xff] %vm1307, %v1321
  %1331 = vst.msk [vmem:[#allocation4 + $0x58] sm:$0xff] %vm1307, %v1323
  %1332 = vrot.lane.b32.xlu0 %v1283, 116
  %v1333 = vpop.permute.xlu0 %1332
  %1334 = vrot.lane.b32.xlu0 %v1285, 116
  %v1335 = vpop.permute.xlu0 %1334
  %1336 = vrot.lane.b32.xlu0 %v1287, 116
  %v1337 = vpop.permute.xlu0 %1336
  %1338 = vrot.lane.b32.xlu0 %v1289, 116
  %v1339 = vpop.permute.xlu0 %1338
  %1344 = vst.msk [vmem:[#allocation4 + $0x60] sm:$0xff] %vm1307, %v1333
  %1345 = vst.msk [vmem:[#allocation4 + $0x68] sm:$0xff] %vm1307, %v1335
  %1346 = vst.msk [vmem:[#allocation4 + $0x70] sm:$0xff] %vm1307, %v1337
  %1347 = vst.msk [vmem:[#allocation4 + $0x78] sm:$0xff] %vm1307, %v1339
  %1348 = vrot.lane.b32.xlu0 %v1283, 110
  %v1349 = vpop.permute.xlu0 %1348
  %1350 = vrot.lane.b32.xlu0 %v1285, 110
  %v1351 = vpop.permute.xlu0 %1350
  %1352 = vrot.lane.b32.xlu0 %v1287, 110
  %v1353 = vpop.permute.xlu0 %1352
  %1354 = vrot.lane.b32.xlu0 %v1289, 110
  %v1355 = vpop.permute.xlu0 %1354
  %1360 = vst.msk [vmem:[#allocation4 + $0x80] sm:$0xff] %vm1307, %v1349
  %1361 = vst.msk [vmem:[#allocation4 + $0x88] sm:$0xff] %vm1307, %v1351
  %1362 = vst.msk [vmem:[#allocation4 + $0x90] sm:$0xff] %vm1307, %v1353
  %1363 = vst.msk [vmem:[#allocation4 + $0x98] sm:$0xff] %vm1307, %v1355
  %1364 = vrot.lane.b32.xlu0 %v1283, 104
  %v1365 = vpop.permute.xlu0 %1364
  %1366 = vrot.lane.b32.xlu0 %v1285, 104
  %v1367 = vpop.permute.xlu0 %1366
  %1368 = vrot.lane.b32.xlu0 %v1287, 104
  %v1369 = vpop.permute.xlu0 %1368
  %1370 = vrot.lane.b32.xlu0 %v1289, 104
  %v1371 = vpop.permute.xlu0 %1370
  %1376 = vst.msk [vmem:[#allocation4 + $0xa0] sm:$0xff] %vm1307, %v1365
  %1377 = vst.msk [vmem:[#allocation4 + $0xa8] sm:$0xff] %vm1307, %v1367
  %1378 = vst.msk [vmem:[#allocation4 + $0xb0] sm:$0xff] %vm1307, %v1369
  %1379 = vst.msk [vmem:[#allocation4 + $0xb8] sm:$0xff] %vm1307, %v1371
  %1380 = vrot.lane.b32.xlu0 %v1283, 98
  %v1381 = vpop.permute.xlu0 %1380
  %1382 = vrot.lane.b32.xlu0 %v1285, 98
  %v1383 = vpop.permute.xlu0 %1382
  %1384 = vrot.lane.b32.xlu0 %v1287, 98
  %v1385 = vpop.permute.xlu0 %1384
  %1386 = vrot.lane.b32.xlu0 %v1289, 98
  %v1387 = vpop.permute.xlu0 %1386
  %1392 = vst.msk [vmem:[#allocation4 + $0xc0] sm:$0xff] %vm1307, %v1381
  %1393 = vst.msk [vmem:[#allocation4 + $0xc8] sm:$0xff] %vm1307, %v1383
  %1394 = vst.msk [vmem:[#allocation4 + $0xd0] sm:$0xff] %vm1307, %v1385
  %1395 = vst.msk [vmem:[#allocation4 + $0xd8] sm:$0xff] %vm1307, %v1387
  %1396 = vrot.lane.b32.xlu0 %v1283, 92
  %v1397 = vpop.permute.xlu0 %1396
  %1398 = vrot.lane.b32.xlu0 %v1285, 92
  %v1399 = vpop.permute.xlu0 %1398
  %1400 = vrot.lane.b32.xlu0 %v1287, 92
  %v1401 = vpop.permute.xlu0 %1400
  %1402 = vrot.lane.b32.xlu0 %v1289, 92
  %v1403 = vpop.permute.xlu0 %1402
  %1408 = vst.msk [vmem:[#allocation4 + $0xe0] sm:$0xff] %vm1307, %v1397
  %1409 = vst.msk [vmem:[#allocation4 + $0xe8] sm:$0xff] %vm1307, %v1399
  %1410 = vst.msk [vmem:[#allocation4 + $0xf0] sm:$0xff] %vm1307, %v1401
  %1411 = vst.msk [vmem:[#allocation4 + $0xf8] sm:$0xff] %vm1307, %v1403
  %1412 = vrot.lane.b32.xlu0 %v1283, 86
  %v1413 = vpop.permute.xlu0 %1412
  %1414 = vrot.lane.b32.xlu0 %v1285, 86
  %v1415 = vpop.permute.xlu0 %1414
  %1416 = vrot.lane.b32.xlu0 %v1287, 86
  %v1417 = vpop.permute.xlu0 %1416
  %1418 = vrot.lane.b32.xlu0 %v1289, 86
  %v1419 = vpop.permute.xlu0 %1418
  %1424 = vst.msk [vmem:[#allocation4 + $0x100] sm:$0xff] %vm1307, %v1413
  %1425 = vst.msk [vmem:[#allocation4 + $0x108] sm:$0xff] %vm1307, %v1415
  %1426 = vst.msk [vmem:[#allocation4 + $0x110] sm:$0xff] %vm1307, %v1417
  %1427 = vst.msk [vmem:[#allocation4 + $0x118] sm:$0xff] %vm1307, %v1419
  %1428 = vrot.lane.b32.xlu0 %v1283, 80
  %v1429 = vpop.permute.xlu0 %1428
  %1430 = vrot.lane.b32.xlu0 %v1285, 80
  %v1431 = vpop.permute.xlu0 %1430
  %1432 = vrot.lane.b32.xlu0 %v1287, 80
  %v1433 = vpop.permute.xlu0 %1432
  %1434 = vrot.lane.b32.xlu0 %v1289, 80
  %v1435 = vpop.permute.xlu0 %1434
  %1440 = vst.msk [vmem:[#allocation4 + $0x120] sm:$0xff] %vm1307, %v1429
  %1441 = vst.msk [vmem:[#allocation4 + $0x128] sm:$0xff] %vm1307, %v1431
  %1442 = vst.msk [vmem:[#allocation4 + $0x130] sm:$0xff] %vm1307, %v1433
  %1443 = vst.msk [vmem:[#allocation4 + $0x138] sm:$0xff] %vm1307, %v1435
  %1444 = vrot.lane.b32.xlu0 %v1283, 74
  %v1445 = vpop.permute.xlu0 %1444
  %1446 = vrot.lane.b32.xlu0 %v1285, 74
  %v1447 = vpop.permute.xlu0 %1446
  %1448 = vrot.lane.b32.xlu0 %v1287, 74
  %v1449 = vpop.permute.xlu0 %1448
  %1450 = vrot.lane.b32.xlu0 %v1289, 74
  %v1451 = vpop.permute.xlu0 %1450
  %1456 = vst.msk [vmem:[#allocation4 + $0x140] sm:$0xff] %vm1307, %v1445
  %1457 = vst.msk [vmem:[#allocation4 + $0x148] sm:$0xff] %vm1307, %v1447
  %1458 = vst.msk [vmem:[#allocation4 + $0x150] sm:$0xff] %vm1307, %v1449
  %1459 = vst.msk [vmem:[#allocation4 + $0x158] sm:$0xff] %vm1307, %v1451
  %1460 = vrot.lane.b32.xlu0 %v1283, 68
  %v1461 = vpop.permute.xlu0 %1460
  %1462 = vrot.lane.b32.xlu0 %v1285, 68
  %v1463 = vpop.permute.xlu0 %1462
  %1464 = vrot.lane.b32.xlu0 %v1287, 68
  %v1465 = vpop.permute.xlu0 %1464
  %1466 = vrot.lane.b32.xlu0 %v1289, 68
  %v1467 = vpop.permute.xlu0 %1466
  %1472 = vst.msk [vmem:[#allocation4 + $0x160] sm:$0xff] %vm1307, %v1461
  %1473 = vst.msk [vmem:[#allocation4 + $0x168] sm:$0xff] %vm1307, %v1463
  %1474 = vst.msk [vmem:[#allocation4 + $0x170] sm:$0xff] %vm1307, %v1465
  %1475 = vst.msk [vmem:[#allocation4 + $0x178] sm:$0xff] %vm1307, %v1467
  %1476 = vrot.lane.b32.xlu0 %v1283, 62
  %v1477 = vpop.permute.xlu0 %1476
  %1478 = vrot.lane.b32.xlu0 %v1285, 62
  %v1479 = vpop.permute.xlu0 %1478
  %1480 = vrot.lane.b32.xlu0 %v1287, 62
  %v1481 = vpop.permute.xlu0 %1480
  %1482 = vrot.lane.b32.xlu0 %v1289, 62
  %v1483 = vpop.permute.xlu0 %1482
  %1488 = vst.msk [vmem:[#allocation4 + $0x180] sm:$0xff] %vm1307, %v1477
  %1489 = vst.msk [vmem:[#allocation4 + $0x188] sm:$0xff] %vm1307, %v1479
  %1490 = vst.msk [vmem:[#allocation4 + $0x190] sm:$0xff] %vm1307, %v1481
  %1491 = vst.msk [vmem:[#allocation4 + $0x198] sm:$0xff] %vm1307, %v1483
  %1492 = vrot.lane.b32.xlu0 %v1283, 56
  %v1493 = vpop.permute.xlu0 %1492
  %1494 = vrot.lane.b32.xlu0 %v1285, 56
  %v1495 = vpop.permute.xlu0 %1494
  %1496 = vrot.lane.b32.xlu0 %v1287, 56
  %v1497 = vpop.permute.xlu0 %1496
  %1498 = vrot.lane.b32.xlu0 %v1289, 56
  %v1499 = vpop.permute.xlu0 %1498
  %1504 = vst.msk [vmem:[#allocation4 + $0x1a0] sm:$0xff] %vm1307, %v1493
  %1505 = vst.msk [vmem:[#allocation4 + $0x1a8] sm:$0xff] %vm1307, %v1495
  %1506 = vst.msk [vmem:[#allocation4 + $0x1b0] sm:$0xff] %vm1307, %v1497
  %1507 = vst.msk [vmem:[#allocation4 + $0x1b8] sm:$0xff] %vm1307, %v1499
  %1508 = vrot.lane.b32.xlu0 %v1283, 50
  %v1509 = vpop.permute.xlu0 %1508
  %1510 = vrot.lane.b32.xlu0 %v1285, 50
  %v1511 = vpop.permute.xlu0 %1510
  %1512 = vrot.lane.b32.xlu0 %v1287, 50
  %v1513 = vpop.permute.xlu0 %1512
  %1514 = vrot.lane.b32.xlu0 %v1289, 50
  %v1515 = vpop.permute.xlu0 %1514
  %1520 = vst.msk [vmem:[#allocation4 + $0x1c0] sm:$0xff] %vm1307, %v1509
  %1521 = vst.msk [vmem:[#allocation4 + $0x1c8] sm:$0xff] %vm1307, %v1511
  %1522 = vst.msk [vmem:[#allocation4 + $0x1d0] sm:$0xff] %vm1307, %v1513
  %1523 = vst.msk [vmem:[#allocation4 + $0x1d8] sm:$0xff] %vm1307, %v1515
  %1524 = vrot.lane.b32.xlu0 %v1283, 44
  %v1525 = vpop.permute.xlu0 %1524
  %1526 = vrot.lane.b32.xlu0 %v1285, 44
  %v1527 = vpop.permute.xlu0 %1526
  %1528 = vrot.lane.b32.xlu0 %v1287, 44
  %v1529 = vpop.permute.xlu0 %1528
  %1530 = vrot.lane.b32.xlu0 %v1289, 44
  %v1531 = vpop.permute.xlu0 %1530
  %1536 = vst.msk [vmem:[#allocation4 + $0x1e0] sm:$0xff] %vm1307, %v1525
  %1537 = vst.msk [vmem:[#allocation4 + $0x1e8] sm:$0xff] %vm1307, %v1527
  %1538 = vst.msk [vmem:[#allocation4 + $0x1f0] sm:$0xff] %vm1307, %v1529
  %1539 = vst.msk [vmem:[#allocation4 + $0x1f8] sm:$0xff] %vm1307, %v1531
  %1540 = vrot.lane.b32.xlu0 %v1283, 38
  %v1541 = vpop.permute.xlu0 %1540
  %1542 = vrot.lane.b32.xlu0 %v1285, 38
  %v1543 = vpop.permute.xlu0 %1542
  %1544 = vrot.lane.b32.xlu0 %v1287, 38
  %v1545 = vpop.permute.xlu0 %1544
  %1546 = vrot.lane.b32.xlu0 %v1289, 38
  %v1547 = vpop.permute.xlu0 %1546
  %1552 = vst.msk [vmem:[#allocation4 + $0x200] sm:$0xff] %vm1307, %v1541
  %1553 = vst.msk [vmem:[#allocation4 + $0x208] sm:$0xff] %vm1307, %v1543
  %1554 = vst.msk [vmem:[#allocation4 + $0x210] sm:$0xff] %vm1307, %v1545
  %1555 = vst.msk [vmem:[#allocation4 + $0x218] sm:$0xff] %vm1307, %v1547
  %1556 = vrot.lane.b32.xlu0 %v1283, 32
  %v1557 = vpop.permute.xlu0 %1556
  %1558 = vrot.lane.b32.xlu0 %v1285, 32
  %v1559 = vpop.permute.xlu0 %1558
  %1560 = vrot.lane.b32.xlu0 %v1287, 32
  %v1561 = vpop.permute.xlu0 %1560
  %1562 = vrot.lane.b32.xlu0 %v1289, 32
  %v1563 = vpop.permute.xlu0 %1562
  %1568 = vst.msk [vmem:[#allocation4 + $0x220] sm:$0xff] %vm1307, %v1557
  %1569 = vst.msk [vmem:[#allocation4 + $0x228] sm:$0xff] %vm1307, %v1559
  %1570 = vst.msk [vmem:[#allocation4 + $0x230] sm:$0xff] %vm1307, %v1561
  %1571 = vst.msk [vmem:[#allocation4 + $0x238] sm:$0xff] %vm1307, %v1563
  %1572 = vrot.lane.b32.xlu0 %v1283, 26
  %v1573 = vpop.permute.xlu0 %1572
  %1574 = vrot.lane.b32.xlu0 %v1285, 26
  %v1575 = vpop.permute.xlu0 %1574
  %1576 = vrot.lane.b32.xlu0 %v1287, 26
  %v1577 = vpop.permute.xlu0 %1576
  %1578 = vrot.lane.b32.xlu0 %v1289, 26
  %v1579 = vpop.permute.xlu0 %1578
  %1584 = vst.msk [vmem:[#allocation4 + $0x240] sm:$0xff] %vm1307, %v1573
  %1585 = vst.msk [vmem:[#allocation4 + $0x248] sm:$0xff] %vm1307, %v1575
  %1586 = vst.msk [vmem:[#allocation4 + $0x250] sm:$0xff] %vm1307, %v1577
  %1587 = vst.msk [vmem:[#allocation4 + $0x258] sm:$0xff] %vm1307, %v1579
  %1588 = vrot.lane.b32.xlu0 %v1283, 20
  %v1589 = vpop.permute.xlu0 %1588
  %1590 = vrot.lane.b32.xlu0 %v1285, 20
  %v1591 = vpop.permute.xlu0 %1590
  %1592 = vrot.lane.b32.xlu0 %v1287, 20
  %v1593 = vpop.permute.xlu0 %1592
  %1594 = vrot.lane.b32.xlu0 %v1289, 20
  %v1595 = vpop.permute.xlu0 %1594
  %1600 = vst.msk [vmem:[#allocation4 + $0x260] sm:$0xff] %vm1307, %v1589
  %1601 = vst.msk [vmem:[#allocation4 + $0x268] sm:$0xff] %vm1307, %v1591
  %1602 = vst.msk [vmem:[#allocation4 + $0x270] sm:$0xff] %vm1307, %v1593
  %1603 = vst.msk [vmem:[#allocation4 + $0x278] sm:$0xff] %vm1307, %v1595
  %1604 = vrot.lane.b32.xlu0 %v1283, 14
  %v1605 = vpop.permute.xlu0 %1604
  %1606 = vrot.lane.b32.xlu0 %v1285, 14
  %v1607 = vpop.permute.xlu0 %1606
  %1608 = vrot.lane.b32.xlu0 %v1287, 14
  %v1609 = vpop.permute.xlu0 %1608
  %1610 = vrot.lane.b32.xlu0 %v1289, 14
  %v1611 = vpop.permute.xlu0 %1610
  %1616 = vst.msk [vmem:[#allocation4 + $0x280] sm:$0xff] %vm1307, %v1605
  %1617 = vst.msk [vmem:[#allocation4 + $0x288] sm:$0xff] %vm1307, %v1607
  %1618 = vst.msk [vmem:[#allocation4 + $0x290] sm:$0xff] %vm1307, %v1609
  %1619 = vst.msk [vmem:[#allocation4 + $0x298] sm:$0xff] %vm1307, %v1611
  %1624 = vrot.lane.b32.xlu0 %v1283, 8
  %v1625 = vpop.permute.xlu0 %1624
  %1626 = vrot.lane.b32.xlu0 %v1284, 8
  %v1627 = vpop.permute.xlu0 %1626
  %1628 = vrot.lane.b32.xlu0 %v1285, 8
  %v1629 = vpop.permute.xlu0 %1628
  %1630 = vrot.lane.b32.xlu0 %v1286, 8
  %v1631 = vpop.permute.xlu0 %1630
  %1632 = vrot.lane.b32.xlu0 %v1287, 8
  %v1633 = vpop.permute.xlu0 %1632
  %1634 = vrot.lane.b32.xlu0 %v1288, 8
  %v1635 = vpop.permute.xlu0 %1634
  %1636 = vrot.lane.b32.xlu0 %v1289, 8
  %v1637 = vpop.permute.xlu0 %1636
  %1638 = vrot.lane.b32.xlu0 %v1290, 8
  %v1639 = vpop.permute.xlu0 %1638
  %vm1640 = vcmask 64512
  %v1641 = vsel %vm1640, %v1625, %v1627
  %v1642 = vsel %vm1640, %v1629, %v1631
  %v1643 = vsel %vm1640, %v1633, %v1635
  %v1644 = vsel %vm1640, %v1637, %v1639
  %1649 = vst.msk [vmem:[#allocation4 + $0x2a0] sm:$0xff] %vm1307, %v1641
  %1650 = vst.msk [vmem:[#allocation4 + $0x2a8] sm:$0xff] %vm1307, %v1642
  %1651 = vst.msk [vmem:[#allocation4 + $0x2b0] sm:$0xff] %vm1307, %v1643
  %1652 = vst.msk [vmem:[#allocation4 + $0x2b8] sm:$0xff] %vm1307, %v1644
  %1653 = vrot.lane.b32.xlu0 %v1284, 2
  %v1654 = vpop.permute.xlu0 %1653
  %1655 = vrot.lane.b32.xlu0 %v1286, 2
  %v1656 = vpop.permute.xlu0 %1655
  %1657 = vrot.lane.b32.xlu0 %v1288, 2
  %v1658 = vpop.permute.xlu0 %1657
  %1659 = vrot.lane.b32.xlu0 %v1290, 2
  %v1660 = vpop.permute.xlu0 %1659
  %1665 = vst.msk [vmem:[#allocation4 + $0x2c0] sm:$0xff] %vm1307, %v1654
  %1666 = vst.msk [vmem:[#allocation4 + $0x2c8] sm:$0xff] %vm1307, %v1656
  %1667 = vst.msk [vmem:[#allocation4 + $0x2d0] sm:$0xff] %vm1307, %v1658
  %1668 = vst.msk [vmem:[#allocation4 + $0x2d8] sm:$0xff] %vm1307, %v1660
  %1669 = vrot.lane.b32.xlu0 %v1284, 124
  %v1670 = vpop.permute.xlu0 %1669
  %1671 = vrot.lane.b32.xlu0 %v1286, 124
  %v1672 = vpop.permute.xlu0 %1671
  %1673 = vrot.lane.b32.xlu0 %v1288, 124
  %v1674 = vpop.permute.xlu0 %1673
  %1675 = vrot.lane.b32.xlu0 %v1290, 124
  %v1676 = vpop.permute.xlu0 %1675
  %1681 = vst.msk [vmem:[#allocation4 + $0x2e0] sm:$0xff] %vm1307, %v1670
  %1682 = vst.msk [vmem:[#allocation4 + $0x2e8] sm:$0xff] %vm1307, %v1672
  %1683 = vst.msk [vmem:[#allocation4 + $0x2f0] sm:$0xff] %vm1307, %v1674
  %1684 = vst.msk [vmem:[#allocation4 + $0x2f8] sm:$0xff] %vm1307, %v1676
  %1685 = vrot.lane.b32.xlu0 %v1284, 118
  %v1686 = vpop.permute.xlu0 %1685
  %1687 = vrot.lane.b32.xlu0 %v1286, 118
  %v1688 = vpop.permute.xlu0 %1687
  %1689 = vrot.lane.b32.xlu0 %v1288, 118
  %v1690 = vpop.permute.xlu0 %1689
  %1691 = vrot.lane.b32.xlu0 %v1290, 118
  %v1692 = vpop.permute.xlu0 %1691
  %1697 = vst.msk [vmem:[#allocation4 + $0x300] sm:$0xff] %vm1307, %v1686
  %1698 = vst.msk [vmem:[#allocation4 + $0x308] sm:$0xff] %vm1307, %v1688
  %1699 = vst.msk [vmem:[#allocation4 + $0x310] sm:$0xff] %vm1307, %v1690
  %1700 = vst.msk [vmem:[#allocation4 + $0x318] sm:$0xff] %vm1307, %v1692
  %1701 = vrot.lane.b32.xlu0 %v1284, 112
  %v1702 = vpop.permute.xlu0 %1701
  %1703 = vrot.lane.b32.xlu0 %v1286, 112
  %v1704 = vpop.permute.xlu0 %1703
  %1705 = vrot.lane.b32.xlu0 %v1288, 112
  %v1706 = vpop.permute.xlu0 %1705
  %1707 = vrot.lane.b32.xlu0 %v1290, 112
  %v1708 = vpop.permute.xlu0 %1707
  %1713 = vst.msk [vmem:[#allocation4 + $0x320] sm:$0xff] %vm1307, %v1702
  %1714 = vst.msk [vmem:[#allocation4 + $0x328] sm:$0xff] %vm1307, %v1704
  %1715 = vst.msk [vmem:[#allocation4 + $0x330] sm:$0xff] %vm1307, %v1706
  %1716 = vst.msk [vmem:[#allocation4 + $0x338] sm:$0xff] %vm1307, %v1708
  %1717 = vrot.lane.b32.xlu0 %v1284, 106
  %v1718 = vpop.permute.xlu0 %1717
  %1719 = vrot.lane.b32.xlu0 %v1286, 106
  %v1720 = vpop.permute.xlu0 %1719
  %1721 = vrot.lane.b32.xlu0 %v1288, 106
  %v1722 = vpop.permute.xlu0 %1721
  %1723 = vrot.lane.b32.xlu0 %v1290, 106
  %v1724 = vpop.permute.xlu0 %1723
  %1729 = vst.msk [vmem:[#allocation4 + $0x340] sm:$0xff] %vm1307, %v1718
  %1730 = vst.msk [vmem:[#allocation4 + $0x348] sm:$0xff] %vm1307, %v1720
  %1731 = vst.msk [vmem:[#allocation4 + $0x350] sm:$0xff] %vm1307, %v1722
  %1732 = vst.msk [vmem:[#allocation4 + $0x358] sm:$0xff] %vm1307, %v1724
  %1733 = vrot.lane.b32.xlu0 %v1284, 100
  %v1734 = vpop.permute.xlu0 %1733
  %1735 = vrot.lane.b32.xlu0 %v1286, 100
  %v1736 = vpop.permute.xlu0 %1735
  %1737 = vrot.lane.b32.xlu0 %v1288, 100
  %v1738 = vpop.permute.xlu0 %1737
  %1739 = vrot.lane.b32.xlu0 %v1290, 100
  %v1740 = vpop.permute.xlu0 %1739
  %1745 = vst.msk [vmem:[#allocation4 + $0x360] sm:$0xff] %vm1307, %v1734
  %1746 = vst.msk [vmem:[#allocation4 + $0x368] sm:$0xff] %vm1307, %v1736
  %1747 = vst.msk [vmem:[#allocation4 + $0x370] sm:$0xff] %vm1307, %v1738
  %1748 = vst.msk [vmem:[#allocation4 + $0x378] sm:$0xff] %vm1307, %v1740
  %1749 = vrot.lane.b32.xlu0 %v1284, 94
  %v1750 = vpop.permute.xlu0 %1749
  %1751 = vrot.lane.b32.xlu0 %v1286, 94
  %v1752 = vpop.permute.xlu0 %1751
  %1753 = vrot.lane.b32.xlu0 %v1288, 94
  %v1754 = vpop.permute.xlu0 %1753
  %1755 = vrot.lane.b32.xlu0 %v1290, 94
  %v1756 = vpop.permute.xlu0 %1755
  %1761 = vst.msk [vmem:[#allocation4 + $0x380] sm:$0xff] %vm1307, %v1750
  %1762 = vst.msk [vmem:[#allocation4 + $0x388] sm:$0xff] %vm1307, %v1752
  %1763 = vst.msk [vmem:[#allocation4 + $0x390] sm:$0xff] %vm1307, %v1754
  %1764 = vst.msk [vmem:[#allocation4 + $0x398] sm:$0xff] %vm1307, %v1756
  %1765 = vrot.lane.b32.xlu0 %v1284, 88
  %v1766 = vpop.permute.xlu0 %1765
  %1767 = vrot.lane.b32.xlu0 %v1286, 88
  %v1768 = vpop.permute.xlu0 %1767
  %1769 = vrot.lane.b32.xlu0 %v1288, 88
  %v1770 = vpop.permute.xlu0 %1769
  %1771 = vrot.lane.b32.xlu0 %v1290, 88
  %v1772 = vpop.permute.xlu0 %1771
  %1777 = vst.msk [vmem:[#allocation4 + $0x3a0] sm:$0xff] %vm1307, %v1766
  %1778 = vst.msk [vmem:[#allocation4 + $0x3a8] sm:$0xff] %vm1307, %v1768
  %1779 = vst.msk [vmem:[#allocation4 + $0x3b0] sm:$0xff] %vm1307, %v1770
  %1780 = vst.msk [vmem:[#allocation4 + $0x3b8] sm:$0xff] %vm1307, %v1772
  %1781 = vrot.lane.b32.xlu0 %v1284, 82
  %v1782 = vpop.permute.xlu0 %1781
  %1783 = vrot.lane.b32.xlu0 %v1286, 82
  %v1784 = vpop.permute.xlu0 %1783
  %1785 = vrot.lane.b32.xlu0 %v1288, 82
  %v1786 = vpop.permute.xlu0 %1785
  %1787 = vrot.lane.b32.xlu0 %v1290, 82
  %v1788 = vpop.permute.xlu0 %1787
  %1793 = vst.msk [vmem:[#allocation4 + $0x3c0] sm:$0xff] %vm1307, %v1782
  %1794 = vst.msk [vmem:[#allocation4 + $0x3c8] sm:$0xff] %vm1307, %v1784
  %1795 = vst.msk [vmem:[#allocation4 + $0x3d0] sm:$0xff] %vm1307, %v1786
  %1796 = vst.msk [vmem:[#allocation4 + $0x3d8] sm:$0xff] %vm1307, %v1788
  %1797 = vrot.lane.b32.xlu0 %v1284, 76
  %v1798 = vpop.permute.xlu0 %1797
  %1799 = vrot.lane.b32.xlu0 %v1286, 76
  %v1800 = vpop.permute.xlu0 %1799
  %1801 = vrot.lane.b32.xlu0 %v1288, 76
  %v1802 = vpop.permute.xlu0 %1801
  %1803 = vrot.lane.b32.xlu0 %v1290, 76
  %v1804 = vpop.permute.xlu0 %1803
  %1809 = vst.msk [vmem:[#allocation4 + $0x3e0] sm:$0xff] %vm1307, %v1798
  %1810 = vst.msk [vmem:[#allocation4 + $0x3e8] sm:$0xff] %vm1307, %v1800
  %1811 = vst.msk [vmem:[#allocation4 + $0x3f0] sm:$0xff] %vm1307, %v1802
  %1812 = vst.msk [vmem:[#allocation4 + $0x3f8] sm:$0xff] %vm1307, %v1804
  %1813 = vrot.lane.b32.xlu0 %v1284, 70
  %v1814 = vpop.permute.xlu0 %1813
  %1815 = vrot.lane.b32.xlu0 %v1286, 70
  %v1816 = vpop.permute.xlu0 %1815
  %1817 = vrot.lane.b32.xlu0 %v1288, 70
  %v1818 = vpop.permute.xlu0 %1817
  %1819 = vrot.lane.b32.xlu0 %v1290, 70
  %v1820 = vpop.permute.xlu0 %1819
  %1825 = vst.msk [vmem:[#allocation4 + $0x400] sm:$0xff] %vm1307, %v1814
  %1826 = vst.msk [vmem:[#allocation4 + $0x408] sm:$0xff] %vm1307, %v1816
  %1827 = vst.msk [vmem:[#allocation4 + $0x410] sm:$0xff] %vm1307, %v1818
  %1828 = vst.msk [vmem:[#allocation4 + $0x418] sm:$0xff] %vm1307, %v1820
  %1829 = vrot.lane.b32.xlu0 %v1284, 64
  %v1830 = vpop.permute.xlu0 %1829
  %1831 = vrot.lane.b32.xlu0 %v1286, 64
  %v1832 = vpop.permute.xlu0 %1831
  %1833 = vrot.lane.b32.xlu0 %v1288, 64
  %v1834 = vpop.permute.xlu0 %1833
  %1835 = vrot.lane.b32.xlu0 %v1290, 64
  %v1836 = vpop.permute.xlu0 %1835
  %1841 = vst.msk [vmem:[#allocation4 + $0x420] sm:$0xff] %vm1307, %v1830
  %1842 = vst.msk [vmem:[#allocation4 + $0x428] sm:$0xff] %vm1307, %v1832
  %1843 = vst.msk [vmem:[#allocation4 + $0x430] sm:$0xff] %vm1307, %v1834
  %1844 = vst.msk [vmem:[#allocation4 + $0x438] sm:$0xff] %vm1307, %v1836
  %1845 = vrot.lane.b32.xlu0 %v1284, 58
  %v1846 = vpop.permute.xlu0 %1845
  %1847 = vrot.lane.b32.xlu0 %v1286, 58
  %v1848 = vpop.permute.xlu0 %1847
  %1849 = vrot.lane.b32.xlu0 %v1288, 58
  %v1850 = vpop.permute.xlu0 %1849
  %1851 = vrot.lane.b32.xlu0 %v1290, 58
  %v1852 = vpop.permute.xlu0 %1851
  %1857 = vst.msk [vmem:[#allocation4 + $0x440] sm:$0xff] %vm1307, %v1846
  %1858 = vst.msk [vmem:[#allocation4 + $0x448] sm:$0xff] %vm1307, %v1848
  %1859 = vst.msk [vmem:[#allocation4 + $0x450] sm:$0xff] %vm1307, %v1850
  %1860 = vst.msk [vmem:[#allocation4 + $0x458] sm:$0xff] %vm1307, %v1852
  %1861 = vrot.lane.b32.xlu0 %v1284, 52
  %v1862 = vpop.permute.xlu0 %1861
  %1863 = vrot.lane.b32.xlu0 %v1286, 52
  %v1864 = vpop.permute.xlu0 %1863
  %1865 = vrot.lane.b32.xlu0 %v1288, 52
  %v1866 = vpop.permute.xlu0 %1865
  %1867 = vrot.lane.b32.xlu0 %v1290, 52
  %v1868 = vpop.permute.xlu0 %1867
  %1873 = vst.msk [vmem:[#allocation4 + $0x460] sm:$0xff] %vm1307, %v1862
  %1874 = vst.msk [vmem:[#allocation4 + $0x468] sm:$0xff] %vm1307, %v1864
  %1875 = vst.msk [vmem:[#allocation4 + $0x470] sm:$0xff] %vm1307, %v1866
  %1876 = vst.msk [vmem:[#allocation4 + $0x478] sm:$0xff] %vm1307, %v1868
  %1877 = vrot.lane.b32.xlu0 %v1284, 46
  %v1878 = vpop.permute.xlu0 %1877
  %1879 = vrot.lane.b32.xlu0 %v1286, 46
  %v1880 = vpop.permute.xlu0 %1879
  %1881 = vrot.lane.b32.xlu0 %v1288, 46
  %v1882 = vpop.permute.xlu0 %1881
  %1883 = vrot.lane.b32.xlu0 %v1290, 46
  %v1884 = vpop.permute.xlu0 %1883
  %1889 = vst.msk [vmem:[#allocation4 + $0x480] sm:$0xff] %vm1307, %v1878
  %1890 = vst.msk [vmem:[#allocation4 + $0x488] sm:$0xff] %vm1307, %v1880
  %1891 = vst.msk [vmem:[#allocation4 + $0x490] sm:$0xff] %vm1307, %v1882
  %1892 = vst.msk [vmem:[#allocation4 + $0x498] sm:$0xff] %vm1307, %v1884
  %1893 = vrot.lane.b32.xlu0 %v1284, 40
  %v1894 = vpop.permute.xlu0 %1893
  %1895 = vrot.lane.b32.xlu0 %v1286, 40
  %v1896 = vpop.permute.xlu0 %1895
  %1897 = vrot.lane.b32.xlu0 %v1288, 40
  %v1898 = vpop.permute.xlu0 %1897
  %1899 = vrot.lane.b32.xlu0 %v1290, 40
  %v1900 = vpop.permute.xlu0 %1899
  %1905 = vst.msk [vmem:[#allocation4 + $0x4a0] sm:$0xff] %vm1307, %v1894
  %1906 = vst.msk [vmem:[#allocation4 + $0x4a8] sm:$0xff] %vm1307, %v1896
  %1907 = vst.msk [vmem:[#allocation4 + $0x4b0] sm:$0xff] %vm1307, %v1898
  %1908 = vst.msk [vmem:[#allocation4 + $0x4b8] sm:$0xff] %vm1307, %v1900
  %1909 = vrot.lane.b32.xlu0 %v1284, 34
  %v1910 = vpop.permute.xlu0 %1909
  %1911 = vrot.lane.b32.xlu0 %v1286, 34
  %v1912 = vpop.permute.xlu0 %1911
  %1913 = vrot.lane.b32.xlu0 %v1288, 34
  %v1914 = vpop.permute.xlu0 %1913
  %1915 = vrot.lane.b32.xlu0 %v1290, 34
  %v1916 = vpop.permute.xlu0 %1915
  %1921 = vst.msk [vmem:[#allocation4 + $0x4c0] sm:$0xff] %vm1307, %v1910
  %1922 = vst.msk [vmem:[#allocation4 + $0x4c8] sm:$0xff] %vm1307, %v1912
  %1923 = vst.msk [vmem:[#allocation4 + $0x4d0] sm:$0xff] %vm1307, %v1914
  %1924 = vst.msk [vmem:[#allocation4 + $0x4d8] sm:$0xff] %vm1307, %v1916
  %1925 = vrot.lane.b32.xlu0 %v1284, 28
  %v1926 = vpop.permute.xlu0 %1925
  %1927 = vrot.lane.b32.xlu0 %v1286, 28
  %v1928 = vpop.permute.xlu0 %1927
  %1929 = vrot.lane.b32.xlu0 %v1288, 28
  %v1930 = vpop.permute.xlu0 %1929
  %1931 = vrot.lane.b32.xlu0 %v1290, 28
  %v1932 = vpop.permute.xlu0 %1931
  %1937 = vst.msk [vmem:[#allocation4 + $0x4e0] sm:$0xff] %vm1307, %v1926
  %1938 = vst.msk [vmem:[#allocation4 + $0x4e8] sm:$0xff] %vm1307, %v1928
  %1939 = vst.msk [vmem:[#allocation4 + $0x4f0] sm:$0xff] %vm1307, %v1930
  %1940 = vst.msk [vmem:[#allocation4 + $0x4f8] sm:$0xff] %vm1307, %v1932
  %v1941 = vld [vmem:[%s4] sm:$0xff]
  %v1942 = vld [vmem:[%s4 + $0x8] sm:$0xff]
  %v1943 = vld [vmem:[%s4 + $0x10] sm:$0xff]
  %v1944 = vld [vmem:[%s4 + $0x18] sm:$0xff]
  %v1945 = vld [vmem:[%s4 + $0x20] sm:$0xff]
  %v1946 = vld [vmem:[%s4 + $0x28] sm:$0xff]
  %v1947 = vld [vmem:[%s4 + $0x30] sm:$0xff]
  %v1948 = vld [vmem:[%s4 + $0x38] sm:$0xff]
  %v1949 = vld [vmem:[%s4 + $0x40] sm:$0xff]
  %v1950 = vld [vmem:[%s4 + $0x48] sm:$0xff]
  %v1951 = vld [vmem:[%s4 + $0x50] sm:$0xff]
  %v1952 = vld [vmem:[%s4 + $0x58] sm:$0xff]
  %v1953 = vld [vmem:[%s4 + $0x60] sm:$0xff]
  %v1954 = vld [vmem:[%s4 + $0x68] sm:$0xff]
  %v1955 = vld [vmem:[%s4 + $0x70] sm:$0xff]
  %v1956 = vld [vmem:[%s4 + $0x78] sm:$0xff]
  %v1957 = vld [vmem:[%s4 + $0x80] sm:$0xff]
  %v1958 = vld [vmem:[%s4 + $0x88] sm:$0xff]
  %v1959 = vld [vmem:[%s4 + $0x90] sm:$0xff]
  %v1960 = vld [vmem:[%s4 + $0x98] sm:$0xff]
  %v1961 = vld [vmem:[%s4 + $0xa0] sm:$0xff]
  %v1962 = vld [vmem:[%s4 + $0xa8] sm:$0xff]
  %v1963 = vld [vmem:[%s4 + $0xb0] sm:$0xff]
  %v1964 = vld [vmem:[%s4 + $0xb8] sm:$0xff]
  %v1965 = vld [vmem:[%s4 + $0xc0] sm:$0xff]
  %v1966 = vld [vmem:[%s4 + $0xc8] sm:$0xff]
  %v1967 = vld [vmem:[%s4 + $0xd0] sm:$0xff]
  %v1968 = vld [vmem:[%s4 + $0xd8] sm:$0xff]
  %v1969 = vld [vmem:[%s4 + $0xe0] sm:$0xff]
  %v1970 = vld [vmem:[%s4 + $0xe8] sm:$0xff]
  %v1971 = vld [vmem:[%s4 + $0xf0] sm:$0xff]
  %v1972 = vld [vmem:[%s4 + $0xf8] sm:$0xff]
  %v1973 = vld [vmem:[%s4 + $0x100] sm:$0xff]
  %v1974 = vld [vmem:[%s4 + $0x108] sm:$0xff]
  %v1975 = vld [vmem:[%s4 + $0x110] sm:$0xff]
  %v1976 = vld [vmem:[%s4 + $0x118] sm:$0xff]
  %v1977 = vld [vmem:[%s4 + $0x120] sm:$0xff]
  %v1978 = vld [vmem:[%s4 + $0x128] sm:$0xff]
  %v1979 = vld [vmem:[%s4 + $0x130] sm:$0xff]
  %v1980 = vld [vmem:[%s4 + $0x138] sm:$0xff]
  %v1981 = vld [vmem:[%s4 + $0x140] sm:$0xff]
  %v1982 = vld [vmem:[%s4 + $0x148] sm:$0xff]
  %v1983 = vld [vmem:[%s4 + $0x150] sm:$0xff]
  %v1984 = vld [vmem:[%s4 + $0x158] sm:$0xff]
  %v1985 = vld [vmem:[%s4 + $0x160] sm:$0xff]
  %v1986 = vld [vmem:[%s4 + $0x168] sm:$0xff]
  %v1987 = vld [vmem:[%s4 + $0x170] sm:$0xff]
  %v1988 = vld [vmem:[%s4 + $0x178] sm:$0xff]
  %v1989 = vld [vmem:[%s4 + $0x180] sm:$0xff]
  %v1990 = vld [vmem:[%s4 + $0x188] sm:$0xff]
  %v1991 = vld [vmem:[#allocation4] sm:$0xff]
  %v1992 = vld [vmem:[#allocation4 + $0x8] sm:$0xff]
  %v1993 = vld [vmem:[#allocation4 + $0x10] sm:$0xff]
  %v1994 = vld [vmem:[#allocation4 + $0x18] sm:$0xff]
  %v1995 = vld [vmem:[#allocation4 + $0x20] sm:$0xff]
  %v1996 = vld [vmem:[#allocation4 + $0x28] sm:$0xff]
  %v1997 = vld [vmem:[#allocation4 + $0x30] sm:$0xff]
  %v1998 = vld [vmem:[#allocation4 + $0x38] sm:$0xff]
  %v1999 = vld [vmem:[#allocation4 + $0x40] sm:$0xff]
  %v2000 = vld [vmem:[#allocation4 + $0x48] sm:$0xff]
  %v2001 = vld [vmem:[#allocation4 + $0x50] sm:$0xff]
  %v2002 = vld [vmem:[#allocation4 + $0x58] sm:$0xff]
  %v2003 = vld [vmem:[#allocation4 + $0x60] sm:$0xff]
  %v2004 = vld [vmem:[#allocation4 + $0x68] sm:$0xff]
  %v2005 = vld [vmem:[#allocation4 + $0x70] sm:$0xff]
  %v2006 = vld [vmem:[#allocation4 + $0x78] sm:$0xff]
  %v2007 = vld [vmem:[#allocation4 + $0x80] sm:$0xff]
  %v2008 = vld [vmem:[#allocation4 + $0x88] sm:$0xff]
  %v2009 = vld [vmem:[#allocation4 + $0x90] sm:$0xff]
  %v2010 = vld [vmem:[#allocation4 + $0x98] sm:$0xff]
  %v2011 = vld [vmem:[#allocation4 + $0xa0] sm:$0xff]
  %v2012 = vld [vmem:[#allocation4 + $0xa8] sm:$0xff]
  %v2013 = vld [vmem:[#allocation4 + $0xb0] sm:$0xff]
  %v2014 = vld [vmem:[#allocation4 + $0xb8] sm:$0xff]
  %v2015 = vld [vmem:[#allocation4 + $0xc0] sm:$0xff]
  %v2016 = vld [vmem:[#allocation4 + $0xc8] sm:$0xff]
  %v2017 = vld [vmem:[#allocation4 + $0xd0] sm:$0xff]
  %v2018 = vld [vmem:[#allocation4 + $0xd8] sm:$0xff]
  %v2019 = vld [vmem:[#allocation4 + $0xe0] sm:$0xff]
  %v2020 = vld [vmem:[#allocation4 + $0xe8] sm:$0xff]
  %v2021 = vld [vmem:[#allocation4 + $0xf0] sm:$0xff]
  %v2022 = vld [vmem:[#allocation4 + $0xf8] sm:$0xff]
  %v2023 = vld [vmem:[#allocation4 + $0x100] sm:$0xff]
  %v2024 = vld [vmem:[#allocation4 + $0x108] sm:$0xff]
  %v2025 = vld [vmem:[#allocation4 + $0x110] sm:$0xff]
  %v2026 = vld [vmem:[#allocation4 + $0x118] sm:$0xff]
  %v2027 = vld [vmem:[#allocation4 + $0x120] sm:$0xff]
  %v2028 = vld [vmem:[#allocation4 + $0x128] sm:$0xff]
  %v2029 = vld [vmem:[#allocation4 + $0x130] sm:$0xff]
  %v2030 = vld [vmem:[#allocation4 + $0x138] sm:$0xff]
  %v2031 = vld [vmem:[#allocation4 + $0x140] sm:$0xff]
  %v2032 = vld [vmem:[#allocation4 + $0x148] sm:$0xff]
  %v2033 = vld [vmem:[#allocation4 + $0x150] sm:$0xff]
  %v2034 = vld [vmem:[#allocation4 + $0x158] sm:$0xff]
  %v2035 = vld [vmem:[#allocation4 + $0x160] sm:$0xff]
  %v2036 = vld [vmem:[#allocation4 + $0x168] sm:$0xff]
  %v2037 = vld [vmem:[#allocation4 + $0x170] sm:$0xff]
  %v2038 = vld [vmem:[#allocation4 + $0x178] sm:$0xff]
  %v2039 = vld [vmem:[#allocation4 + $0x180] sm:$0xff]
  %v2040 = vld [vmem:[#allocation4 + $0x188] sm:$0xff]
  %v2041 = vld [vmem:[#allocation4 + $0x190] sm:$0xff]
  %v2042 = vld [vmem:[#allocation4 + $0x198] sm:$0xff]
  %v2043 = vld [vmem:[#allocation4 + $0x1a0] sm:$0xff]
  %v2044 = vld [vmem:[#allocation4 + $0x1a8] sm:$0xff]
  %v2045 = vld [vmem:[#allocation4 + $0x1b0] sm:$0xff]
  %v2046 = vld [vmem:[#allocation4 + $0x1b8] sm:$0xff]
  %v2047 = vld [vmem:[#allocation4 + $0x1c0] sm:$0xff]
  %v2048 = vld [vmem:[#allocation4 + $0x1c8] sm:$0xff]
  %v2049 = vld [vmem:[#allocation4 + $0x1d0] sm:$0xff]
  %v2050 = vld [vmem:[#allocation4 + $0x1d8] sm:$0xff]
  %v2051 = vld [vmem:[#allocation4 + $0x1e0] sm:$0xff]
  %v2052 = vld [vmem:[#allocation4 + $0x1e8] sm:$0xff]
  %v2053 = vld [vmem:[#allocation4 + $0x1f0] sm:$0xff]
  %v2054 = vld [vmem:[#allocation4 + $0x1f8] sm:$0xff]
  %v2055 = vld [vmem:[#allocation4 + $0x200] sm:$0xff]
  %v2056 = vld [vmem:[#allocation4 + $0x208] sm:$0xff]
  %v2057 = vld [vmem:[#allocation4 + $0x210] sm:$0xff]
  %v2058 = vld [vmem:[#allocation4 + $0x218] sm:$0xff]
  %v2059 = vld [vmem:[#allocation4 + $0x220] sm:$0xff]
  %v2060 = vld [vmem:[#allocation4 + $0x228] sm:$0xff]
  %v2061 = vld [vmem:[#allocation4 + $0x230] sm:$0xff]
  %v2062 = vld [vmem:[#allocation4 + $0x238] sm:$0xff]
  %v2063 = vld [vmem:[#allocation4 + $0x240] sm:$0xff]
  %v2064 = vld [vmem:[#allocation4 + $0x248] sm:$0xff]
  %v2065 = vld [vmem:[#allocation4 + $0x250] sm:$0xff]
  %v2066 = vld [vmem:[#allocation4 + $0x258] sm:$0xff]
  %v2067 = vld [vmem:[#allocation4 + $0x260] sm:$0xff]
  %v2068 = vld [vmem:[#allocation4 + $0x268] sm:$0xff]
  %v2069 = vld [vmem:[#allocation4 + $0x270] sm:$0xff]
  %v2070 = vld [vmem:[#allocation4 + $0x278] sm:$0xff]
  %v2071 = vld [vmem:[#allocation4 + $0x280] sm:$0xff]
  %v2072 = vld [vmem:[#allocation4 + $0x288] sm:$0xff]
  %v2073 = vld [vmem:[#allocation4 + $0x290] sm:$0xff]
  %v2074 = vld [vmem:[#allocation4 + $0x298] sm:$0xff]
  %v2075 = vld [vmem:[#allocation4 + $0x2a0] sm:$0xff]
  %v2076 = vld [vmem:[#allocation4 + $0x2a8] sm:$0xff]
  %v2077 = vld [vmem:[#allocation4 + $0x2b0] sm:$0xff]
  %v2078 = vld [vmem:[#allocation4 + $0x2b8] sm:$0xff]
  %v2079 = vld [vmem:[#allocation4 + $0x2c0] sm:$0xff]
  %v2080 = vld [vmem:[#allocation4 + $0x2c8] sm:$0xff]
  %v2081 = vld [vmem:[#allocation4 + $0x2d0] sm:$0xff]
  %v2082 = vld [vmem:[#allocation4 + $0x2d8] sm:$0xff]
  %v2083 = vld [vmem:[#allocation4 + $0x2e0] sm:$0xff]
  %v2084 = vld [vmem:[#allocation4 + $0x2e8] sm:$0xff]
  %v2085 = vld [vmem:[#allocation4 + $0x2f0] sm:$0xff]
  %v2086 = vld [vmem:[#allocation4 + $0x2f8] sm:$0xff]
  %v2087 = vld [vmem:[#allocation4 + $0x300] sm:$0xff]
  %v2088 = vld [vmem:[#allocation4 + $0x308] sm:$0xff]
  %v2089 = vld [vmem:[#allocation4 + $0x310] sm:$0xff]
  %v2090 = vld [vmem:[#allocation4 + $0x318] sm:$0xff]
  %v2091 = vld [vmem:[#allocation4 + $0x320] sm:$0xff]
  %v2092 = vld [vmem:[#allocation4 + $0x328] sm:$0xff]
  %v2093 = vld [vmem:[#allocation4 + $0x330] sm:$0xff]
  %v2094 = vld [vmem:[#allocation4 + $0x338] sm:$0xff]
  %v2095 = vld [vmem:[#allocation4 + $0x340] sm:$0xff]
  %v2096 = vld [vmem:[#allocation4 + $0x348] sm:$0xff]
  %v2097 = vld [vmem:[#allocation4 + $0x350] sm:$0xff]
  %v2098 = vld [vmem:[#allocation4 + $0x358] sm:$0xff]
  %v2099 = vld [vmem:[#allocation4 + $0x360] sm:$0xff]
  %v2100 = vld [vmem:[#allocation4 + $0x368] sm:$0xff]
  %v2101 = vld [vmem:[#allocation4 + $0x370] sm:$0xff]
  %v2102 = vld [vmem:[#allocation4 + $0x378] sm:$0xff]
  %v2103 = vld [vmem:[#allocation4 + $0x380] sm:$0xff]
  %v2104 = vld [vmem:[#allocation4 + $0x388] sm:$0xff]
  %v2105 = vld [vmem:[#allocation4 + $0x390] sm:$0xff]
  %v2106 = vld [vmem:[#allocation4 + $0x398] sm:$0xff]
  %v2107 = vld [vmem:[#allocation4 + $0x3a0] sm:$0xff]
  %v2108 = vld [vmem:[#allocation4 + $0x3a8] sm:$0xff]
  %v2109 = vld [vmem:[#allocation4 + $0x3b0] sm:$0xff]
  %v2110 = vld [vmem:[#allocation4 + $0x3b8] sm:$0xff]
  %v2111 = vld [vmem:[#allocation4 + $0x3c0] sm:$0xff]
  %v2112 = vld [vmem:[#allocation4 + $0x3c8] sm:$0xff]
  %v2113 = vld [vmem:[#allocation4 + $0x3d0] sm:$0xff]
  %v2114 = vld [vmem:[#allocation4 + $0x3d8] sm:$0xff]
  %v2115 = vld [vmem:[#allocation4 + $0x3e0] sm:$0xff]
  %v2116 = vld [vmem:[#allocation4 + $0x3e8] sm:$0xff]
  %v2117 = vld [vmem:[#allocation4 + $0x3f0] sm:$0xff]
  %v2118 = vld [vmem:[#allocation4 + $0x3f8] sm:$0xff]
  %v2119 = vld [vmem:[#allocation4 + $0x400] sm:$0xff]
  %v2120 = vld [vmem:[#allocation4 + $0x408] sm:$0xff]
  %v2121 = vld [vmem:[#allocation4 + $0x410] sm:$0xff]
  %v2122 = vld [vmem:[#allocation4 + $0x418] sm:$0xff]
  %v2123 = vld [vmem:[#allocation4 + $0x420] sm:$0xff]
  %v2124 = vld [vmem:[#allocation4 + $0x428] sm:$0xff]
  %v2125 = vld [vmem:[#allocation4 + $0x430] sm:$0xff]
  %v2126 = vld [vmem:[#allocation4 + $0x438] sm:$0xff]
  %v2127 = vld [vmem:[#allocation4 + $0x440] sm:$0xff]
  %v2128 = vld [vmem:[#allocation4 + $0x448] sm:$0xff]
  %v2129 = vld [vmem:[#allocation4 + $0x450] sm:$0xff]
  %v2130 = vld [vmem:[#allocation4 + $0x458] sm:$0xff]
  %v2131 = vld [vmem:[#allocation4 + $0x460] sm:$0xff]
  %v2132 = vld [vmem:[#allocation4 + $0x468] sm:$0xff]
  %v2133 = vld [vmem:[#allocation4 + $0x470] sm:$0xff]
  %v2134 = vld [vmem:[#allocation4 + $0x478] sm:$0xff]
  %v2135 = vld [vmem:[#allocation4 + $0x480] sm:$0xff]
  %v2136 = vld [vmem:[#allocation4 + $0x488] sm:$0xff]
  %v2137 = vld [vmem:[#allocation4 + $0x490] sm:$0xff]
  %v2138 = vld [vmem:[#allocation4 + $0x498] sm:$0xff]
  %v2139 = vld [vmem:[#allocation4 + $0x4a0] sm:$0xff]
  %v2140 = vld [vmem:[#allocation4 + $0x4a8] sm:$0xff]
  %v2141 = vld [vmem:[#allocation4 + $0x4b0] sm:$0xff]
  %v2142 = vld [vmem:[#allocation4 + $0x4b8] sm:$0xff]
  %v2143 = vld [vmem:[#allocation4 + $0x4c0] sm:$0xff]
  %v2144 = vld [vmem:[#allocation4 + $0x4c8] sm:$0xff]
  %v2145 = vld [vmem:[#allocation4 + $0x4d0] sm:$0xff]
  %v2146 = vld [vmem:[#allocation4 + $0x4d8] sm:$0xff]
  %v2147 = vld [vmem:[#allocation4 + $0x4e0] sm:$0xff]
  %v2148 = vld [vmem:[#allocation4 + $0x4e8] sm:$0xff]
  %v2149 = vld [vmem:[#allocation4 + $0x4f0] sm:$0xff]
  %v2150 = vld [vmem:[#allocation4 + $0x4f8] sm:$0xff]
  %v2201 = vunpack.c.l.b16 %v1941
  %v2202 = vunpack.c.h.b16 %v1941
  %v2203 = vunpack.c.l.b16 %v1942
  %v2204 = vunpack.c.h.b16 %v1942
  %v2205 = vunpack.c.l.b16 %v1943
  %v2206 = vunpack.c.h.b16 %v1943
  %v2207 = vunpack.c.l.b16 %v1944
  %v2208 = vunpack.c.h.b16 %v1944
  %v2209 = vunpack.c.l.b16 %v1945
  %v2210 = vunpack.c.h.b16 %v1945
  %v2211 = vunpack.c.l.b16 %v1946
  %v2212 = vunpack.c.h.b16 %v1946
  %v2213 = vunpack.c.l.b16 %v1947
  %v2214 = vunpack.c.h.b16 %v1947
  %v2215 = vunpack.c.l.b16 %v1948
  %v2216 = vunpack.c.h.b16 %v1948
  %v2217 = vunpack.c.l.b16 %v1949
  %v2218 = vunpack.c.h.b16 %v1949
  %v2219 = vunpack.c.l.b16 %v1950
  %v2220 = vunpack.c.h.b16 %v1950
  %v2221 = vunpack.c.l.b16 %v1951
  %v2222 = vunpack.c.h.b16 %v1951
  %v2223 = vunpack.c.l.b16 %v1952
  %v2224 = vunpack.c.h.b16 %v1952
  %v2225 = vunpack.c.l.b16 %v1953
  %v2226 = vunpack.c.h.b16 %v1953
  %v2227 = vunpack.c.l.b16 %v1954
  %v2228 = vunpack.c.h.b16 %v1954
  %v2229 = vunpack.c.l.b16 %v1955
  %v2230 = vunpack.c.h.b16 %v1955
  %v2231 = vunpack.c.l.b16 %v1956
  %v2232 = vunpack.c.h.b16 %v1956
  %v2233 = vunpack.c.l.b16 %v1957
  %v2234 = vunpack.c.h.b16 %v1957
  %v2235 = vunpack.c.l.b16 %v1958
  %v2236 = vunpack.c.h.b16 %v1958
  %v2237 = vunpack.c.l.b16 %v1959
  %v2238 = vunpack.c.h.b16 %v1959
  %v2239 = vunpack.c.l.b16 %v1960
  %v2240 = vunpack.c.h.b16 %v1960
  %v2241 = vunpack.c.l.b16 %v1961
  %v2242 = vunpack.c.h.b16 %v1961
  %v2243 = vunpack.c.l.b16 %v1962
  %v2244 = vunpack.c.h.b16 %v1962
  %v2245 = vunpack.c.l.b16 %v1963
  %v2246 = vunpack.c.h.b16 %v1963
  %v2247 = vunpack.c.l.b16 %v1964
  %v2248 = vunpack.c.h.b16 %v1964
  %v2249 = vunpack.c.l.b16 %v1965
  %v2250 = vunpack.c.h.b16 %v1965
  %v2251 = vunpack.c.l.b16 %v1966
  %v2252 = vunpack.c.h.b16 %v1966
  %v2253 = vunpack.c.l.b16 %v1967
  %v2254 = vunpack.c.h.b16 %v1967
  %v2255 = vunpack.c.l.b16 %v1968
  %v2256 = vunpack.c.h.b16 %v1968
  %v2257 = vunpack.c.l.b16 %v1969
  %v2258 = vunpack.c.h.b16 %v1969
  %v2259 = vunpack.c.l.b16 %v1970
  %v2260 = vunpack.c.h.b16 %v1970
  %v2261 = vunpack.c.l.b16 %v1971
  %v2262 = vunpack.c.h.b16 %v1971
  %v2263 = vunpack.c.l.b16 %v1972
  %v2264 = vunpack.c.h.b16 %v1972
  %v2265 = vunpack.c.l.b16 %v1973
  %v2266 = vunpack.c.h.b16 %v1973
  %v2267 = vunpack.c.l.b16 %v1974
  %v2268 = vunpack.c.h.b16 %v1974
  %v2269 = vunpack.c.l.b16 %v1975
  %v2270 = vunpack.c.h.b16 %v1975
  %v2271 = vunpack.c.l.b16 %v1976
  %v2272 = vunpack.c.h.b16 %v1976
  %v2273 = vunpack.c.l.b16 %v1977
  %v2274 = vunpack.c.h.b16 %v1977
  %v2275 = vunpack.c.l.b16 %v1978
  %v2276 = vunpack.c.h.b16 %v1978
  %v2277 = vunpack.c.l.b16 %v1979
  %v2278 = vunpack.c.h.b16 %v1979
  %v2279 = vunpack.c.l.b16 %v1980
  %v2280 = vunpack.c.h.b16 %v1980
  %v2281 = vunpack.c.l.b16 %v1981
  %v2282 = vunpack.c.h.b16 %v1981
  %v2283 = vunpack.c.l.b16 %v1982
  %v2284 = vunpack.c.h.b16 %v1982
  %v2285 = vunpack.c.l.b16 %v1983
  %v2286 = vunpack.c.h.b16 %v1983
  %v2287 = vunpack.c.l.b16 %v1984
  %v2288 = vunpack.c.h.b16 %v1984
  %v2289 = vunpack.c.l.b16 %v1985
  %v2290 = vunpack.c.h.b16 %v1985
  %v2291 = vunpack.c.l.b16 %v1986
  %v2292 = vunpack.c.h.b16 %v1986
  %v2293 = vunpack.c.l.b16 %v1987
  %v2294 = vunpack.c.h.b16 %v1987
  %v2295 = vunpack.c.l.b16 %v1988
  %v2296 = vunpack.c.h.b16 %v1988
  %v2297 = vunpack.c.l.b16 %v1989
  %v2298 = vunpack.c.h.b16 %v1989
  %v2299 = vunpack.c.l.b16 %v1990
  %v2300 = vunpack.c.h.b16 %v1990
  %v2301 = vpack.c.b16 %v2221, %v2201
  %v2302 = vpack.c.b16 %v2222, %v2202
  %v2303 = vpack.c.b16 %v2223, %v2203
  %v2304 = vpack.c.b16 %v2224, %v2204
  %v2305 = vpack.c.b16 %v2225, %v2205
  %v2306 = vpack.c.b16 %v2226, %v2206
  %v2307 = vpack.c.b16 %v2227, %v2207
  %v2308 = vpack.c.b16 %v2228, %v2208
  %v2309 = vpack.c.b16 %v2229, %v2209
  %v2310 = vpack.c.b16 %v2230, %v2210
  %v2311 = vpack.c.b16 %v2231, %v2211
  %v2312 = vpack.c.b16 %v2232, %v2212
  %v2313 = vpack.c.b16 %v2233, %v2213
  %v2314 = vpack.c.b16 %v2234, %v2214
  %v2315 = vpack.c.b16 %v2235, %v2215
  %v2316 = vpack.c.b16 %v2236, %v2216
  %v2317 = vpack.c.b16 %v2237, %v2217
  %v2318 = vpack.c.b16 %v2238, %v2218
  %v2319 = vpack.c.b16 %v2239, %v2219
  %v2320 = vpack.c.b16 %v2240, %v2220
  %v2321 = vpack.c.b16 %v2261, %v2241
  %v2322 = vpack.c.b16 %v2262, %v2242
  %v2323 = vpack.c.b16 %v2263, %v2243
  %v2324 = vpack.c.b16 %v2264, %v2244
  %v2325 = vpack.c.b16 %v2265, %v2245
  %v2326 = vpack.c.b16 %v2266, %v2246
  %v2327 = vpack.c.b16 %v2267, %v2247
  %v2328 = vpack.c.b16 %v2268, %v2248
  %v2329 = vpack.c.b16 %v2269, %v2249
  %v2330 = vpack.c.b16 %v2270, %v2250
  %v2331 = vpack.c.b16 %v2271, %v2251
  %v2332 = vpack.c.b16 %v2272, %v2252
  %v2333 = vpack.c.b16 %v2273, %v2253
  %v2334 = vpack.c.b16 %v2274, %v2254
  %v2335 = vpack.c.b16 %v2275, %v2255
  %v2336 = vpack.c.b16 %v2276, %v2256
  %v2337 = vpack.c.b16 %v2277, %v2257
  %v2338 = vpack.c.b16 %v2278, %v2258
  %v2339 = vpack.c.b16 %v2279, %v2259
  %v2340 = vpack.c.b16 %v2280, %v2260
  %v2341 = vpack.c.b16 %v2281, %v2281
  %v2342 = vpack.c.b16 %v2282, %v2282
  %v2343 = vpack.c.b16 %v2283, %v2283
  %v2344 = vpack.c.b16 %v2284, %v2284
  %v2345 = vpack.c.b16 %v2285, %v2285
  %v2346 = vpack.c.b16 %v2286, %v2286
  %v2347 = vpack.c.b16 %v2287, %v2287
  %v2348 = vpack.c.b16 %v2288, %v2288
  %v2349 = vpack.c.b16 %v2289, %v2289
  %v2350 = vpack.c.b16 %v2290, %v2290
  %v2351 = vpack.c.b16 %v2291, %v2291
  %v2352 = vpack.c.b16 %v2292, %v2292
  %v2353 = vpack.c.b16 %v2293, %v2293
  %v2354 = vpack.c.b16 %v2294, %v2294
  %v2355 = vpack.c.b16 %v2295, %v2295
  %v2356 = vpack.c.b16 %v2296, %v2296
  %v2357 = vpack.c.b16 %v2297, %v2297
  %v2358 = vpack.c.b16 %v2298, %v2298
  %v2359 = vpack.c.b16 %v2299, %v2299
  %v2360 = vpack.c.b16 %v2300, %v2300
  %2421 = vmatprep.subr.bf16.mxu0 0
  %2422 = vmatpush1.bf16.msra.mxu0 %v1991
  %2423 = vmatprep.subr.bf16.mxu0 0
  %2424 = vmatpush1.bf16.msra.mxu0 %v1992
  %2425 = vmatprep.subr.bf16.mxu0 0
  %2426 = vmatpush1.bf16.msra.mxu0 %v1993
  %2427 = vmatprep.subr.bf16.mxu0 0
  %2428 = vmatpush1.bf16.msra.mxu0 %v1994
  %2429 = vmatprep.subr.bf16.mxu0 0
  %2430 = vmatpush1.bf16.msra.mxu0 %v1995
  %2431 = vmatprep.subr.bf16.mxu0 0
  %2432 = vmatpush1.bf16.msra.mxu0 %v1996
  %2433 = vmatprep.subr.bf16.mxu0 0
  %2434 = vmatpush1.bf16.msra.mxu0 %v1997
  %2435 = vmatprep.subr.bf16.mxu0 0
  %2436 = vmatpush1.bf16.msra.mxu0 %v1998
  %2437 = vmatprep.subr.bf16.mxu0 0
  %2438 = vmatpush1.bf16.msra.mxu0 %v1999
  %2439 = vmatprep.subr.bf16.mxu0 0
  %2440 = vmatpush1.bf16.msra.mxu0 %v2000
  %2441 = vmatprep.subr.bf16.mxu0 0
  %2442 = vmatpush1.bf16.msra.mxu0 %v2001
  %2443 = vmatprep.subr.bf16.mxu0 0
  %2444 = vmatpush1.bf16.msra.mxu0 %v2002
  %2445 = vmatprep.subr.bf16.mxu0 0
  %2446 = vmatpush1.bf16.msra.mxu0 %v2003
  %2447 = vmatprep.subr.bf16.mxu0 0
  %2448 = vmatpush1.bf16.msra.mxu0 %v2004
  %2449 = vmatprep.subr.bf16.mxu0 0
  %2450 = vmatpush1.bf16.msra.mxu0 %v2005
  %2451 = vmatprep.subr.bf16.mxu0 0
  %2452 = vmatpush1.bf16.msra.mxu0 %v2006
  %2453 = vmatprep.mubr.bf16.mxu0 %v2302
  %2454 = vmatmul.mubr.bf16.gmra.mrb[0].mxu0 %v2301
  %v2455 = vpop.f32.mrb[0].mxu0
  %v2456 = vadd.f32 0.0, %v2455
  %v2457 = vpop.f32.mrb[0].mxu0
  %v2458 = vpop.f32.mrb[0].mxu0
  %v2459 = vadd.f32 0.0, %v2458
  %v2460 = vpop.f32.mrb[0].mxu0
  %2461 = vmatprep.mubr.bf16.mxu0 %v2322
  %2462 = vmatmul.mubr.bf16.gmra.mrb[0].mxu0 %v2321
  %v2463 = vpop.f32.mrb[0].mxu0
  %v2464 = vadd.f32 0.0, %v2463
  %v2465 = vpop.f32.mrb[0].mxu0
  %v2466 = vpop.f32.mrb[0].mxu0
  %v2467 = vadd.f32 0.0, %v2466
  %v2468 = vpop.f32.mrb[0].mxu0
  %2469 = vmatprep.mubr.bf16.mxu0 %v2342
  %2470 = vmatmul.mubr.bf16.gmra.mrb[0].mxu0 %v2341
  %v2471 = vpop.f32.mrb[0].mxu0
  %v2472 = vadd.f32 0.0, %v2471
  %v2473 = vpop.f32.mrb[0].mxu0
  %v2474 = vpop.f32.mrb[0].mxu0
  %v2475 = vpop.f32.mrb[0].mxu0
  %2476 = vdwg.mxu0
  %2477 = vmatprep.subr.bf16.mxu0 0
  %2478 = vmatpush1.bf16.msra.mxu0 %v2007
  %2479 = vmatprep.subr.bf16.mxu0 0
  %2480 = vmatpush1.bf16.msra.mxu0 %v2008
  %2481 = vmatprep.subr.bf16.mxu0 0
  %2482 = vmatpush1.bf16.msra.mxu0 %v2009
  %2483 = vmatprep.subr.bf16.mxu0 0
  %2484 = vmatpush1.bf16.msra.mxu0 %v2010
  %2485 = vmatprep.subr.bf16.mxu0 0
  %2486 = vmatpush1.bf16.msra.mxu0 %v2011
  %2487 = vmatprep.subr.bf16.mxu0 0
  %2488 = vmatpush1.bf16.msra.mxu0 %v2012
  %2489 = vmatprep.subr.bf16.mxu0 0
  %2490 = vmatpush1.bf16.msra.mxu0 %v2013
  %2491 = vmatprep.subr.bf16.mxu0 0
  %2492 = vmatpush1.bf16.msra.mxu0 %v2014
  %2493 = vmatprep.subr.bf16.mxu0 0
  %2494 = vmatpush1.bf16.msra.mxu0 %v2015
  %2495 = vmatprep.subr.bf16.mxu0 0
  %2496 = vmatpush1.bf16.msra.mxu0 %v2016
  %2497 = vmatprep.subr.bf16.mxu0 0
  %2498 = vmatpush1.bf16.msra.mxu0 %v2017
  %2499 = vmatprep.subr.bf16.mxu0 0
  %2500 = vmatpush1.bf16.msra.mxu0 %v2018
  %2501 = vmatprep.subr.bf16.mxu0 0
  %2502 = vmatpush1.bf16.msra.mxu0 %v2019
  %2503 = vmatprep.subr.bf16.mxu0 0
  %2504 = vmatpush1.bf16.msra.mxu0 %v2020
  %2505 = vmatprep.subr.bf16.mxu0 0
  %2506 = vmatpush1.bf16.msra.mxu0 %v2021
  %2507 = vmatprep.subr.bf16.mxu0 0
  %2508 = vmatpush1.bf16.msra.mxu0 %v2022
  %2509 = vmatprep.mubr.bf16.mxu0 %v2304
  %2510 = vmatmul.mubr.bf16.gmra.mrb[0].mxu0 %v2303
  %v2511 = vpop.f32.mrb[0].mxu0
  %v2512 = vadd.f32 %v2456, %v2511
  %v2513 = vpop.f32.mrb[0].mxu0
  %v2514 = vpop.f32.mrb[0].mxu0
  %v2515 = vadd.f32 %v2459, %v2514
  %v2516 = vpop.f32.mrb[0].mxu0
  %2517 = vmatprep.mubr.bf16.mxu0 %v2324
  %2518 = vmatmul.mubr.bf16.gmra.mrb[0].mxu0 %v2323
  %v2519 = vpop.f32.mrb[0].mxu0
  %v2520 = vadd.f32 %v2464, %v2519
  %v2521 = vpop.f32.mrb[0].mxu0
  %v2522 = vpop.f32.mrb[0].mxu0
  %v2523 = vadd.f32 %v2467, %v2522
  %v2524 = vpop.f32.mrb[0].mxu0
  %2525 = vmatprep.mubr.bf16.mxu0 %v2344
  %2526 = vmatmul.mubr.bf16.gmra.mrb[0].mxu0 %v2343
  %v2527 = vpop.f32.mrb[0].mxu0
  %v2528 = vadd.f32 %v2472, %v2527
  %v2529 = vpop.f32.mrb[0].mxu0
  %v2530 = vpop.f32.mrb[0].mxu0
  %v2531 = vpop.f32.mrb[0].mxu0
  %2532 = vdwg.mxu0
  %2533 = vmatprep.subr.bf16.mxu0 0
  %2534 = vmatpush1.bf16.msra.mxu0 %v2023
  %2535 = vmatprep.subr.bf16.mxu0 0
  %2536 = vmatpush1.bf16.msra.mxu0 %v2024
  %2537 = vmatprep.subr.bf16.mxu0 0
  %2538 = vmatpush1.bf16.msra.mxu0 %v2025
  %2539 = vmatprep.subr.bf16.mxu0 0
  %2540 = vmatpush1.bf16.msra.mxu0 %v2026
  %2541 = vmatprep.subr.bf16.mxu0 0
  %2542 = vmatpush1.bf16.msra.mxu0 %v2027
  %2543 = vmatprep.subr.bf16.mxu0 0
  %2544 = vmatpush1.bf16.msra.mxu0 %v2028
  %2545 = vmatprep.subr.bf16.mxu0 0
  %2546 = vmatpush1.bf16.msra.mxu0 %v2029
  %2547 = vmatprep.subr.bf16.mxu0 0
  %2548 = vmatpush1.bf16.msra.mxu0 %v2030
  %2549 = vmatprep.subr.bf16.mxu0 0
  %2550 = vmatpush1.bf16.msra.mxu0 %v2031
  %2551 = vmatprep.subr.bf16.mxu0 0
  %2552 = vmatpush1.bf16.msra.mxu0 %v2032
  %2553 = vmatprep.subr.bf16.mxu0 0
  %2554 = vmatpush1.bf16.msra.mxu0 %v2033
  %2555 = vmatprep.subr.bf16.mxu0 0
  %2556 = vmatpush1.bf16.msra.mxu0 %v2034
  %2557 = vmatprep.subr.bf16.mxu0 0
  %2558 = vmatpush1.bf16.msra.mxu0 %v2035
  %2559 = vmatprep.subr.bf16.mxu0 0
  %2560 = vmatpush1.bf16.msra.mxu0 %v2036
  %2561 = vmatprep.subr.bf16.mxu0 0
  %2562 = vmatpush1.bf16.msra.mxu0 %v2037
  %2563 = vmatprep.subr.bf16.mxu0 0
  %2564 = vmatpush1.bf16.msra.mxu0 %v2038
  %2565 = vmatprep.mubr.bf16.mxu0 %v2306
  %2566 = vmatmul.mubr.bf16.gmra.mrb[0].mxu0 %v2305
  %v2567 = vpop.f32.mrb[0].mxu0
  %v2568 = vadd.f32 %v2512, %v2567
  %v2569 = vpop.f32.mrb[0].mxu0
  %v2570 = vpop.f32.mrb[0].mxu0
  %v2571 = vadd.f32 %v2515, %v2570
  %v2572 = vpop.f32.mrb[0].mxu0
  %2573 = vmatprep.mubr.bf16.mxu0 %v2326
  %2574 = vmatmul.mubr.bf16.gmra.mrb[0].mxu0 %v2325
  %v2575 = vpop.f32.mrb[0].mxu0
  %v2576 = vadd.f32 %v2520, %v2575
  %v2577 = vpop.f32.mrb[0].mxu0
  %v2578 = vpop.f32.mrb[0].mxu0
  %v2579 = vadd.f32 %v2523, %v2578
  %v2580 = vpop.f32.mrb[0].mxu0
  %2581 = vmatprep.mubr.bf16.mxu0 %v2346
  %2582 = vmatmul.mubr.bf16.gmra.mrb[0].mxu0 %v2345
  %v2583 = vpop.f32.mrb[0].mxu0
  %v2584 = vadd.f32 %v2528, %v2583
  %v2585 = vpop.f32.mrb[0].mxu0
  %v2586 = vpop.f32.mrb[0].mxu0
  %v2587 = vpop.f32.mrb[0].mxu0
  %2588 = vdwg.mxu0
  %2589 = vmatprep.subr.bf16.mxu0 0
  %2590 = vmatpush1.bf16.msra.mxu0 %v2039
  %2591 = vmatprep.subr.bf16.mxu0 0
  %2592 = vmatpush1.bf16.msra.mxu0 %v2040
  %2593 = vmatprep.subr.bf16.mxu0 0
  %2594 = vmatpush1.bf16.msra.mxu0 %v2041
  %2595 = vmatprep.subr.bf16.mxu0 0
  %2596 = vmatpush1.bf16.msra.mxu0 %v2042
  %2597 = vmatprep.subr.bf16.mxu0 0
  %2598 = vmatpush1.bf16.msra.mxu0 %v2043
  %2599 = vmatprep.subr.bf16.mxu0 0
  %2600 = vmatpush1.bf16.msra.mxu0 %v2044
  %2601 = vmatprep.subr.bf16.mxu0 0
  %2602 = vmatpush1.bf16.msra.mxu0 %v2045
  %2603 = vmatprep.subr.bf16.mxu0 0
  %2604 = vmatpush1.bf16.msra.mxu0 %v2046
  %2605 = vmatprep.subr.bf16.mxu0 0
  %2606 = vmatpush1.bf16.msra.mxu0 %v2047
  %2607 = vmatprep.subr.bf16.mxu0 0
  %2608 = vmatpush1.bf16.msra.mxu0 %v2048
  %2609 = vmatprep.subr.bf16.mxu0 0
  %2610 = vmatpush1.bf16.msra.mxu0 %v2049
  %2611 = vmatprep.subr.bf16.mxu0 0
  %2612 = vmatpush1.bf16.msra.mxu0 %v2050
  %2613 = vmatprep.subr.bf16.mxu0 0
  %2614 = vmatpush1.bf16.msra.mxu0 %v2051
  %2615 = vmatprep.subr.bf16.mxu0 0
  %2616 = vmatpush1.bf16.msra.mxu0 %v2052
  %2617 = vmatprep.subr.bf16.mxu0 0
  %2618 = vmatpush1.bf16.msra.mxu0 %v2053
  %2619 = vmatprep.subr.bf16.mxu0 0
  %2620 = vmatpush1.bf16.msra.mxu0 %v2054
  %2621 = vmatprep.mubr.bf16.mxu0 %v2308
  %2622 = vmatmul.mubr.bf16.gmra.mrb[0].mxu0 %v2307
  %v2623 = vpop.f32.mrb[0].mxu0
  %v2624 = vadd.f32 %v2568, %v2623
  %v2625 = vpop.f32.mrb[0].mxu0
  %v2626 = vpop.f32.mrb[0].mxu0
  %v2627 = vadd.f32 %v2571, %v2626
  %v2628 = vpop.f32.mrb[0].mxu0
  %2629 = vmatprep.mubr.bf16.mxu0 %v2328
  %2630 = vmatmul.mubr.bf16.gmra.mrb[0].mxu0 %v2327
  %v2631 = vpop.f32.mrb[0].mxu0
  %v2632 = vadd.f32 %v2576, %v2631
  %v2633 = vpop.f32.mrb[0].mxu0
  %v2634 = vpop.f32.mrb[0].mxu0
  %v2635 = vadd.f32 %v2579, %v2634
  %v2636 = vpop.f32.mrb[0].mxu0
  %2637 = vmatprep.mubr.bf16.mxu0 %v2348
  %2638 = vmatmul.mubr.bf16.gmra.mrb[0].mxu0 %v2347
  %v2639 = vpop.f32.mrb[0].mxu0
  %v2640 = vadd.f32 %v2584, %v2639
  %v2641 = vpop.f32.mrb[0].mxu0
  %v2642 = vpop.f32.mrb[0].mxu0
  %v2643 = vpop.f32.mrb[0].mxu0
  %2644 = vdwg.mxu0
  %2645 = vmatprep.subr.bf16.mxu0 0
  %2646 = vmatpush1.bf16.msra.mxu0 %v2055
  %2647 = vmatprep.subr.bf16.mxu0 0
  %2648 = vmatpush1.bf16.msra.mxu0 %v2056
  %2649 = vmatprep.subr.bf16.mxu0 0
  %2650 = vmatpush1.bf16.msra.mxu0 %v2057
  %2651 = vmatprep.subr.bf16.mxu0 0
  %2652 = vmatpush1.bf16.msra.mxu0 %v2058
  %2653 = vmatprep.subr.bf16.mxu0 0
  %2654 = vmatpush1.bf16.msra.mxu0 %v2059
  %2655 = vmatprep.subr.bf16.mxu0 0
  %2656 = vmatpush1.bf16.msra.mxu0 %v2060
  %2657 = vmatprep.subr.bf16.mxu0 0
  %2658 = vmatpush1.bf16.msra.mxu0 %v2061
  %2659 = vmatprep.subr.bf16.mxu0 0
  %2660 = vmatpush1.bf16.msra.mxu0 %v2062
  %2661 = vmatprep.subr.bf16.mxu0 0
  %2662 = vmatpush1.bf16.msra.mxu0 %v2063
  %2663 = vmatprep.subr.bf16.mxu0 0
  %2664 = vmatpush1.bf16.msra.mxu0 %v2064
  %2665 = vmatprep.subr.bf16.mxu0 0
  %2666 = vmatpush1.bf16.msra.mxu0 %v2065
  %2667 = vmatprep.subr.bf16.mxu0 0
  %2668 = vmatpush1.bf16.msra.mxu0 %v2066
  %2669 = vmatprep.subr.bf16.mxu0 0
  %2670 = vmatpush1.bf16.msra.mxu0 %v2067
  %2671 = vmatprep.subr.bf16.mxu0 0
  %2672 = vmatpush1.bf16.msra.mxu0 %v2068
  %2673 = vmatprep.subr.bf16.mxu0 0
  %2674 = vmatpush1.bf16.msra.mxu0 %v2069
  %2675 = vmatprep.subr.bf16.mxu0 0
  %2676 = vmatpush1.bf16.msra.mxu0 %v2070
  %2677 = vmatprep.mubr.bf16.mxu0 %v2310
  %2678 = vmatmul.mubr.bf16.gmra.mrb[0].mxu0 %v2309
  %v2679 = vpop.f32.mrb[0].mxu0
  %v2680 = vadd.f32 %v2624, %v2679
  %v2681 = vpop.f32.mrb[0].mxu0
  %v2682 = vpop.f32.mrb[0].mxu0
  %v2683 = vadd.f32 %v2627, %v2682
  %v2684 = vpop.f32.mrb[0].mxu0
  %2685 = vmatprep.mubr.bf16.mxu0 %v2330
  %2686 = vmatmul.mubr.bf16.gmra.mrb[0].mxu0 %v2329
  %v2687 = vpop.f32.mrb[0].mxu0
  %v2688 = vadd.f32 %v2632, %v2687
  %v2689 = vpop.f32.mrb[0].mxu0
  %v2690 = vpop.f32.mrb[0].mxu0
  %v2691 = vadd.f32 %v2635, %v2690
  %v2692 = vpop.f32.mrb[0].mxu0
  %2693 = vmatprep.mubr.bf16.mxu0 %v2350
  %2694 = vmatmul.mubr.bf16.gmra.mrb[0].mxu0 %v2349
  %v2695 = vpop.f32.mrb[0].mxu0
  %v2696 = vadd.f32 %v2640, %v2695
  %v2697 = vpop.f32.mrb[0].mxu0
  %v2698 = vpop.f32.mrb[0].mxu0
  %v2699 = vpop.f32.mrb[0].mxu0
  %2700 = vdwg.mxu0
  %2701 = vmatprep.subr.bf16.mxu0 0
  %2702 = vmatpush1.bf16.msra.mxu0 %v2071
  %2703 = vmatprep.subr.bf16.mxu0 0
  %2704 = vmatpush1.bf16.msra.mxu0 %v2072
  %2705 = vmatprep.subr.bf16.mxu0 0
  %2706 = vmatpush1.bf16.msra.mxu0 %v2073
  %2707 = vmatprep.subr.bf16.mxu0 0
  %2708 = vmatpush1.bf16.msra.mxu0 %v2074
  %2709 = vmatprep.subr.bf16.mxu0 0
  %2710 = vmatpush1.bf16.msra.mxu0 %v2075
  %2711 = vmatprep.subr.bf16.mxu0 0
  %2712 = vmatpush1.bf16.msra.mxu0 %v2076
  %2713 = vmatprep.subr.bf16.mxu0 0
  %2714 = vmatpush1.bf16.msra.mxu0 %v2077
  %2715 = vmatprep.subr.bf16.mxu0 0
  %2716 = vmatpush1.bf16.msra.mxu0 %v2078
  %2717 = vmatprep.subr.bf16.mxu0 0
  %2718 = vmatpush1.bf16.msra.mxu0 %v2079
  %2719 = vmatprep.subr.bf16.mxu0 0
  %2720 = vmatpush1.bf16.msra.mxu0 %v2080
  %2721 = vmatprep.subr.bf16.mxu0 0
  %2722 = vmatpush1.bf16.msra.mxu0 %v2081
  %2723 = vmatprep.subr.bf16.mxu0 0
  %2724 = vmatpush1.bf16.msra.mxu0 %v2082
  %2725 = vmatprep.subr.bf16.mxu0 0
  %2726 = vmatpush1.bf16.msra.mxu0 %v2083
  %2727 = vmatprep.subr.bf16.mxu0 0
  %2728 = vmatpush1.bf16.msra.mxu0 %v2084
  %2729 = vmatprep.subr.bf16.mxu0 0
  %2730 = vmatpush1.bf16.msra.mxu0 %v2085
  %2731 = vmatprep.subr.bf16.mxu0 0
  %2732 = vmatpush1.bf16.msra.mxu0 %v2086
  %2733 = vmatprep.mubr.bf16.mxu0 %v2312
  %2734 = vmatmul.mubr.bf16.gmra.mrb[0].mxu0 %v2311
  %v2735 = vpop.f32.mrb[0].mxu0
  %v2736 = vadd.f32 %v2680, %v2735
  %v2737 = vpop.f32.mrb[0].mxu0
  %v2738 = vpop.f32.mrb[0].mxu0
  %v2739 = vadd.f32 %v2683, %v2738
  %v2740 = vpop.f32.mrb[0].mxu0
  %2741 = vmatprep.mubr.bf16.mxu0 %v2332
  %2742 = vmatmul.mubr.bf16.gmra.mrb[0].mxu0 %v2331
  %v2743 = vpop.f32.mrb[0].mxu0
  %v2744 = vadd.f32 %v2688, %v2743
  %v2745 = vpop.f32.mrb[0].mxu0
  %v2746 = vpop.f32.mrb[0].mxu0
  %v2747 = vadd.f32 %v2691, %v2746
  %v2748 = vpop.f32.mrb[0].mxu0
  %2749 = vmatprep.mubr.bf16.mxu0 %v2352
  %2750 = vmatmul.mubr.bf16.gmra.mrb[0].mxu0 %v2351
  %v2751 = vpop.f32.mrb[0].mxu0
  %v2752 = vadd.f32 %v2696, %v2751
  %v2753 = vpop.f32.mrb[0].mxu0
  %v2754 = vpop.f32.mrb[0].mxu0
  %v2755 = vpop.f32.mrb[0].mxu0
  %2756 = vdwg.mxu0
  %2757 = vmatprep.subr.bf16.mxu0 0
  %2758 = vmatpush1.bf16.msra.mxu0 %v2087
  %2759 = vmatprep.subr.bf16.mxu0 0
  %2760 = vmatpush1.bf16.msra.mxu0 %v2088
  %2761 = vmatprep.subr.bf16.mxu0 0
  %2762 = vmatpush1.bf16.msra.mxu0 %v2089
  %2763 = vmatprep.subr.bf16.mxu0 0
  %2764 = vmatpush1.bf16.msra.mxu0 %v2090
  %2765 = vmatprep.subr.bf16.mxu0 0
  %2766 = vmatpush1.bf16.msra.mxu0 %v2091
  %2767 = vmatprep.subr.bf16.mxu0 0
  %2768 = vmatpush1.bf16.msra.mxu0 %v2092
  %2769 = vmatprep.subr.bf16.mxu0 0
  %2770 = vmatpush1.bf16.msra.mxu0 %v2093
  %2771 = vmatprep.subr.bf16.mxu0 0
  %2772 = vmatpush1.bf16.msra.mxu0 %v2094
  %2773 = vmatprep.subr.bf16.mxu0 0
  %2774 = vmatpush1.bf16.msra.mxu0 %v2095
  %2775 = vmatprep.subr.bf16.mxu0 0
  %2776 = vmatpush1.bf16.msra.mxu0 %v2096
  %2777 = vmatprep.subr.bf16.mxu0 0
  %2778 = vmatpush1.bf16.msra.mxu0 %v2097
  %2779 = vmatprep.subr.bf16.mxu0 0
  %2780 = vmatpush1.bf16.msra.mxu0 %v2098
  %2781 = vmatprep.subr.bf16.mxu0 0
  %2782 = vmatpush1.bf16.msra.mxu0 %v2099
  %2783 = vmatprep.subr.bf16.mxu0 0
  %2784 = vmatpush1.bf16.msra.mxu0 %v2100
  %2785 = vmatprep.subr.bf16.mxu0 0
  %2786 = vmatpush1.bf16.msra.mxu0 %v2101
  %2787 = vmatprep.subr.bf16.mxu0 0
  %2788 = vmatpush1.bf16.msra.mxu0 %v2102
  %2789 = vmatprep.mubr.bf16.mxu0 %v2314
  %2790 = vmatmul.mubr.bf16.gmra.mrb[0].mxu0 %v2313
  %v2791 = vpop.f32.mrb[0].mxu0
  %v2792 = vadd.f32 %v2736, %v2791
  %v2793 = vpop.f32.mrb[0].mxu0
  %v2794 = vpop.f32.mrb[0].mxu0
  %v2795 = vadd.f32 %v2739, %v2794
  %v2796 = vpop.f32.mrb[0].mxu0
  %2797 = vmatprep.mubr.bf16.mxu0 %v2334
  %2798 = vmatmul.mubr.bf16.gmra.mrb[0].mxu0 %v2333
  %v2799 = vpop.f32.mrb[0].mxu0
  %v2800 = vadd.f32 %v2744, %v2799
  %v2801 = vpop.f32.mrb[0].mxu0
  %v2802 = vpop.f32.mrb[0].mxu0
  %v2803 = vadd.f32 %v2747, %v2802
  %v2804 = vpop.f32.mrb[0].mxu0
  %2805 = vmatprep.mubr.bf16.mxu0 %v2354
  %2806 = vmatmul.mubr.bf16.gmra.mrb[0].mxu0 %v2353
  %v2807 = vpop.f32.mrb[0].mxu0
  %v2808 = vadd.f32 %v2752, %v2807
  %v2809 = vpop.f32.mrb[0].mxu0
  %v2810 = vpop.f32.mrb[0].mxu0
  %v2811 = vpop.f32.mrb[0].mxu0
  %2812 = vdwg.mxu0
  %2813 = vmatprep.subr.bf16.mxu0 0
  %2814 = vmatpush1.bf16.msra.mxu0 %v2103
  %2815 = vmatprep.subr.bf16.mxu0 0
  %2816 = vmatpush1.bf16.msra.mxu0 %v2104
  %2817 = vmatprep.subr.bf16.mxu0 0
  %2818 = vmatpush1.bf16.msra.mxu0 %v2105
  %2819 = vmatprep.subr.bf16.mxu0 0
  %2820 = vmatpush1.bf16.msra.mxu0 %v2106
  %2821 = vmatprep.subr.bf16.mxu0 0
  %2822 = vmatpush1.bf16.msra.mxu0 %v2107
  %2823 = vmatprep.subr.bf16.mxu0 0
  %2824 = vmatpush1.bf16.msra.mxu0 %v2108
  %2825 = vmatprep.subr.bf16.mxu0 0
  %2826 = vmatpush1.bf16.msra.mxu0 %v2109
  %2827 = vmatprep.subr.bf16.mxu0 0
  %2828 = vmatpush1.bf16.msra.mxu0 %v2110
  %2829 = vmatprep.subr.bf16.mxu0 0
  %2830 = vmatpush1.bf16.msra.mxu0 %v2111
  %2831 = vmatprep.subr.bf16.mxu0 0
  %2832 = vmatpush1.bf16.msra.mxu0 %v2112
  %2833 = vmatprep.subr.bf16.mxu0 0
  %2834 = vmatpush1.bf16.msra.mxu0 %v2113
  %2835 = vmatprep.subr.bf16.mxu0 0
  %2836 = vmatpush1.bf16.msra.mxu0 %v2114
  %2837 = vmatprep.subr.bf16.mxu0 0
  %2838 = vmatpush1.bf16.msra.mxu0 %v2115
  %2839 = vmatprep.subr.bf16.mxu0 0
  %2840 = vmatpush1.bf16.msra.mxu0 %v2116
  %2841 = vmatprep.subr.bf16.mxu0 0
  %2842 = vmatpush1.bf16.msra.mxu0 %v2117
  %2843 = vmatprep.subr.bf16.mxu0 0
  %2844 = vmatpush1.bf16.msra.mxu0 %v2118
  %2845 = vmatprep.mubr.bf16.mxu0 %v2316
  %2846 = vmatmul.mubr.bf16.gmra.mrb[0].mxu0 %v2315
  %v2847 = vpop.f32.mrb[0].mxu0
  %v2848 = vadd.f32 %v2792, %v2847
  %v2849 = vpop.f32.mrb[0].mxu0
  %v2850 = vpop.f32.mrb[0].mxu0
  %v2851 = vadd.f32 %v2795, %v2850
  %v2852 = vpop.f32.mrb[0].mxu0
  %2853 = vmatprep.mubr.bf16.mxu0 %v2336
  %2854 = vmatmul.mubr.bf16.gmra.mrb[0].mxu0 %v2335
  %v2855 = vpop.f32.mrb[0].mxu0
  %v2856 = vadd.f32 %v2800, %v2855
  %v2857 = vpop.f32.mrb[0].mxu0
  %v2858 = vpop.f32.mrb[0].mxu0
  %v2859 = vadd.f32 %v2803, %v2858
  %v2860 = vpop.f32.mrb[0].mxu0
  %2861 = vmatprep.mubr.bf16.mxu0 %v2356
  %2862 = vmatmul.mubr.bf16.gmra.mrb[0].mxu0 %v2355
  %v2863 = vpop.f32.mrb[0].mxu0
  %v2864 = vadd.f32 %v2808, %v2863
  %v2865 = vpop.f32.mrb[0].mxu0
  %v2866 = vpop.f32.mrb[0].mxu0
  %v2867 = vpop.f32.mrb[0].mxu0
  %2868 = vdwg.mxu0
  %2869 = vmatprep.subr.bf16.mxu0 0
  %2870 = vmatpush1.bf16.msra.mxu0 %v2119
  %2871 = vmatprep.subr.bf16.mxu0 0
  %2872 = vmatpush1.bf16.msra.mxu0 %v2120
  %2873 = vmatprep.subr.bf16.mxu0 0
  %2874 = vmatpush1.bf16.msra.mxu0 %v2121
  %2875 = vmatprep.subr.bf16.mxu0 0
  %2876 = vmatpush1.bf16.msra.mxu0 %v2122
  %2877 = vmatprep.subr.bf16.mxu0 0
  %2878 = vmatpush1.bf16.msra.mxu0 %v2123
  %2879 = vmatprep.subr.bf16.mxu0 0
  %2880 = vmatpush1.bf16.msra.mxu0 %v2124
  %2881 = vmatprep.subr.bf16.mxu0 0
  %2882 = vmatpush1.bf16.msra.mxu0 %v2125
  %2883 = vmatprep.subr.bf16.mxu0 0
  %2884 = vmatpush1.bf16.msra.mxu0 %v2126
  %2885 = vmatprep.subr.bf16.mxu0 0
  %2886 = vmatpush1.bf16.msra.mxu0 %v2127
  %2887 = vmatprep.subr.bf16.mxu0 0
  %2888 = vmatpush1.bf16.msra.mxu0 %v2128
  %2889 = vmatprep.subr.bf16.mxu0 0
  %2890 = vmatpush1.bf16.msra.mxu0 %v2129
  %2891 = vmatprep.subr.bf16.mxu0 0
  %2892 = vmatpush1.bf16.msra.mxu0 %v2130
  %2893 = vmatprep.subr.bf16.mxu0 0
  %2894 = vmatpush1.bf16.msra.mxu0 %v2131
  %2895 = vmatprep.subr.bf16.mxu0 0
  %2896 = vmatpush1.bf16.msra.mxu0 %v2132
  %2897 = vmatprep.subr.bf16.mxu0 0
  %2898 = vmatpush1.bf16.msra.mxu0 %v2133
  %2899 = vmatprep.subr.bf16.mxu0 0
  %2900 = vmatpush1.bf16.msra.mxu0 %v2134
  %2901 = vmatprep.mubr.bf16.mxu0 %v2318
  %2902 = vmatmul.mubr.bf16.gmra.mrb[0].mxu0 %v2317
  %v2903 = vpop.f32.mrb[0].mxu0
  %v2904 = vadd.f32 %v2848, %v2903
  %v2905 = vpop.f32.mrb[0].mxu0
  %v2906 = vpop.f32.mrb[0].mxu0
  %v2907 = vadd.f32 %v2851, %v2906
  %v2908 = vpop.f32.mrb[0].mxu0
  %2909 = vmatprep.mubr.bf16.mxu0 %v2338
  %2910 = vmatmul.mubr.bf16.gmra.mrb[0].mxu0 %v2337
  %v2911 = vpop.f32.mrb[0].mxu0
  %v2912 = vadd.f32 %v2856, %v2911
  %v2913 = vpop.f32.mrb[0].mxu0
  %v2914 = vpop.f32.mrb[0].mxu0
  %v2915 = vadd.f32 %v2859, %v2914
  %v2916 = vpop.f32.mrb[0].mxu0
  %2917 = vmatprep.mubr.bf16.mxu0 %v2358
  %2918 = vmatmul.mubr.bf16.gmra.mrb[0].mxu0 %v2357
  %v2919 = vpop.f32.mrb[0].mxu0
  %v2920 = vadd.f32 %v2864, %v2919
  %v2921 = vpop.f32.mrb[0].mxu0
  %v2922 = vpop.f32.mrb[0].mxu0
  %v2923 = vpop.f32.mrb[0].mxu0
  %2924 = vdwg.mxu0
  %2925 = vmatprep.subr.bf16.mxu0 0
  %2926 = vmatpush1.bf16.msra.mxu0 %v2135
  %2927 = vmatprep.subr.bf16.mxu0 0
  %2928 = vmatpush1.bf16.msra.mxu0 %v2136
  %2929 = vmatprep.subr.bf16.mxu0 0
  %2930 = vmatpush1.bf16.msra.mxu0 %v2137
  %2931 = vmatprep.subr.bf16.mxu0 0
  %2932 = vmatpush1.bf16.msra.mxu0 %v2138
  %2933 = vmatprep.subr.bf16.mxu0 0
  %2934 = vmatpush1.bf16.msra.mxu0 %v2139
  %2935 = vmatprep.subr.bf16.mxu0 0
  %2936 = vmatpush1.bf16.msra.mxu0 %v2140
  %2937 = vmatprep.subr.bf16.mxu0 0
  %2938 = vmatpush1.bf16.msra.mxu0 %v2141
  %2939 = vmatprep.subr.bf16.mxu0 0
  %2940 = vmatpush1.bf16.msra.mxu0 %v2142
  %2941 = vmatprep.subr.bf16.mxu0 0
  %2942 = vmatpush1.bf16.msra.mxu0 %v2143
  %2943 = vmatprep.subr.bf16.mxu0 0
  %2944 = vmatpush1.bf16.msra.mxu0 %v2144
  %2945 = vmatprep.subr.bf16.mxu0 0
  %2946 = vmatpush1.bf16.msra.mxu0 %v2145
  %2947 = vmatprep.subr.bf16.mxu0 0
  %2948 = vmatpush1.bf16.msra.mxu0 %v2146
  %2949 = vmatprep.subr.bf16.mxu0 0
  %2950 = vmatpush1.bf16.msra.mxu0 %v2147
  %2951 = vmatprep.subr.bf16.mxu0 0
  %2952 = vmatpush1.bf16.msra.mxu0 %v2148
  %2953 = vmatprep.subr.bf16.mxu0 0
  %2954 = vmatpush1.bf16.msra.mxu0 %v2149
  %2955 = vmatprep.subr.bf16.mxu0 0
  %2956 = vmatpush1.bf16.msra.mxu0 %v2150
  %2957 = vmatprep.mubr.bf16.mxu0 %v2320
  %2958 = vmatmul.mubr.bf16.gmra.mrb[0].mxu0 %v2319
  %v2959 = vpop.f32.mrb[0].mxu0
  %v2960 = vadd.f32 %v2904, %v2959
  %v2961 = vpop.f32.mrb[0].mxu0
  %v2962 = vpop.f32.mrb[0].mxu0
  %v2963 = vadd.f32 %v2907, %v2962
  %v2964 = vpop.f32.mrb[0].mxu0
  %2965 = vmatprep.mubr.bf16.mxu0 %v2340
  %2966 = vmatmul.mubr.bf16.gmra.mrb[0].mxu0 %v2339
  %v2967 = vpop.f32.mrb[0].mxu0
  %v2968 = vadd.f32 %v2912, %v2967
  %v2969 = vpop.f32.mrb[0].mxu0
  %v2970 = vpop.f32.mrb[0].mxu0
  %v2971 = vadd.f32 %v2915, %v2970
  %v2972 = vpop.f32.mrb[0].mxu0
  %2973 = vmatprep.mubr.bf16.mxu0 %v2360
  %2974 = vmatmul.mubr.bf16.gmra.mrb[0].mxu0 %v2359
  %v2975 = vpop.f32.mrb[0].mxu0
  %v2976 = vadd.f32 %v2920, %v2975
  %v2977 = vpop.f32.mrb[0].mxu0
  %v2978 = vpop.f32.mrb[0].mxu0
  %v2979 = vpop.f32.mrb[0].mxu0
  %2980 = vdwg.mxu0
  %v2981 = vld [vmem:[%s5] sm:$0xff]
  %v2982 = vld [vmem:[%s5 + $0x8] sm:$0xff]
  %v2983 = vld [vmem:[%s5 + $0x10] sm:$0xff]
  %v2984 = vld [vmem:[%s5 + $0x18] sm:$0xff]
  %v2985 = vld [vmem:[%s5 + $0x20] sm:$0xff]
  %2987 = vset.pattern.permute.xlu0 0
  %2988 = vperm.xlu0 %2987, %v2981
  %v2989 = vpop.permute.xlu0 %2988
  %2992 = vset.pattern.permute.xlu0 0
  %2993 = vperm.xlu0 %2992, %v2982
  %v2994 = vpop.permute.xlu0 %2993
  %2997 = vset.pattern.permute.xlu0 0
  %2998 = vperm.xlu0 %2997, %v2983
  %v2999 = vpop.permute.xlu0 %2998
  %3002 = vset.pattern.permute.xlu0 0
  %3003 = vperm.xlu0 %3002, %v2984
  %v3004 = vpop.permute.xlu0 %3003
  %3007 = vset.pattern.permute.xlu0 0
  %3008 = vperm.xlu0 %3007, %v2985
  %v3009 = vpop.permute.xlu0 %3008
  %v3011 = vmul.f32 %v2960, %v2989
  %v3012 = vmul.f32 %v2963, %v2994
  %v3013 = vmul.f32 %v2968, %v2999
  %v3014 = vmul.f32 %v2971, %v3004
  %v3015 = vmul.f32 %v2976, %v3009
  %v3016 = vld [vmem:[%s6] sm:$0xff]
  %v3017 = vld [vmem:[%s6 + $0x8] sm:$0xff]
  %v3018 = vld [vmem:[%s6 + $0x10] sm:$0xff]
  %v3019 = vld [vmem:[%s6 + $0x18] sm:$0xff]
  %v3020 = vld [vmem:[%s6 + $0x20] sm:$0xff]
  %3022 = vset.pattern.permute.xlu0 0
  %3023 = vperm.xlu0 %3022, %v3016
  %v3024 = vpop.permute.xlu0 %3023
  %3027 = vset.pattern.permute.xlu0 0
  %3028 = vperm.xlu0 %3027, %v3017
  %v3029 = vpop.permute.xlu0 %3028
  %3032 = vset.pattern.permute.xlu0 0
  %3033 = vperm.xlu0 %3032, %v3018
  %v3034 = vpop.permute.xlu0 %3033
  %3037 = vset.pattern.permute.xlu0 0
  %3038 = vperm.xlu0 %3037, %v3019
  %v3039 = vpop.permute.xlu0 %3038
  %3042 = vset.pattern.permute.xlu0 0
  %3043 = vperm.xlu0 %3042, %v3020
  %v3044 = vpop.permute.xlu0 %3043
  %v3046 = vadd.f32 %v3011, %v3024
  %v3047 = vadd.f32 %v3012, %v3029
  %v3048 = vadd.f32 %v3013, %v3034
  %v3049 = vadd.f32 %v3014, %v3039
  %v3050 = vadd.f32 %v3015, %v3044
  %vm3051 = vcmp.gt.f32.partialorder %v3046, 0.0
  %vm3052 = vcmp.gt.f32.partialorder %v3047, 0.0
  %vm3053 = vcmp.gt.f32.partialorder %v3048, 0.0
  %vm3054 = vcmp.gt.f32.partialorder %v3049, 0.0
  %vm3055 = vcmp.gt.f32.partialorder %v3050, 0.0
  %v3056 = vmin.f32 %v3046, 0.0
  %v3057 = vmin.f32 %v3047, 0.0
  %v3058 = vmin.f32 %v3048, 0.0
  %v3059 = vmin.f32 %v3049, 0.0
  %v3060 = vmin.f32 %v3050, 0.0
  %v3061 = vmul.f32 %v3056, 1.442695
  %v3062 = vpow.pop %v3061
  %v3063 = vmul.f32 %v3057, 1.442695
  %v3064 = vpow.pop %v3063
  %v3065 = vmul.f32 %v3058, 1.442695
  %v3066 = vpow.pop %v3065
  %v3067 = vmul.f32 %v3059, 1.442695
  %v3068 = vpow.pop %v3067
  %v3069 = vmul.f32 %v3060, 1.442695
  %v3070 = vpow.pop %v3069
  %v3071 = vsub.f32 %v3062, 1.0
  %v3072 = vsub.f32 %v3064, 1.0
  %v3073 = vsub.f32 %v3066, 1.0
  %v3074 = vsub.f32 %v3068, 1.0
  %v3075 = vsub.f32 %v3070, 1.0
  %v3076 = vsel %vm3051, %v3046, %v3071
  %v3077 = vsel %vm3052, %v3047, %v3072
  %v3078 = vsel %vm3053, %v3048, %v3073
  %v3079 = vsel %vm3054, %v3049, %v3074
  %v3080 = vsel %vm3055, %v3050, %v3075
  %v3081 = vld [vmem:[%s7] sm:$0xff]
  %v3082 = vld [vmem:[%s7 + $0x8] sm:$0xff]
  %v3083 = vld [vmem:[%s7 + $0x10] sm:$0xff]
  %v3084 = vld [vmem:[%s7 + $0x18] sm:$0xff]
  %v3085 = vld [vmem:[%s7 + $0x20] sm:$0xff]
  %v3086 = vld [vmem:[%s8] sm:$0xff]
  %v3087 = vld [vmem:[%s8 + $0x8] sm:$0xff]
  %v3088 = vld [vmem:[%s8 + $0x10] sm:$0xff]
  %v3089 = vld [vmem:[%s8 + $0x18] sm:$0xff]
  %v3090 = vld [vmem:[%s8 + $0x20] sm:$0xff]
  %3092 = vset.pattern.permute.xlu0 0
  %3093 = vperm.xlu0 %3092, %v3086
  %v3094 = vpop.permute.xlu0 %3093
  %3097 = vset.pattern.permute.xlu0 0
  %3098 = vperm.xlu0 %3097, %v3087
  %v3099 = vpop.permute.xlu0 %3098
  %3102 = vset.pattern.permute.xlu0 0
  %3103 = vperm.xlu0 %3102, %v3088
  %v3104 = vpop.permute.xlu0 %3103
  %3107 = vset.pattern.permute.xlu0 0
  %3108 = vperm.xlu0 %3107, %v3089
  %v3109 = vpop.permute.xlu0 %3108
  %3112 = vset.pattern.permute.xlu0 0
  %3113 = vperm.xlu0 %3112, %v3090
  %v3114 = vpop.permute.xlu0 %3113
  %vm3116 = vcmask 326656
  %v3118 = vsel %vm3116, %v3081, 0
  %v3121 = vsel %vm3116, %v3082, 0
  %v3124 = vsel %vm3116, %v3083, 0
  %v3127 = vsel %vm3116, %v3084, 0
  %v3130 = vsel %vm3116, %v3085, 0
  %3132 = vmatprep.subr.mxu0 0.0
  %3133 = vmatpush1.msra.mxu0 %v3076
  %3134 = vmatprep.subr.mxu0 0.0
  %3135 = vmatpush1.msra.mxu0 %v3077
  %3136 = vmatprep.subr.mxu0 0.0
  %3137 = vmatpush1.msra.mxu0 %v3078
  %3138 = vmatprep.subr.mxu0 0.0
  %3139 = vmatpush1.msra.mxu0 %v3079
  %3140 = vmatprep.subr.mxu0 0.0
  %3141 = vmatpush1.msra.mxu0 %v3080
  %3142 = vmatprep.subr.mxu0 0.0
  %3143 = vmatpush1.msra.mxu0 0.0
  %3144 = vmatprep.subr.mxu0 0.0
  %3145 = vmatpush1.msra.mxu0 0.0
  %3146 = vmatprep.subr.mxu0 0.0
  %3147 = vmatpush1.msra.mxu0 0.0
  %3148 = vmatprep.subr.mxu0 0.0
  %3149 = vmatpush1.msra.mxu0 0.0
  %3150 = vmatprep.subr.mxu0 0.0
  %3151 = vmatpush1.msra.mxu0 0.0
  %3152 = vmatprep.subr.mxu0 0.0
  %3153 = vmatpush1.msra.mxu0 0.0
  %3154 = vmatprep.subr.mxu0 0.0
  %3155 = vmatpush1.msra.mxu0 0.0
  %3156 = vmatprep.subr.mxu0 0.0
  %3157 = vmatpush1.msra.mxu0 0.0
  %3158 = vmatprep.subr.mxu0 0.0
  %3159 = vmatpush1.msra.mxu0 0.0
  %3160 = vmatprep.subr.mxu0 0.0
  %3161 = vmatpush1.msra.mxu0 0.0
  %3162 = vmatprep.subr.mxu0 0.0
  %3163 = vmatpush1.msra.mxu0 0.0
  %3164 = vmatprep.subr.mxu0 0.0
  %3165 = vmatpush1.msra.mxu0 0.0
  %3166 = vmatprep.subr.mxu0 0.0
  %3167 = vmatpush1.msra.mxu0 0.0
  %3168 = vmatprep.subr.mxu0 0.0
  %3169 = vmatpush1.msra.mxu0 0.0
  %3170 = vmatprep.subr.mxu0 0.0
  %3171 = vmatpush1.msra.mxu0 0.0
  %3172 = vmatprep.subr.mxu0 0.0
  %3173 = vmatpush1.msra.mxu0 0.0
  %3174 = vmatprep.subr.mxu0 0.0
  %3175 = vmatpush1.msra.mxu0 0.0
  %3176 = vmatprep.subr.mxu0 0.0
  %3177 = vmatpush1.msra.mxu0 0.0
  %3178 = vmatprep.subr.mxu0 0.0
  %3179 = vmatpush1.msra.mxu0 0.0
  %3180 = vmatprep.subr.mxu0 0.0
  %3181 = vmatpush1.msra.mxu0 0.0
  %3182 = vmatprep.subr.mxu0 0.0
  %3183 = vmatpush1.msra.mxu0 0.0
  %3184 = vmatprep.subr.mxu0 0.0
  %3185 = vmatpush1.msra.mxu0 0.0
  %3186 = vmatprep.subr.mxu0 0.0
  %3187 = vmatpush1.msra.mxu0 0.0
  %3188 = vmatprep.subr.mxu0 0.0
  %3189 = vmatpush1.msra.mxu0 0.0
  %3190 = vmatprep.subr.mxu0 0.0
  %3191 = vmatpush1.msra.mxu0 0.0
  %3192 = vmatprep.subr.mxu0 0.0
  %3193 = vmatpush1.msra.mxu0 0.0
  %3194 = vmatprep.subr.mxu0 0.0
  %3195 = vmatpush1.msra.mxu0 0.0
  %3196 = vmatprep.mubr.f32.mxu0 0.0
  %3197 = vmatmul.mubr.f32.gmra.mrb[0].mxu0 %v3118
  %v3198 = vpop.f32.mrb[0].mxu0
  %v3199 = vadd.f32 %v3094, %v3198
  %v3200 = vpop.f32.mrb[0].mxu0
  %3201 = vmatprep.mubr.f32.mxu0 0.0
  %3202 = vmatmul.mubr.f32.gmra.mrb[0].mxu0 %v3121
  %v3203 = vpop.f32.mrb[0].mxu0
  %v3204 = vadd.f32 %v3099, %v3203
  %v3205 = vpop.f32.mrb[0].mxu0
  %3206 = vmatprep.mubr.f32.mxu0 0.0
  %3207 = vmatmul.mubr.f32.gmra.mrb[0].mxu0 %v3124
  %v3208 = vpop.f32.mrb[0].mxu0
  %v3209 = vadd.f32 %v3104, %v3208
  %v3210 = vpop.f32.mrb[0].mxu0
  %3211 = vmatprep.mubr.f32.mxu0 0.0
  %3212 = vmatmul.mubr.f32.gmra.mrb[0].mxu0 %v3127
  %v3213 = vpop.f32.mrb[0].mxu0
  %v3214 = vadd.f32 %v3109, %v3213
  %v3215 = vpop.f32.mrb[0].mxu0
  %3216 = vmatprep.mubr.f32.mxu0 0.0
  %3217 = vmatmul.mubr.f32.gmra.mrb[0].mxu0 %v3130
  %v3218 = vpop.f32.mrb[0].mxu0
  %v3219 = vadd.f32 %v3114, %v3218
  %v3220 = vpop.f32.mrb[0].mxu0
  %3221 = vdwg.mxu0
  %3222 = vxpose.xlu0.b32.start [1/16] %v3199, 128
  %3223 = vxpose.xlu0.b32.cont [2/16] %v3204, 128
  %3224 = vxpose.xlu0.b32.cont [3/16] %v3209, 128
  %3225 = vxpose.xlu0.b32.cont [4/16] %v3214, 128
  %3226 = vxpose.xlu0.b32.cont [5/16] %v3219, 128
  %3227 = vxpose.xlu0.b32.cont [6/16] 0.0, 128
  %3228 = vxpose.xlu0.b32.cont [7/16] 0.0, 128
  %3229 = vxpose.xlu0.b32.cont [8/16] 0.0, 128
  %3230 = vxpose.xlu0.b32.cont [9/16] 0.0, 128
  %3231 = vxpose.xlu0.b32.cont [10/16] 0.0, 128
  %3232 = vxpose.xlu0.b32.cont [11/16] 0.0, 128
  %3233 = vxpose.xlu0.b32.cont [12/16] 0.0, 128
  %3234 = vxpose.xlu0.b32.cont [13/16] 0.0, 128
  %3235 = vxpose.xlu0.b32.cont [14/16] 0.0, 128
  %3236 = vxpose.xlu0.b32.cont [15/16] 0.0, 128
  %3237 = vxpose.xlu0.b32.end [16/16] 0.0, 128
  %v3238 = vpop.trf.xlu0
  %v3239 = vpop.trf.xlu0
  %v3240 = vpop.trf.xlu0
  %v3241 = vpop.trf.xlu0
  %v3242 = vpop.trf.xlu0
  %v3243 = vpop.trf.xlu0
  %v3244 = vpop.trf.xlu0
  %v3245 = vpop.trf.xlu0
  %v3246 = vpop.trf.xlu0
  %v3247 = vpop.trf.xlu0
  %v3248 = vpop.trf.xlu0
  %v3249 = vpop.trf.xlu0
  %v3250 = vpop.trf.xlu0
  %v3251 = vpop.trf.xlu0
  %v3252 = vpop.trf.xlu0
  %v3253 = vpop.trf.xlu0
  %3254 = vst.msk [vmem:[%s9] sm:$0xff] %vm3116, %v3238
  %vm3255 = vcmask 322560
  %3256 = vst.msk [vmem:[%s9 + $0x8] sm:$0xf] %vm3255, %v3239
  // Predicated region
  $region38: #{patch_embedding_forward.1} parent=0 // pred_check
    _
  $region39: #{patch_embedding_forward.1} parent=0 // pred_check_branch
    %3258 = sbr.rel (0) target = $region41
  $region40: #{patch_embedding_forward.1} parent=0 // pred_region
    _
  $region41: #{patch_embedding_forward.1} parent=0 // pred_fallthru
    _
  // Predicated region
  $region42: #{patch_embedding_forward.1} parent=0 // pred_check
    _
  $region43: #{patch_embedding_forward.1} parent=0 // pred_check_branch
    %3260 = sbr.rel (0) target = $region45
  $region44: #{patch_embedding_forward.1} parent=0 // pred_region
    _
  $region45: #{patch_embedding_forward.1} parent=0 // pred_fallthru
    _

</llo_original>
